<compile_context>
chip_gen: v6e
topology: v6e:2x2x1
jax: 0.10.0
libtpu: 0.0.40
codegen_flags: <defaults>
</compile_context>

<pallas_src>
from functools import partial

import jax
import jax.numpy as jnp
from jax import lax
from jax.experimental import pallas as pl
from jax.experimental.pallas import tpu as pltpu


def critic_kernel(T, x_ref, a_ref,
                  wih0_ref, bgi0_ref, whh0_ref, bhh0n_ref,
                  wih1_ref, bgi1_ref, whh1_ref, bhh1n_ref,
                  w1hT_ref, w1aT_ref, b1_ref, w2T_ref, b2_ref,
                  out_ref):
    TB = x_ref.shape[0]
    B = TB // T
    H = whh0_ref.shape[-1]

    def input_proj(x_flat, wih_ref, bgi_ref):
        # Three independent batched matmuls, one per gate (PyTorch order r,z,n).
        # b_ih (all gates) and b_hh (r, z) are already folded into bgi.
        gi_r = jnp.dot(x_flat, wih_ref[0], preferred_element_type=jnp.float32) + bgi_ref[0]
        gi_z = jnp.dot(x_flat, wih_ref[1], preferred_element_type=jnp.float32) + bgi_ref[1]
        gi_n = jnp.dot(x_flat, wih_ref[2], preferred_element_type=jnp.float32) + bgi_ref[2]
        return gi_r, gi_z, gi_n

    def run_layer(gi_r, gi_z, gi_n, whh_ref, bhhn_ref):
        # Hoist the recurrent weight loads out of the unrolled time loop.
        whh_r = whh_ref[0]
        whh_z = whh_ref[1]
        whh_n = whh_ref[2]
        bhh_n = bhhn_ref[...]
        h = jnp.zeros((B, H), jnp.float32)
        outs = []
        for t in range(T):                    # static T -> fully unrolled
            lo = t * B
            # Three independent per-gate recurrent dots; they only depend on h,
            # so the serial chain per step is ~one matmul latency + gate math.
            gh_r = jnp.dot(h, whh_r, preferred_element_type=jnp.float32)
            gh_z = jnp.dot(h, whh_z, preferred_element_type=jnp.float32)
            gh_n = jnp.dot(h, whh_n, preferred_element_type=jnp.float32)
            r = jax.nn.sigmoid(gi_r[lo:lo + B, :] + gh_r)
            z = jax.nn.sigmoid(gi_z[lo:lo + B, :] + gh_z)
            n = jnp.tanh(gi_n[lo:lo + B, :] + r * (gh_n + bhh_n))
            h = (1.0 - z) * n + z * h
            outs.append(h)
        return outs, h

    # ---- GRU layer 0: batched input projection for all T timesteps ----
    gi0 = input_proj(x_ref[...], wih0_ref, bgi0_ref)
    outs0, h0 = run_layer(*gi0, whh0_ref, bhh0n_ref)

    # TODO(synk): PyTorch applies dropout between GRU layers only in training
    # mode; this is the deterministic (eval-mode) forward.

    # ---- GRU layer 1: batched input projection on all layer-0 outputs ----
    out0_flat = jnp.concatenate(outs0, axis=0)                       # [T*B, H]
    gi1 = input_proj(out0_flat, wih1_ref, bgi1_ref)
    _, h1 = run_layer(*gi1, whh1_ref, bhh1n_ref)

    # rnn_hidden.permute(1, 0, 2).mean(dim=1) == mean of the two final states.
    h_mean = (h0 + h1) * 0.5

    # fc head: concat([h_mean, a]) @ W1.T == h_mean @ W1[:, :H].T + a @ W1[:, H:].T
    z1 = (jnp.dot(h_mean, w1hT_ref[...], preferred_element_type=jnp.float32)
          + jnp.dot(a_ref[...], w1aT_ref[...], preferred_element_type=jnp.float32)
          + b1_ref[...])
    z1 = jnp.maximum(z1, 0.0)
    out_ref[...] = (jnp.dot(z1, w2T_ref[...], preferred_element_type=jnp.float32)
                    + b2_ref[...])


def _prep_gru_layer(wih, whh, bih, bhh):
    """Pre-transpose / pre-split GRU weights per gate; pre-sum r/z biases."""
    H = whh.shape[1]

    def per_gate_T(w):  # [3H, in] -> [3, in, H]  (already transposed per gate)
        return jnp.stack([w[0:H].T, w[H:2 * H].T, w[2 * H:3 * H].T]).astype(jnp.float32)

    wihT3 = per_gate_T(wih)                                  # [3, in, H]
    whhT3 = per_gate_T(whh)                                  # [3, H, H]
    # Fold b_ih (all gates) + b_hh (r, z only) into the batched input projection.
    # b_hh_n must NOT be folded: it is multiplied by r inside the n gate.
    bgi3 = jnp.stack([
        (bih[0:H] + bhh[0:H]).reshape(1, H),
        (bih[H:2 * H] + bhh[H:2 * H]).reshape(1, H),
        bih[2 * H:3 * H].reshape(1, H),
    ]).astype(jnp.float32)                                   # [3, 1, H]
    bhh_n = bhh[2 * H:3 * H].reshape(1, H).astype(jnp.float32)
    return wihT3, bgi3, whhT3, bhh_n


def critic_forward(params, x, a):
    # x: [B, C, n_stocks, n_time] (PyTorch convention), a: [B, A].
    # x[:, -2].permute(0, 2, 1) -> [B, T, S]; go straight to time-major flat [T*B, S].
    x_tbs = jnp.transpose(x[:, -2], (2, 0, 1)).astype(jnp.float32)   # [T, B, S]
    T, B, S = x_tbs.shape
    x_flat = x_tbs.reshape(T * B, S)
    H = params["whh0"].shape[1]

    l0 = _prep_gru_layer(params["wih0"], params["whh0"], params["bih0"], params["bhh0"])
    l1 = _prep_gru_layer(params["wih1"], params["whh1"], params["bih1"], params["bhh1"])

    w1 = params["fc_w1"].astype(jnp.float32)               # [H//2, H + A]
    w1hT = w1[:, :H].T                                      # [H, H//2]
    w1aT = w1[:, H:].T                                      # [A, H//2]
    b1 = params["fc_b1"].reshape(1, -1).astype(jnp.float32)
    w2T = params["fc_w2"].T.astype(jnp.float32)             # [H//2, 1]
    b2 = params["fc_b2"].reshape(1, 1).astype(jnp.float32)

    args = (x_flat, a.astype(jnp.float32), *l0, *l1, w1hT, w1aT, b1, w2T, b2)

    vmem = pl.BlockSpec(memory_space=pltpu.MemorySpace.VMEM)
    return pl.pallas_call(
        partial(critic_kernel, T),
        out_shape=jax.ShapeDtypeStruct((B, 1), jnp.float32),
        in_specs=[vmem] * len(args),
        out_specs=vmem,
    )(*args)


def critic_reference(params, x, a):
    """Pure-JAX reference for correctness checking."""
    x_bts = jnp.transpose(x[:, -2], (0, 2, 1))
    B, T, S = x_bts.shape
    H = params["whh0"].shape[1]

    def gru_layer(seq, wih, whh, bih, bhh):
        def cell(h, x_t):
            gi = x_t @ wih.T + bih
            gh = h @ whh.T + bhh
            r = jax.nn.sigmoid(gi[:, :H] + gh[:, :H])
            z = jax.nn.sigmoid(gi[:, H:2 * H] + gh[:, H:2 * H])
            n = jnp.tanh(gi[:, 2 * H:] + r * gh[:, 2 * H:])
            h = (1.0 - z) * n + z * h
            return h, h
        h_last, outs = lax.scan(cell, jnp.zeros((B, H), jnp.float32),
                                jnp.transpose(seq, (1, 0, 2)))
        return jnp.transpose(outs, (1, 0, 2)), h_last

    out0, h0 = gru_layer(x_bts, params["wih0"], params["whh0"], params["bih0"], params["bhh0"])
    out1, h1 = gru_layer(out0, params["wih1"], params["whh1"], params["bih1"], params["bhh1"])
    h_mean = (h0 + h1) * 0.5
    feat = jnp.concatenate([h_mean, a], axis=1)
    z1 = jnp.maximum(feat @ params["fc_w1"].T + params["fc_b1"], 0.0)
    return z1 @ params["fc_w2"].T + params["fc_b2"]


if __name__ == "__main__":
    # Small shapes consistent with the module:
    # nb_states = (C, n_stocks, n_time) = (3, 4, 8); nb_actions = (5,); rnn_hidden_size = 32
    B, C, S, T = 2, 3, 4, 8
    A = 5
    H = 32

    key = jax.random.PRNGKey(0)
    keys = jax.random.split(key, 16)

    def u(k, shape, bound):
        return jax.random.uniform(k, shape, jnp.float32, -bound, bound)

    gru_bound = 1.0 / float(jnp.sqrt(jnp.float32(H)))
    fc1_bound = 1.0 / float(jnp.sqrt(jnp.float32(H + A)))
    fc2_bound = 1.0 / float(jnp.sqrt(jnp.float32(H // 2)))

    # NOTE: fc1/fc2/fc3 of the PyTorch module are never used in forward(); omitted.
    params = {
        "wih0": u(keys[0], (3 * H, S), gru_bound),
        "whh0": u(keys[1], (3 * H, H), gru_bound),
        "bih0": u(keys[2], (3 * H,), gru_bound),
        "bhh0": u(keys[3], (3 * H,), gru_bound),
        "wih1": u(keys[4], (3 * H, H), gru_bound),
        "whh1": u(keys[5], (3 * H, H), gru_bound),
        "bih1": u(keys[6], (3 * H,), gru_bound),
        "bhh1": u(keys[7], (3 * H,), gru_bound),
        "fc_w1": u(keys[8], (H // 2, H + A), fc1_bound),
        "fc_b1": u(keys[9], (H // 2,), fc1_bound),
        "fc_w2": u(keys[10], (1, H // 2), fc2_bound),
        "fc_b2": u(keys[11], (1,), fc2_bound),
    }

    x = jax.random.normal(keys[12], (B, C, S, T), jnp.float32)
    a = jax.random.normal(keys[13], (B, A), jnp.float32)

    out = jax.block_until_ready(critic_forward(params, x, a))
    ref = critic_reference(params, x, a)

    assert out.shape == (B, 1), out.shape
    assert jnp.allclose(out, ref, atol=1e-4, rtol=1e-4), (out, ref)
    print("KERNEL_OK")
</pallas_src>

<mosaic_0001>
module attributes {stable_mosaic.version = 11 : i64} {
  func.func @critic_kernel(%arg0: memref<16x4xf32, #tpu.memory_space<vmem>>, %arg1: memref<2x5xf32, #tpu.memory_space<vmem>>, %arg2: memref<3x4x32xf32, #tpu.memory_space<vmem>>, %arg3: memref<3x1x32xf32, #tpu.memory_space<vmem>>, %arg4: memref<3x32x32xf32, #tpu.memory_space<vmem>>, %arg5: memref<1x32xf32, #tpu.memory_space<vmem>>, %arg6: memref<3x32x32xf32, #tpu.memory_space<vmem>>, %arg7: memref<3x1x32xf32, #tpu.memory_space<vmem>>, %arg8: memref<3x32x32xf32, #tpu.memory_space<vmem>>, %arg9: memref<1x32xf32, #tpu.memory_space<vmem>>, %arg10: memref<32x16xf32, #tpu.memory_space<vmem>>, %arg11: memref<5x16xf32, #tpu.memory_space<vmem>>, %arg12: memref<1x16xf32, #tpu.memory_space<vmem>>, %arg13: memref<16x1xf32, #tpu.memory_space<vmem>>, %arg14: memref<1x1xf32, #tpu.memory_space<vmem>>, %arg15: memref<2x1xf32, #tpu.memory_space<vmem>>) attributes {dimension_semantics = [], scalar_prefetch = 0 : i64, scratch_operands = 0 : i64, tpu.core_type = #tpu.core_type<tc>} {
    %c0 = arith.constant 0 : index
    %c0_0 = arith.constant 0 : index
    %0 = vector.load %arg0[%c0, %c0_0] : memref<16x4xf32, #tpu.memory_space<vmem>>, vector<16x4xf32>
    %c0_1 = arith.constant 0 : index
    %c0_2 = arith.constant 0 : index
    %c0_3 = arith.constant 0 : index
    %1 = vector.load %arg2[%c0_1, %c0_2, %c0_3] : memref<3x4x32xf32, #tpu.memory_space<vmem>>, vector<1x4x32xf32>
    %2 = vector.shape_cast %1 : vector<1x4x32xf32> to vector<4x32xf32>
    %cst = arith.constant dense<0.000000e+00> : vector<16x32xf32>
    %3 = tpu.matmul %0, %2, %cst {dimension_numbers = #tpu.dot_dimension_numbers<[1], [0], [0], [1], [0, 0, 1, 1], [], []>} : vector<16x4xf32>, vector<4x32xf32>, vector<16x32xf32> -> vector<16x32xf32>
    %c0_4 = arith.constant 0 : index
    %c0_5 = arith.constant 0 : index
    %c0_6 = arith.constant 0 : index
    %4 = vector.load %arg3[%c0_4, %c0_5, %c0_6] : memref<3x1x32xf32, #tpu.memory_space<vmem>>, vector<1x1x32xf32>
    %5 = vector.shape_cast %4 : vector<1x1x32xf32> to vector<1x32xf32>
    %6 = vector.broadcast %5 : vector<1x32xf32> to vector<16x32xf32>
    %7 = arith.addf %3, %6 : vector<16x32xf32>
    %c1 = arith.constant 1 : index
    %c0_7 = arith.constant 0 : index
    %c0_8 = arith.constant 0 : index
    %8 = vector.load %arg2[%c1, %c0_7, %c0_8] : memref<3x4x32xf32, #tpu.memory_space<vmem>>, vector<1x4x32xf32>
    %9 = vector.shape_cast %8 : vector<1x4x32xf32> to vector<4x32xf32>
    %cst_9 = arith.constant dense<0.000000e+00> : vector<16x32xf32>
    %10 = tpu.matmul %0, %9, %cst_9 {dimension_numbers = #tpu.dot_dimension_numbers<[1], [0], [0], [1], [0, 0, 1, 1], [], []>} : vector<16x4xf32>, vector<4x32xf32>, vector<16x32xf32> -> vector<16x32xf32>
    %c1_10 = arith.constant 1 : index
    %c0_11 = arith.constant 0 : index
    %c0_12 = arith.constant 0 : index
    %11 = vector.load %arg3[%c1_10, %c0_11, %c0_12] : memref<3x1x32xf32, #tpu.memory_space<vmem>>, vector<1x1x32xf32>
    %12 = vector.shape_cast %11 : vector<1x1x32xf32> to vector<1x32xf32>
    %13 = vector.broadcast %12 : vector<1x32xf32> to vector<16x32xf32>
    %14 = arith.addf %10, %13 : vector<16x32xf32>
    %c2 = arith.constant 2 : index
    %c0_13 = arith.constant 0 : index
    %c0_14 = arith.constant 0 : index
    %15 = vector.load %arg2[%c2, %c0_13, %c0_14] : memref<3x4x32xf32, #tpu.memory_space<vmem>>, vector<1x4x32xf32>
    %16 = vector.shape_cast %15 : vector<1x4x32xf32> to vector<4x32xf32>
    %cst_15 = arith.constant dense<0.000000e+00> : vector<16x32xf32>
    %17 = tpu.matmul %0, %16, %cst_15 {dimension_numbers = #tpu.dot_dimension_numbers<[1], [0], [0], [1], [0, 0, 1, 1], [], []>} : vector<16x4xf32>, vector<4x32xf32>, vector<16x32xf32> -> vector<16x32xf32>
    %c2_16 = arith.constant 2 : index
    %c0_17 = arith.constant 0 : index
    %c0_18 = arith.constant 0 : index
    %18 = vector.load %arg3[%c2_16, %c0_17, %c0_18] : memref<3x1x32xf32, #tpu.memory_space<vmem>>, vector<1x1x32xf32>
    %19 = vector.shape_cast %18 : vector<1x1x32xf32> to vector<1x32xf32>
    %20 = vector.broadcast %19 : vector<1x32xf32> to vector<16x32xf32>
    %21 = arith.addf %17, %20 : vector<16x32xf32>
    %c0_19 = arith.constant 0 : index
    %c0_20 = arith.constant 0 : index
    %c0_21 = arith.constant 0 : index
    %22 = vector.load %arg4[%c0_19, %c0_20, %c0_21] : memref<3x32x32xf32, #tpu.memory_space<vmem>>, vector<1x32x32xf32>
    %23 = vector.shape_cast %22 : vector<1x32x32xf32> to vector<32x32xf32>
    %c1_22 = arith.constant 1 : index
    %c0_23 = arith.constant 0 : index
    %c0_24 = arith.constant 0 : index
    %24 = vector.load %arg4[%c1_22, %c0_23, %c0_24] : memref<3x32x32xf32, #tpu.memory_space<vmem>>, vector<1x32x32xf32>
    %25 = vector.shape_cast %24 : vector<1x32x32xf32> to vector<32x32xf32>
    %c2_25 = arith.constant 2 : index
    %c0_26 = arith.constant 0 : index
    %c0_27 = arith.constant 0 : index
    %26 = vector.load %arg4[%c2_25, %c0_26, %c0_27] : memref<3x32x32xf32, #tpu.memory_space<vmem>>, vector<1x32x32xf32>
    %27 = vector.shape_cast %26 : vector<1x32x32xf32> to vector<32x32xf32>
    %c0_28 = arith.constant 0 : index
    %c0_29 = arith.constant 0 : index
    %28 = vector.load %arg5[%c0_28, %c0_29] : memref<1x32xf32, #tpu.memory_space<vmem>>, vector<1x32xf32>
    %cst_30 = arith.constant 0.000000e+00 : f32
    %29 = vector.broadcast %cst_30 : f32 to vector<2x32xf32>
    %cst_31 = arith.constant dense<0.000000e+00> : vector<2x32xf32>
    %30 = tpu.matmul %29, %23, %cst_31 {dimension_numbers = #tpu.dot_dimension_numbers<[1], [0], [0], [1], [0, 0, 1, 1], [], []>} : vector<2x32xf32>, vector<32x32xf32>, vector<2x32xf32> -> vector<2x32xf32>
    %cst_32 = arith.constant dense<0.000000e+00> : vector<2x32xf32>
    %31 = tpu.matmul %29, %25, %cst_32 {dimension_numbers = #tpu.dot_dimension_numbers<[1], [0], [0], [1], [0, 0, 1, 1], [], []>} : vector<2x32xf32>, vector<32x32xf32>, vector<2x32xf32> -> vector<2x32xf32>
    %cst_33 = arith.constant dense<0.000000e+00> : vector<2x32xf32>
    %32 = tpu.matmul %29, %27, %cst_33 {dimension_numbers = #tpu.dot_dimension_numbers<[1], [0], [0], [1], [0, 0, 1, 1], [], []>} : vector<2x32xf32>, vector<32x32xf32>, vector<2x32xf32> -> vector<2x32xf32>
    %33 = vector.extract_strided_slice %7 {offsets = [0, 0], sizes = [2, 32], strides = [1, 1]} : vector<16x32xf32> to vector<2x32xf32>
    %34 = arith.addf %33, %30 : vector<2x32xf32>
    %35 = arith.negf %34 : vector<2x32xf32>
    %36 = math.exp %35 : vector<2x32xf32>
    %cst_34 = arith.constant 1.000000e+00 : f32
    %37 = vector.broadcast %cst_34 : f32 to vector<2x32xf32>
    %38 = arith.addf %37, %36 : vector<2x32xf32>
    %39 = arith.divf %37, %38 : vector<2x32xf32>
    %40 = vector.extract_strided_slice %14 {offsets = [0, 0], sizes = [2, 32], strides = [1, 1]} : vector<16x32xf32> to vector<2x32xf32>
    %41 = arith.addf %40, %31 : vector<2x32xf32>
    %42 = arith.negf %41 : vector<2x32xf32>
    %43 = math.exp %42 : vector<2x32xf32>
    %cst_35 = arith.constant 1.000000e+00 : f32
    %44 = vector.broadcast %cst_35 : f32 to vector<2x32xf32>
    %45 = arith.addf %44, %43 : vector<2x32xf32>
    %46 = arith.divf %44, %45 : vector<2x32xf32>
    %47 = vector.extract_strided_slice %21 {offsets = [0, 0], sizes = [2, 32], strides = [1, 1]} : vector<16x32xf32> to vector<2x32xf32>
    %48 = vector.broadcast %28 : vector<1x32xf32> to vector<2x32xf32>
    %49 = arith.addf %32, %48 : vector<2x32xf32>
    %50 = arith.mulf %39, %49 : vector<2x32xf32>
    %51 = arith.addf %47, %50 : vector<2x32xf32>
    %52 = math.tanh %51 : vector<2x32xf32>
    %cst_36 = arith.constant 1.000000e+00 : f32
    %53 = vector.broadcast %cst_36 : f32 to vector<2x32xf32>
    %54 = arith.subf %53, %46 : vector<2x32xf32>
    %55 = arith.mulf %54, %52 : vector<2x32xf32>
    %56 = arith.mulf %46, %29 : vector<2x32xf32>
    %57 = arith.addf %55, %56 : vector<2x32xf32>
    %cst_37 = arith.constant dense<0.000000e+00> : vector<2x32xf32>
    %58 = tpu.matmul %57, %23, %cst_37 {dimension_numbers = #tpu.dot_dimension_numbers<[1], [0], [0], [1], [0, 0, 1, 1], [], []>} : vector<2x32xf32>, vector<32x32xf32>, vector<2x32xf32> -> vector<2x32xf32>
    %cst_38 = arith.constant dense<0.000000e+00> : vector<2x32xf32>
    %59 = tpu.matmul %57, %25, %cst_38 {dimension_numbers = #tpu.dot_dimension_numbers<[1], [0], [0], [1], [0, 0, 1, 1], [], []>} : vector<2x32xf32>, vector<32x32xf32>, vector<2x32xf32> -> vector<2x32xf32>
    %cst_39 = arith.constant dense<0.000000e+00> : vector<2x32xf32>
    %60 = tpu.matmul %57, %27, %cst_39 {dimension_numbers = #tpu.dot_dimension_numbers<[1], [0], [0], [1], [0, 0, 1, 1], [], []>} : vector<2x32xf32>, vector<32x32xf32>, vector<2x32xf32> -> vector<2x32xf32>
    %61 = vector.extract_strided_slice %7 {offsets = [2, 0], sizes = [2, 32], strides = [1, 1]} : vector<16x32xf32> to vector<2x32xf32>
    %62 = arith.addf %61, %58 : vector<2x32xf32>
    %63 = arith.negf %62 : vector<2x32xf32>
    %64 = math.exp %63 : vector<2x32xf32>
    %cst_40 = arith.constant 1.000000e+00 : f32
    %65 = vector.broadcast %cst_40 : f32 to vector<2x32xf32>
    %66 = arith.addf %65, %64 : vector<2x32xf32>
    %67 = arith.divf %65, %66 : vector<2x32xf32>
    %68 = vector.extract_strided_slice %14 {offsets = [2, 0], sizes = [2, 32], strides = [1, 1]} : vector<16x32xf32> to vector<2x32xf32>
    %69 = arith.addf %68, %59 : vector<2x32xf32>
    %70 = arith.negf %69 : vector<2x32xf32>
    %71 = math.exp %70 : vector<2x32xf32>
    %cst_41 = arith.constant 1.000000e+00 : f32
    %72 = vector.broadcast %cst_41 : f32 to vector<2x32xf32>
    %73 = arith.addf %72, %71 : vector<2x32xf32>
    %74 = arith.divf %72, %73 : vector<2x32xf32>
    %75 = vector.extract_strided_slice %21 {offsets = [2, 0], sizes = [2, 32], strides = [1, 1]} : vector<16x32xf32> to vector<2x32xf32>
    %76 = vector.broadcast %28 : vector<1x32xf32> to vector<2x32xf32>
    %77 = arith.addf %60, %76 : vector<2x32xf32>
    %78 = arith.mulf %67, %77 : vector<2x32xf32>
    %79 = arith.addf %75, %78 : vector<2x32xf32>
    %80 = math.tanh %79 : vector<2x32xf32>
    %cst_42 = arith.constant 1.000000e+00 : f32
    %81 = vector.broadcast %cst_42 : f32 to vector<2x32xf32>
    %82 = arith.subf %81, %74 : vector<2x32xf32>
    %83 = arith.mulf %82, %80 : vector<2x32xf32>
    %84 = arith.mulf %74, %57 : vector<2x32xf32>
    %85 = arith.addf %83, %84 : vector<2x32xf32>
    %cst_43 = arith.constant dense<0.000000e+00> : vector<2x32xf32>
    %86 = tpu.matmul %85, %23, %cst_43 {dimension_numbers = #tpu.dot_dimension_numbers<[1], [0], [0], [1], [0, 0, 1, 1], [], []>} : vector<2x32xf32>, vector<32x32xf32>, vector<2x32xf32> -> vector<2x32xf32>
    %cst_44 = arith.constant dense<0.000000e+00> : vector<2x32xf32>
    %87 = tpu.matmul %85, %25, %cst_44 {dimension_numbers = #tpu.dot_dimension_numbers<[1], [0], [0], [1], [0, 0, 1, 1], [], []>} : vector<2x32xf32>, vector<32x32xf32>, vector<2x32xf32> -> vector<2x32xf32>
    %cst_45 = arith.constant dense<0.000000e+00> : vector<2x32xf32>
    %88 = tpu.matmul %85, %27, %cst_45 {dimension_numbers = #tpu.dot_dimension_numbers<[1], [0], [0], [1], [0, 0, 1, 1], [], []>} : vector<2x32xf32>, vector<32x32xf32>, vector<2x32xf32> -> vector<2x32xf32>
    %89 = vector.extract_strided_slice %7 {offsets = [4, 0], sizes = [2, 32], strides = [1, 1]} : vector<16x32xf32> to vector<2x32xf32>
    %90 = arith.addf %89, %86 : vector<2x32xf32>
    %91 = arith.negf %90 : vector<2x32xf32>
    %92 = math.exp %91 : vector<2x32xf32>
    %cst_46 = arith.constant 1.000000e+00 : f32
    %93 = vector.broadcast %cst_46 : f32 to vector<2x32xf32>
    %94 = arith.addf %93, %92 : vector<2x32xf32>
    %95 = arith.divf %93, %94 : vector<2x32xf32>
    %96 = vector.extract_strided_slice %14 {offsets = [4, 0], sizes = [2, 32], strides = [1, 1]} : vector<16x32xf32> to vector<2x32xf32>
    %97 = arith.addf %96, %87 : vector<2x32xf32>
    %98 = arith.negf %97 : vector<2x32xf32>
    %99 = math.exp %98 : vector<2x32xf32>
    %cst_47 = arith.constant 1.000000e+00 : f32
    %100 = vector.broadcast %cst_47 : f32 to vector<2x32xf32>
    %101 = arith.addf %100, %99 : vector<2x32xf32>
    %102 = arith.divf %100, %101 : vector<2x32xf32>
    %103 = vector.extract_strided_slice %21 {offsets = [4, 0], sizes = [2, 32], strides = [1, 1]} : vector<16x32xf32> to vector<2x32xf32>
    %104 = vector.broadcast %28 : vector<1x32xf32> to vector<2x32xf32>
    %105 = arith.addf %88, %104 : vector<2x32xf32>
    %106 = arith.mulf %95, %105 : vector<2x32xf32>
    %107 = arith.addf %103, %106 : vector<2x32xf32>
    %108 = math.tanh %107 : vector<2x32xf32>
    %cst_48 = arith.constant 1.000000e+00 : f32
    %109 = vector.broadcast %cst_48 : f32 to vector<2x32xf32>
    %110 = arith.subf %109, %102 : vector<2x32xf32>
    %111 = arith.mulf %110, %108 : vector<2x32xf32>
    %112 = arith.mulf %102, %85 : vector<2x32xf32>
    %113 = arith.addf %111, %112 : vector<2x32xf32>
    %cst_49 = arith.constant dense<0.000000e+00> : vector<2x32xf32>
    %114 = tpu.matmul %113, %23, %cst_49 {dimension_numbers = #tpu.dot_dimension_numbers<[1], [0], [0], [1], [0, 0, 1, 1], [], []>} : vector<2x32xf32>, vector<32x32xf32>, vector<2x32xf32> -> vector<2x32xf32>
    %cst_50 = arith.constant dense<0.000000e+00> : vector<2x32xf32>
    %115 = tpu.matmul %113, %25, %cst_50 {dimension_numbers = #tpu.dot_dimension_numbers<[1], [0], [0], [1], [0, 0, 1, 1], [], []>} : vector<2x32xf32>, vector<32x32xf32>, vector<2x32xf32> -> vector<2x32xf32>
    %cst_51 = arith.constant dense<0.000000e+00> : vector<2x32xf32>
    %116 = tpu.matmul %113, %27, %cst_51 {dimension_numbers = #tpu.dot_dimension_numbers<[1], [0], [0], [1], [0, 0, 1, 1], [], []>} : vector<2x32xf32>, vector<32x32xf32>, vector<2x32xf32> -> vector<2x32xf32>
    %117 = vector.extract_strided_slice %7 {offsets = [6, 0], sizes = [2, 32], strides = [1, 1]} : vector<16x32xf32> to vector<2x32xf32>
    %118 = arith.addf %117, %114 : vector<2x32xf32>
    %119 = arith.negf %118 : vector<2x32xf32>
    %120 = math.exp %119 : vector<2x32xf32>
    %cst_52 = arith.constant 1.000000e+00 : f32
    %121 = vector.broadcast %cst_52 : f32 to vector<2x32xf32>
    %122 = arith.addf %121, %120 : vector<2x32xf32>
    %123 = arith.divf %121, %122 : vector<2x32xf32>
    %124 = vector.extract_strided_slice %14 {offsets = [6, 0], sizes = [2, 32], strides = [1, 1]} : vector<16x32xf32> to vector<2x32xf32>
    %125 = arith.addf %124, %115 : vector<2x32xf32>
    %126 = arith.negf %125 : vector<2x32xf32>
    %127 = math.exp %126 : vector<2x32xf32>
    %cst_53 = arith.constant 1.000000e+00 : f32
    %128 = vector.broadcast %cst_53 : f32 to vector<2x32xf32>
    %129 = arith.addf %128, %127 : vector<2x32xf32>
    %130 = arith.divf %128, %129 : vector<2x32xf32>
    %131 = vector.extract_strided_slice %21 {offsets = [6, 0], sizes = [2, 32], strides = [1, 1]} : vector<16x32xf32> to vector<2x32xf32>
    %132 = vector.broadcast %28 : vector<1x32xf32> to vector<2x32xf32>
    %133 = arith.addf %116, %132 : vector<2x32xf32>
    %134 = arith.mulf %123, %133 : vector<2x32xf32>
    %135 = arith.addf %131, %134 : vector<2x32xf32>
    %136 = math.tanh %135 : vector<2x32xf32>
    %cst_54 = arith.constant 1.000000e+00 : f32
    %137 = vector.broadcast %cst_54 : f32 to vector<2x32xf32>
    %138 = arith.subf %137, %130 : vector<2x32xf32>
    %139 = arith.mulf %138, %136 : vector<2x32xf32>
    %140 = arith.mulf %130, %113 : vector<2x32xf32>
    %141 = arith.addf %139, %140 : vector<2x32xf32>
    %cst_55 = arith.constant dense<0.000000e+00> : vector<2x32xf32>
    %142 = tpu.matmul %141, %23, %cst_55 {dimension_numbers = #tpu.dot_dimension_numbers<[1], [0], [0], [1], [0, 0, 1, 1], [], []>} : vector<2x32xf32>, vector<32x32xf32>, vector<2x32xf32> -> vector<2x32xf32>
    %cst_56 = arith.constant dense<0.000000e+00> : vector<2x32xf32>
    %143 = tpu.matmul %141, %25, %cst_56 {dimension_numbers = #tpu.dot_dimension_numbers<[1], [0], [0], [1], [0, 0, 1, 1], [], []>} : vector<2x32xf32>, vector<32x32xf32>, vector<2x32xf32> -> vector<2x32xf32>
    %cst_57 = arith.constant dense<0.000000e+00> : vector<2x32xf32>
    %144 = tpu.matmul %141, %27, %cst_57 {dimension_numbers = #tpu.dot_dimension_numbers<[1], [0], [0], [1], [0, 0, 1, 1], [], []>} : vector<2x32xf32>, vector<32x32xf32>, vector<2x32xf32> -> vector<2x32xf32>
    %145 = vector.extract_strided_slice %7 {offsets = [8, 0], sizes = [2, 32], strides = [1, 1]} : vector<16x32xf32> to vector<2x32xf32>
    %146 = arith.addf %145, %142 : vector<2x32xf32>
    %147 = arith.negf %146 : vector<2x32xf32>
    %148 = math.exp %147 : vector<2x32xf32>
    %cst_58 = arith.constant 1.000000e+00 : f32
    %149 = vector.broadcast %cst_58 : f32 to vector<2x32xf32>
    %150 = arith.addf %149, %148 : vector<2x32xf32>
    %151 = arith.divf %149, %150 : vector<2x32xf32>
    %152 = vector.extract_strided_slice %14 {offsets = [8, 0], sizes = [2, 32], strides = [1, 1]} : vector<16x32xf32> to vector<2x32xf32>
    %153 = arith.addf %152, %143 : vector<2x32xf32>
    %154 = arith.negf %153 : vector<2x32xf32>
    %155 = math.exp %154 : vector<2x32xf32>
    %cst_59 = arith.constant 1.000000e+00 : f32
    %156 = vector.broadcast %cst_59 : f32 to vector<2x32xf32>
    %157 = arith.addf %156, %155 : vector<2x32xf32>
    %158 = arith.divf %156, %157 : vector<2x32xf32>
    %159 = vector.extract_strided_slice %21 {offsets = [8, 0], sizes = [2, 32], strides = [1, 1]} : vector<16x32xf32> to vector<2x32xf32>
    %160 = vector.broadcast %28 : vector<1x32xf32> to vector<2x32xf32>
    %161 = arith.addf %144, %160 : vector<2x32xf32>
    %162 = arith.mulf %151, %161 : vector<2x32xf32>
    %163 = arith.addf %159, %162 : vector<2x32xf32>
    %164 = math.tanh %163 : vector<2x32xf32>
    %cst_60 = arith.constant 1.000000e+00 : f32
    %165 = vector.broadcast %cst_60 : f32 to vector<2x32xf32>
    %166 = arith.subf %165, %158 : vector<2x32xf32>
    %167 = arith.mulf %166, %164 : vector<2x32xf32>
    %168 = arith.mulf %158, %141 : vector<2x32xf32>
    %169 = arith.addf %167, %168 : vector<2x32xf32>
    %cst_61 = arith.constant dense<0.000000e+00> : vector<2x32xf32>
    %170 = tpu.matmul %169, %23, %cst_61 {dimension_numbers = #tpu.dot_dimension_numbers<[1], [0], [0], [1], [0, 0, 1, 1], [], []>} : vector<2x32xf32>, vector<32x32xf32>, vector<2x32xf32> -> vector<2x32xf32>
    %cst_62 = arith.constant dense<0.000000e+00> : vector<2x32xf32>
    %171 = tpu.matmul %169, %25, %cst_62 {dimension_numbers = #tpu.dot_dimension_numbers<[1], [0], [0], [1], [0, 0, 1, 1], [], []>} : vector<2x32xf32>, vector<32x32xf32>, vector<2x32xf32> -> vector<2x32xf32>
    %cst_63 = arith.constant dense<0.000000e+00> : vector<2x32xf32>
    %172 = tpu.matmul %169, %27, %cst_63 {dimension_numbers = #tpu.dot_dimension_numbers<[1], [0], [0], [1], [0, 0, 1, 1], [], []>} : vector<2x32xf32>, vector<32x32xf32>, vector<2x32xf32> -> vector<2x32xf32>
    %173 = vector.extract_strided_slice %7 {offsets = [10, 0], sizes = [2, 32], strides = [1, 1]} : vector<16x32xf32> to vector<2x32xf32>
    %174 = arith.addf %173, %170 : vector<2x32xf32>
    %175 = arith.negf %174 : vector<2x32xf32>
    %176 = math.exp %175 : vector<2x32xf32>
    %cst_64 = arith.constant 1.000000e+00 : f32
    %177 = vector.broadcast %cst_64 : f32 to vector<2x32xf32>
    %178 = arith.addf %177, %176 : vector<2x32xf32>
    %179 = arith.divf %177, %178 : vector<2x32xf32>
    %180 = vector.extract_strided_slice %14 {offsets = [10, 0], sizes = [2, 32], strides = [1, 1]} : vector<16x32xf32> to vector<2x32xf32>
    %181 = arith.addf %180, %171 : vector<2x32xf32>
    %182 = arith.negf %181 : vector<2x32xf32>
    %183 = math.exp %182 : vector<2x32xf32>
    %cst_65 = arith.constant 1.000000e+00 : f32
    %184 = vector.broadcast %cst_65 : f32 to vector<2x32xf32>
    %185 = arith.addf %184, %183 : vector<2x32xf32>
    %186 = arith.divf %184, %185 : vector<2x32xf32>
    %187 = vector.extract_strided_slice %21 {offsets = [10, 0], sizes = [2, 32], strides = [1, 1]} : vector<16x32xf32> to vector<2x32xf32>
    %188 = vector.broadcast %28 : vector<1x32xf32> to vector<2x32xf32>
    %189 = arith.addf %172, %188 : vector<2x32xf32>
    %190 = arith.mulf %179, %189 : vector<2x32xf32>
    %191 = arith.addf %187, %190 : vector<2x32xf32>
    %192 = math.tanh %191 : vector<2x32xf32>
    %cst_66 = arith.constant 1.000000e+00 : f32
    %193 = vector.broadcast %cst_66 : f32 to vector<2x32xf32>
    %194 = arith.subf %193, %186 : vector<2x32xf32>
    %195 = arith.mulf %194, %192 : vector<2x32xf32>
    %196 = arith.mulf %186, %169 : vector<2x32xf32>
    %197 = arith.addf %195, %196 : vector<2x32xf32>
    %cst_67 = arith.constant dense<0.000000e+00> : vector<2x32xf32>
    %198 = tpu.matmul %197, %23, %cst_67 {dimension_numbers = #tpu.dot_dimension_numbers<[1], [0], [0], [1], [0, 0, 1, 1], [], []>} : vector<2x32xf32>, vector<32x32xf32>, vector<2x32xf32> -> vector<2x32xf32>
    %cst_68 = arith.constant dense<0.000000e+00> : vector<2x32xf32>
    %199 = tpu.matmul %197, %25, %cst_68 {dimension_numbers = #tpu.dot_dimension_numbers<[1], [0], [0], [1], [0, 0, 1, 1], [], []>} : vector<2x32xf32>, vector<32x32xf32>, vector<2x32xf32> -> vector<2x32xf32>
    %cst_69 = arith.constant dense<0.000000e+00> : vector<2x32xf32>
    %200 = tpu.matmul %197, %27, %cst_69 {dimension_numbers = #tpu.dot_dimension_numbers<[1], [0], [0], [1], [0, 0, 1, 1], [], []>} : vector<2x32xf32>, vector<32x32xf32>, vector<2x32xf32> -> vector<2x32xf32>
    %201 = vector.extract_strided_slice %7 {offsets = [12, 0], sizes = [2, 32], strides = [1, 1]} : vector<16x32xf32> to vector<2x32xf32>
    %202 = arith.addf %201, %198 : vector<2x32xf32>
    %203 = arith.negf %202 : vector<2x32xf32>
    %204 = math.exp %203 : vector<2x32xf32>
    %cst_70 = arith.constant 1.000000e+00 : f32
    %205 = vector.broadcast %cst_70 : f32 to vector<2x32xf32>
    %206 = arith.addf %205, %204 : vector<2x32xf32>
    %207 = arith.divf %205, %206 : vector<2x32xf32>
    %208 = vector.extract_strided_slice %14 {offsets = [12, 0], sizes = [2, 32], strides = [1, 1]} : vector<16x32xf32> to vector<2x32xf32>
    %209 = arith.addf %208, %199 : vector<2x32xf32>
    %210 = arith.negf %209 : vector<2x32xf32>
    %211 = math.exp %210 : vector<2x32xf32>
    %cst_71 = arith.constant 1.000000e+00 : f32
    %212 = vector.broadcast %cst_71 : f32 to vector<2x32xf32>
    %213 = arith.addf %212, %211 : vector<2x32xf32>
    %214 = arith.divf %212, %213 : vector<2x32xf32>
    %215 = vector.extract_strided_slice %21 {offsets = [12, 0], sizes = [2, 32], strides = [1, 1]} : vector<16x32xf32> to vector<2x32xf32>
    %216 = vector.broadcast %28 : vector<1x32xf32> to vector<2x32xf32>
    %217 = arith.addf %200, %216 : vector<2x32xf32>
    %218 = arith.mulf %207, %217 : vector<2x32xf32>
    %219 = arith.addf %215, %218 : vector<2x32xf32>
    %220 = math.tanh %219 : vector<2x32xf32>
    %cst_72 = arith.constant 1.000000e+00 : f32
    %221 = vector.broadcast %cst_72 : f32 to vector<2x32xf32>
    %222 = arith.subf %221, %214 : vector<2x32xf32>
    %223 = arith.mulf %222, %220 : vector<2x32xf32>
    %224 = arith.mulf %214, %197 : vector<2x32xf32>
    %225 = arith.addf %223, %224 : vector<2x32xf32>
    %cst_73 = arith.constant dense<0.000000e+00> : vector<2x32xf32>
    %226 = tpu.matmul %225, %23, %cst_73 {dimension_numbers = #tpu.dot_dimension_numbers<[1], [0], [0], [1], [0, 0, 1, 1], [], []>} : vector<2x32xf32>, vector<32x32xf32>, vector<2x32xf32> -> vector<2x32xf32>
    %cst_74 = arith.constant dense<0.000000e+00> : vector<2x32xf32>
    %227 = tpu.matmul %225, %25, %cst_74 {dimension_numbers = #tpu.dot_dimension_numbers<[1], [0], [0], [1], [0, 0, 1, 1], [], []>} : vector<2x32xf32>, vector<32x32xf32>, vector<2x32xf32> -> vector<2x32xf32>
    %cst_75 = arith.constant dense<0.000000e+00> : vector<2x32xf32>
    %228 = tpu.matmul %225, %27, %cst_75 {dimension_numbers = #tpu.dot_dimension_numbers<[1], [0], [0], [1], [0, 0, 1, 1], [], []>} : vector<2x32xf32>, vector<32x32xf32>, vector<2x32xf32> -> vector<2x32xf32>
    %229 = vector.extract_strided_slice %7 {offsets = [14, 0], sizes = [2, 32], strides = [1, 1]} : vector<16x32xf32> to vector<2x32xf32>
    %230 = arith.addf %229, %226 : vector<2x32xf32>
    %231 = arith.negf %230 : vector<2x32xf32>
    %232 = math.exp %231 : vector<2x32xf32>
    %cst_76 = arith.constant 1.000000e+00 : f32
    %233 = vector.broadcast %cst_76 : f32 to vector<2x32xf32>
    %234 = arith.addf %233, %232 : vector<2x32xf32>
    %235 = arith.divf %233, %234 : vector<2x32xf32>
    %236 = vector.extract_strided_slice %14 {offsets = [14, 0], sizes = [2, 32], strides = [1, 1]} : vector<16x32xf32> to vector<2x32xf32>
    %237 = arith.addf %236, %227 : vector<2x32xf32>
    %238 = arith.negf %237 : vector<2x32xf32>
    %239 = math.exp %238 : vector<2x32xf32>
    %cst_77 = arith.constant 1.000000e+00 : f32
    %240 = vector.broadcast %cst_77 : f32 to vector<2x32xf32>
    %241 = arith.addf %240, %239 : vector<2x32xf32>
    %242 = arith.divf %240, %241 : vector<2x32xf32>
    %243 = vector.extract_strided_slice %21 {offsets = [14, 0], sizes = [2, 32], strides = [1, 1]} : vector<16x32xf32> to vector<2x32xf32>
    %244 = vector.broadcast %28 : vector<1x32xf32> to vector<2x32xf32>
    %245 = arith.addf %228, %244 : vector<2x32xf32>
    %246 = arith.mulf %235, %245 : vector<2x32xf32>
    %247 = arith.addf %243, %246 : vector<2x32xf32>
    %248 = math.tanh %247 : vector<2x32xf32>
    %cst_78 = arith.constant 1.000000e+00 : f32
    %249 = vector.broadcast %cst_78 : f32 to vector<2x32xf32>
    %250 = arith.subf %249, %242 : vector<2x32xf32>
    %251 = arith.mulf %250, %248 : vector<2x32xf32>
    %252 = arith.mulf %242, %225 : vector<2x32xf32>
    %253 = arith.addf %251, %252 : vector<2x32xf32>
    %254 = tpu.concatenate %57, %85, %113, %141, %169, %197, %225, %253 in 0 : vector<2x32xf32>, vector<2x32xf32>, vector<2x32xf32>, vector<2x32xf32>, vector<2x32xf32>, vector<2x32xf32>, vector<2x32xf32>, vector<2x32xf32> -> vector<16x32xf32>
    %c0_79 = arith.constant 0 : index
    %c0_80 = arith.constant 0 : index
    %c0_81 = arith.constant 0 : index
    %255 = vector.load %arg6[%c0_79, %c0_80, %c0_81] : memref<3x32x32xf32, #tpu.memory_space<vmem>>, vector<1x32x32xf32>
    %256 = vector.shape_cast %255 : vector<1x32x32xf32> to vector<32x32xf32>
    %cst_82 = arith.constant dense<0.000000e+00> : vector<16x32xf32>
    %257 = tpu.matmul %254, %256, %cst_82 {dimension_numbers = #tpu.dot_dimension_numbers<[1], [0], [0], [1], [0, 0, 1, 1], [], []>} : vector<16x32xf32>, vector<32x32xf32>, vector<16x32xf32> -> vector<16x32xf32>
    %c0_83 = arith.constant 0 : index
    %c0_84 = arith.constant 0 : index
    %c0_85 = arith.constant 0 : index
    %258 = vector.load %arg7[%c0_83, %c0_84, %c0_85] : memref<3x1x32xf32, #tpu.memory_space<vmem>>, vector<1x1x32xf32>
    %259 = vector.shape_cast %258 : vector<1x1x32xf32> to vector<1x32xf32>
    %260 = vector.broadcast %259 : vector<1x32xf32> to vector<16x32xf32>
    %261 = arith.addf %257, %260 : vector<16x32xf32>
    %c1_86 = arith.constant 1 : index
    %c0_87 = arith.constant 0 : index
    %c0_88 = arith.constant 0 : index
    %262 = vector.load %arg6[%c1_86, %c0_87, %c0_88] : memref<3x32x32xf32, #tpu.memory_space<vmem>>, vector<1x32x32xf32>
    %263 = vector.shape_cast %262 : vector<1x32x32xf32> to vector<32x32xf32>
    %cst_89 = arith.constant dense<0.000000e+00> : vector<16x32xf32>
    %264 = tpu.matmul %254, %263, %cst_89 {dimension_numbers = #tpu.dot_dimension_numbers<[1], [0], [0], [1], [0, 0, 1, 1], [], []>} : vector<16x32xf32>, vector<32x32xf32>, vector<16x32xf32> -> vector<16x32xf32>
    %c1_90 = arith.constant 1 : index
    %c0_91 = arith.constant 0 : index
    %c0_92 = arith.constant 0 : index
    %265 = vector.load %arg7[%c1_90, %c0_91, %c0_92] : memref<3x1x32xf32, #tpu.memory_space<vmem>>, vector<1x1x32xf32>
    %266 = vector.shape_cast %265 : vector<1x1x32xf32> to vector<1x32xf32>
    %267 = vector.broadcast %266 : vector<1x32xf32> to vector<16x32xf32>
    %268 = arith.addf %264, %267 : vector<16x32xf32>
    %c2_93 = arith.constant 2 : index
    %c0_94 = arith.constant 0 : index
    %c0_95 = arith.constant 0 : index
    %269 = vector.load %arg6[%c2_93, %c0_94, %c0_95] : memref<3x32x32xf32, #tpu.memory_space<vmem>>, vector<1x32x32xf32>
    %270 = vector.shape_cast %269 : vector<1x32x32xf32> to vector<32x32xf32>
    %cst_96 = arith.constant dense<0.000000e+00> : vector<16x32xf32>
    %271 = tpu.matmul %254, %270, %cst_96 {dimension_numbers = #tpu.dot_dimension_numbers<[1], [0], [0], [1], [0, 0, 1, 1], [], []>} : vector<16x32xf32>, vector<32x32xf32>, vector<16x32xf32> -> vector<16x32xf32>
    %c2_97 = arith.constant 2 : index
    %c0_98 = arith.constant 0 : index
    %c0_99 = arith.constant 0 : index
    %272 = vector.load %arg7[%c2_97, %c0_98, %c0_99] : memref<3x1x32xf32, #tpu.memory_space<vmem>>, vector<1x1x32xf32>
    %273 = vector.shape_cast %272 : vector<1x1x32xf32> to vector<1x32xf32>
    %274 = vector.broadcast %273 : vector<1x32xf32> to vector<16x32xf32>
    %275 = arith.addf %271, %274 : vector<16x32xf32>
    %c0_100 = arith.constant 0 : index
    %c0_101 = arith.constant 0 : index
    %c0_102 = arith.constant 0 : index
    %276 = vector.load %arg8[%c0_100, %c0_101, %c0_102] : memref<3x32x32xf32, #tpu.memory_space<vmem>>, vector<1x32x32xf32>
    %277 = vector.shape_cast %276 : vector<1x32x32xf32> to vector<32x32xf32>
    %c1_103 = arith.constant 1 : index
    %c0_104 = arith.constant 0 : index
    %c0_105 = arith.constant 0 : index
    %278 = vector.load %arg8[%c1_103, %c0_104, %c0_105] : memref<3x32x32xf32, #tpu.memory_space<vmem>>, vector<1x32x32xf32>
    %279 = vector.shape_cast %278 : vector<1x32x32xf32> to vector<32x32xf32>
    %c2_106 = arith.constant 2 : index
    %c0_107 = arith.constant 0 : index
    %c0_108 = arith.constant 0 : index
    %280 = vector.load %arg8[%c2_106, %c0_107, %c0_108] : memref<3x32x32xf32, #tpu.memory_space<vmem>>, vector<1x32x32xf32>
    %281 = vector.shape_cast %280 : vector<1x32x32xf32> to vector<32x32xf32>
    %c0_109 = arith.constant 0 : index
    %c0_110 = arith.constant 0 : index
    %282 = vector.load %arg9[%c0_109, %c0_110] : memref<1x32xf32, #tpu.memory_space<vmem>>, vector<1x32xf32>
    %cst_111 = arith.constant 0.000000e+00 : f32
    %283 = vector.broadcast %cst_111 : f32 to vector<2x32xf32>
    %cst_112 = arith.constant dense<0.000000e+00> : vector<2x32xf32>
    %284 = tpu.matmul %283, %277, %cst_112 {dimension_numbers = #tpu.dot_dimension_numbers<[1], [0], [0], [1], [0, 0, 1, 1], [], []>} : vector<2x32xf32>, vector<32x32xf32>, vector<2x32xf32> -> vector<2x32xf32>
    %cst_113 = arith.constant dense<0.000000e+00> : vector<2x32xf32>
    %285 = tpu.matmul %283, %279, %cst_113 {dimension_numbers = #tpu.dot_dimension_numbers<[1], [0], [0], [1], [0, 0, 1, 1], [], []>} : vector<2x32xf32>, vector<32x32xf32>, vector<2x32xf32> -> vector<2x32xf32>
    %cst_114 = arith.constant dense<0.000000e+00> : vector<2x32xf32>
    %286 = tpu.matmul %283, %281, %cst_114 {dimension_numbers = #tpu.dot_dimension_numbers<[1], [0], [0], [1], [0, 0, 1, 1], [], []>} : vector<2x32xf32>, vector<32x32xf32>, vector<2x32xf32> -> vector<2x32xf32>
    %287 = vector.extract_strided_slice %261 {offsets = [0, 0], sizes = [2, 32], strides = [1, 1]} : vector<16x32xf32> to vector<2x32xf32>
    %288 = arith.addf %287, %284 : vector<2x32xf32>
    %289 = arith.negf %288 : vector<2x32xf32>
    %290 = math.exp %289 : vector<2x32xf32>
    %cst_115 = arith.constant 1.000000e+00 : f32
    %291 = vector.broadcast %cst_115 : f32 to vector<2x32xf32>
    %292 = arith.addf %291, %290 : vector<2x32xf32>
    %293 = arith.divf %291, %292 : vector<2x32xf32>
    %294 = vector.extract_strided_slice %268 {offsets = [0, 0], sizes = [2, 32], strides = [1, 1]} : vector<16x32xf32> to vector<2x32xf32>
    %295 = arith.addf %294, %285 : vector<2x32xf32>
    %296 = arith.negf %295 : vector<2x32xf32>
    %297 = math.exp %296 : vector<2x32xf32>
    %cst_116 = arith.constant 1.000000e+00 : f32
    %298 = vector.broadcast %cst_116 : f32 to vector<2x32xf32>
    %299 = arith.addf %298, %297 : vector<2x32xf32>
    %300 = arith.divf %298, %299 : vector<2x32xf32>
    %301 = vector.extract_strided_slice %275 {offsets = [0, 0], sizes = [2, 32], strides = [1, 1]} : vector<16x32xf32> to vector<2x32xf32>
    %302 = vector.broadcast %282 : vector<1x32xf32> to vector<2x32xf32>
    %303 = arith.addf %286, %302 : vector<2x32xf32>
    %304 = arith.mulf %293, %303 : vector<2x32xf32>
    %305 = arith.addf %301, %304 : vector<2x32xf32>
    %306 = math.tanh %305 : vector<2x32xf32>
    %cst_117 = arith.constant 1.000000e+00 : f32
    %307 = vector.broadcast %cst_117 : f32 to vector<2x32xf32>
    %308 = arith.subf %307, %300 : vector<2x32xf32>
    %309 = arith.mulf %308, %306 : vector<2x32xf32>
    %310 = arith.mulf %300, %283 : vector<2x32xf32>
    %311 = arith.addf %309, %310 : vector<2x32xf32>
    %cst_118 = arith.constant dense<0.000000e+00> : vector<2x32xf32>
    %312 = tpu.matmul %311, %277, %cst_118 {dimension_numbers = #tpu.dot_dimension_numbers<[1], [0], [0], [1], [0, 0, 1, 1], [], []>} : vector<2x32xf32>, vector<32x32xf32>, vector<2x32xf32> -> vector<2x32xf32>
    %cst_119 = arith.constant dense<0.000000e+00> : vector<2x32xf32>
    %313 = tpu.matmul %311, %279, %cst_119 {dimension_numbers = #tpu.dot_dimension_numbers<[1], [0], [0], [1], [0, 0, 1, 1], [], []>} : vector<2x32xf32>, vector<32x32xf32>, vector<2x32xf32> -> vector<2x32xf32>
    %cst_120 = arith.constant dense<0.000000e+00> : vector<2x32xf32>
    %314 = tpu.matmul %311, %281, %cst_120 {dimension_numbers = #tpu.dot_dimension_numbers<[1], [0], [0], [1], [0, 0, 1, 1], [], []>} : vector<2x32xf32>, vector<32x32xf32>, vector<2x32xf32> -> vector<2x32xf32>
    %315 = vector.extract_strided_slice %261 {offsets = [2, 0], sizes = [2, 32], strides = [1, 1]} : vector<16x32xf32> to vector<2x32xf32>
    %316 = arith.addf %315, %312 : vector<2x32xf32>
    %317 = arith.negf %316 : vector<2x32xf32>
    %318 = math.exp %317 : vector<2x32xf32>
    %cst_121 = arith.constant 1.000000e+00 : f32
    %319 = vector.broadcast %cst_121 : f32 to vector<2x32xf32>
    %320 = arith.addf %319, %318 : vector<2x32xf32>
    %321 = arith.divf %319, %320 : vector<2x32xf32>
    %322 = vector.extract_strided_slice %268 {offsets = [2, 0], sizes = [2, 32], strides = [1, 1]} : vector<16x32xf32> to vector<2x32xf32>
    %323 = arith.addf %322, %313 : vector<2x32xf32>
    %324 = arith.negf %323 : vector<2x32xf32>
    %325 = math.exp %324 : vector<2x32xf32>
    %cst_122 = arith.constant 1.000000e+00 : f32
    %326 = vector.broadcast %cst_122 : f32 to vector<2x32xf32>
    %327 = arith.addf %326, %325 : vector<2x32xf32>
    %328 = arith.divf %326, %327 : vector<2x32xf32>
    %329 = vector.extract_strided_slice %275 {offsets = [2, 0], sizes = [2, 32], strides = [1, 1]} : vector<16x32xf32> to vector<2x32xf32>
    %330 = vector.broadcast %282 : vector<1x32xf32> to vector<2x32xf32>
    %331 = arith.addf %314, %330 : vector<2x32xf32>
    %332 = arith.mulf %321, %331 : vector<2x32xf32>
    %333 = arith.addf %329, %332 : vector<2x32xf32>
    %334 = math.tanh %333 : vector<2x32xf32>
    %cst_123 = arith.constant 1.000000e+00 : f32
    %335 = vector.broadcast %cst_123 : f32 to vector<2x32xf32>
    %336 = arith.subf %335, %328 : vector<2x32xf32>
    %337 = arith.mulf %336, %334 : vector<2x32xf32>
    %338 = arith.mulf %328, %311 : vector<2x32xf32>
    %339 = arith.addf %337, %338 : vector<2x32xf32>
    %cst_124 = arith.constant dense<0.000000e+00> : vector<2x32xf32>
    %340 = tpu.matmul %339, %277, %cst_124 {dimension_numbers = #tpu.dot_dimension_numbers<[1], [0], [0], [1], [0, 0, 1, 1], [], []>} : vector<2x32xf32>, vector<32x32xf32>, vector<2x32xf32> -> vector<2x32xf32>
    %cst_125 = arith.constant dense<0.000000e+00> : vector<2x32xf32>
    %341 = tpu.matmul %339, %279, %cst_125 {dimension_numbers = #tpu.dot_dimension_numbers<[1], [0], [0], [1], [0, 0, 1, 1], [], []>} : vector<2x32xf32>, vector<32x32xf32>, vector<2x32xf32> -> vector<2x32xf32>
    %cst_126 = arith.constant dense<0.000000e+00> : vector<2x32xf32>
    %342 = tpu.matmul %339, %281, %cst_126 {dimension_numbers = #tpu.dot_dimension_numbers<[1], [0], [0], [1], [0, 0, 1, 1], [], []>} : vector<2x32xf32>, vector<32x32xf32>, vector<2x32xf32> -> vector<2x32xf32>
    %343 = vector.extract_strided_slice %261 {offsets = [4, 0], sizes = [2, 32], strides = [1, 1]} : vector<16x32xf32> to vector<2x32xf32>
    %344 = arith.addf %343, %340 : vector<2x32xf32>
    %345 = arith.negf %344 : vector<2x32xf32>
    %346 = math.exp %345 : vector<2x32xf32>
    %cst_127 = arith.constant 1.000000e+00 : f32
    %347 = vector.broadcast %cst_127 : f32 to vector<2x32xf32>
    %348 = arith.addf %347, %346 : vector<2x32xf32>
    %349 = arith.divf %347, %348 : vector<2x32xf32>
    %350 = vector.extract_strided_slice %268 {offsets = [4, 0], sizes = [2, 32], strides = [1, 1]} : vector<16x32xf32> to vector<2x32xf32>
    %351 = arith.addf %350, %341 : vector<2x32xf32>
    %352 = arith.negf %351 : vector<2x32xf32>
    %353 = math.exp %352 : vector<2x32xf32>
    %cst_128 = arith.constant 1.000000e+00 : f32
    %354 = vector.broadcast %cst_128 : f32 to vector<2x32xf32>
    %355 = arith.addf %354, %353 : vector<2x32xf32>
    %356 = arith.divf %354, %355 : vector<2x32xf32>
    %357 = vector.extract_strided_slice %275 {offsets = [4, 0], sizes = [2, 32], strides = [1, 1]} : vector<16x32xf32> to vector<2x32xf32>
    %358 = vector.broadcast %282 : vector<1x32xf32> to vector<2x32xf32>
    %359 = arith.addf %342, %358 : vector<2x32xf32>
    %360 = arith.mulf %349, %359 : vector<2x32xf32>
    %361 = arith.addf %357, %360 : vector<2x32xf32>
    %362 = math.tanh %361 : vector<2x32xf32>
    %cst_129 = arith.constant 1.000000e+00 : f32
    %363 = vector.broadcast %cst_129 : f32 to vector<2x32xf32>
    %364 = arith.subf %363, %356 : vector<2x32xf32>
    %365 = arith.mulf %364, %362 : vector<2x32xf32>
    %366 = arith.mulf %356, %339 : vector<2x32xf32>
    %367 = arith.addf %365, %366 : vector<2x32xf32>
    %cst_130 = arith.constant dense<0.000000e+00> : vector<2x32xf32>
    %368 = tpu.matmul %367, %277, %cst_130 {dimension_numbers = #tpu.dot_dimension_numbers<[1], [0], [0], [1], [0, 0, 1, 1], [], []>} : vector<2x32xf32>, vector<32x32xf32>, vector<2x32xf32> -> vector<2x32xf32>
    %cst_131 = arith.constant dense<0.000000e+00> : vector<2x32xf32>
    %369 = tpu.matmul %367, %279, %cst_131 {dimension_numbers = #tpu.dot_dimension_numbers<[1], [0], [0], [1], [0, 0, 1, 1], [], []>} : vector<2x32xf32>, vector<32x32xf32>, vector<2x32xf32> -> vector<2x32xf32>
    %cst_132 = arith.constant dense<0.000000e+00> : vector<2x32xf32>
    %370 = tpu.matmul %367, %281, %cst_132 {dimension_numbers = #tpu.dot_dimension_numbers<[1], [0], [0], [1], [0, 0, 1, 1], [], []>} : vector<2x32xf32>, vector<32x32xf32>, vector<2x32xf32> -> vector<2x32xf32>
    %371 = vector.extract_strided_slice %261 {offsets = [6, 0], sizes = [2, 32], strides = [1, 1]} : vector<16x32xf32> to vector<2x32xf32>
    %372 = arith.addf %371, %368 : vector<2x32xf32>
    %373 = arith.negf %372 : vector<2x32xf32>
    %374 = math.exp %373 : vector<2x32xf32>
    %cst_133 = arith.constant 1.000000e+00 : f32
    %375 = vector.broadcast %cst_133 : f32 to vector<2x32xf32>
    %376 = arith.addf %375, %374 : vector<2x32xf32>
    %377 = arith.divf %375, %376 : vector<2x32xf32>
    %378 = vector.extract_strided_slice %268 {offsets = [6, 0], sizes = [2, 32], strides = [1, 1]} : vector<16x32xf32> to vector<2x32xf32>
    %379 = arith.addf %378, %369 : vector<2x32xf32>
    %380 = arith.negf %379 : vector<2x32xf32>
    %381 = math.exp %380 : vector<2x32xf32>
    %cst_134 = arith.constant 1.000000e+00 : f32
    %382 = vector.broadcast %cst_134 : f32 to vector<2x32xf32>
    %383 = arith.addf %382, %381 : vector<2x32xf32>
    %384 = arith.divf %382, %383 : vector<2x32xf32>
    %385 = vector.extract_strided_slice %275 {offsets = [6, 0], sizes = [2, 32], strides = [1, 1]} : vector<16x32xf32> to vector<2x32xf32>
    %386 = vector.broadcast %282 : vector<1x32xf32> to vector<2x32xf32>
    %387 = arith.addf %370, %386 : vector<2x32xf32>
    %388 = arith.mulf %377, %387 : vector<2x32xf32>
    %389 = arith.addf %385, %388 : vector<2x32xf32>
    %390 = math.tanh %389 : vector<2x32xf32>
    %cst_135 = arith.constant 1.000000e+00 : f32
    %391 = vector.broadcast %cst_135 : f32 to vector<2x32xf32>
    %392 = arith.subf %391, %384 : vector<2x32xf32>
    %393 = arith.mulf %392, %390 : vector<2x32xf32>
    %394 = arith.mulf %384, %367 : vector<2x32xf32>
    %395 = arith.addf %393, %394 : vector<2x32xf32>
    %cst_136 = arith.constant dense<0.000000e+00> : vector<2x32xf32>
    %396 = tpu.matmul %395, %277, %cst_136 {dimension_numbers = #tpu.dot_dimension_numbers<[1], [0], [0], [1], [0, 0, 1, 1], [], []>} : vector<2x32xf32>, vector<32x32xf32>, vector<2x32xf32> -> vector<2x32xf32>
    %cst_137 = arith.constant dense<0.000000e+00> : vector<2x32xf32>
    %397 = tpu.matmul %395, %279, %cst_137 {dimension_numbers = #tpu.dot_dimension_numbers<[1], [0], [0], [1], [0, 0, 1, 1], [], []>} : vector<2x32xf32>, vector<32x32xf32>, vector<2x32xf32> -> vector<2x32xf32>
    %cst_138 = arith.constant dense<0.000000e+00> : vector<2x32xf32>
    %398 = tpu.matmul %395, %281, %cst_138 {dimension_numbers = #tpu.dot_dimension_numbers<[1], [0], [0], [1], [0, 0, 1, 1], [], []>} : vector<2x32xf32>, vector<32x32xf32>, vector<2x32xf32> -> vector<2x32xf32>
    %399 = vector.extract_strided_slice %261 {offsets = [8, 0], sizes = [2, 32], strides = [1, 1]} : vector<16x32xf32> to vector<2x32xf32>
    %400 = arith.addf %399, %396 : vector<2x32xf32>
    %401 = arith.negf %400 : vector<2x32xf32>
    %402 = math.exp %401 : vector<2x32xf32>
    %cst_139 = arith.constant 1.000000e+00 : f32
    %403 = vector.broadcast %cst_139 : f32 to vector<2x32xf32>
    %404 = arith.addf %403, %402 : vector<2x32xf32>
    %405 = arith.divf %403, %404 : vector<2x32xf32>
    %406 = vector.extract_strided_slice %268 {offsets = [8, 0], sizes = [2, 32], strides = [1, 1]} : vector<16x32xf32> to vector<2x32xf32>
    %407 = arith.addf %406, %397 : vector<2x32xf32>
    %408 = arith.negf %407 : vector<2x32xf32>
    %409 = math.exp %408 : vector<2x32xf32>
    %cst_140 = arith.constant 1.000000e+00 : f32
    %410 = vector.broadcast %cst_140 : f32 to vector<2x32xf32>
    %411 = arith.addf %410, %409 : vector<2x32xf32>
    %412 = arith.divf %410, %411 : vector<2x32xf32>
    %413 = vector.extract_strided_slice %275 {offsets = [8, 0], sizes = [2, 32], strides = [1, 1]} : vector<16x32xf32> to vector<2x32xf32>
    %414 = vector.broadcast %282 : vector<1x32xf32> to vector<2x32xf32>
    %415 = arith.addf %398, %414 : vector<2x32xf32>
    %416 = arith.mulf %405, %415 : vector<2x32xf32>
    %417 = arith.addf %413, %416 : vector<2x32xf32>
    %418 = math.tanh %417 : vector<2x32xf32>
    %cst_141 = arith.constant 1.000000e+00 : f32
    %419 = vector.broadcast %cst_141 : f32 to vector<2x32xf32>
    %420 = arith.subf %419, %412 : vector<2x32xf32>
    %421 = arith.mulf %420, %418 : vector<2x32xf32>
    %422 = arith.mulf %412, %395 : vector<2x32xf32>
    %423 = arith.addf %421, %422 : vector<2x32xf32>
    %cst_142 = arith.constant dense<0.000000e+00> : vector<2x32xf32>
    %424 = tpu.matmul %423, %277, %cst_142 {dimension_numbers = #tpu.dot_dimension_numbers<[1], [0], [0], [1], [0, 0, 1, 1], [], []>} : vector<2x32xf32>, vector<32x32xf32>, vector<2x32xf32> -> vector<2x32xf32>
    %cst_143 = arith.constant dense<0.000000e+00> : vector<2x32xf32>
    %425 = tpu.matmul %423, %279, %cst_143 {dimension_numbers = #tpu.dot_dimension_numbers<[1], [0], [0], [1], [0, 0, 1, 1], [], []>} : vector<2x32xf32>, vector<32x32xf32>, vector<2x32xf32> -> vector<2x32xf32>
    %cst_144 = arith.constant dense<0.000000e+00> : vector<2x32xf32>
    %426 = tpu.matmul %423, %281, %cst_144 {dimension_numbers = #tpu.dot_dimension_numbers<[1], [0], [0], [1], [0, 0, 1, 1], [], []>} : vector<2x32xf32>, vector<32x32xf32>, vector<2x32xf32> -> vector<2x32xf32>
    %427 = vector.extract_strided_slice %261 {offsets = [10, 0], sizes = [2, 32], strides = [1, 1]} : vector<16x32xf32> to vector<2x32xf32>
    %428 = arith.addf %427, %424 : vector<2x32xf32>
    %429 = arith.negf %428 : vector<2x32xf32>
    %430 = math.exp %429 : vector<2x32xf32>
    %cst_145 = arith.constant 1.000000e+00 : f32
    %431 = vector.broadcast %cst_145 : f32 to vector<2x32xf32>
    %432 = arith.addf %431, %430 : vector<2x32xf32>
    %433 = arith.divf %431, %432 : vector<2x32xf32>
    %434 = vector.extract_strided_slice %268 {offsets = [10, 0], sizes = [2, 32], strides = [1, 1]} : vector<16x32xf32> to vector<2x32xf32>
    %435 = arith.addf %434, %425 : vector<2x32xf32>
    %436 = arith.negf %435 : vector<2x32xf32>
    %437 = math.exp %436 : vector<2x32xf32>
    %cst_146 = arith.constant 1.000000e+00 : f32
    %438 = vector.broadcast %cst_146 : f32 to vector<2x32xf32>
    %439 = arith.addf %438, %437 : vector<2x32xf32>
    %440 = arith.divf %438, %439 : vector<2x32xf32>
    %441 = vector.extract_strided_slice %275 {offsets = [10, 0], sizes = [2, 32], strides = [1, 1]} : vector<16x32xf32> to vector<2x32xf32>
    %442 = vector.broadcast %282 : vector<1x32xf32> to vector<2x32xf32>
    %443 = arith.addf %426, %442 : vector<2x32xf32>
    %444 = arith.mulf %433, %443 : vector<2x32xf32>
    %445 = arith.addf %441, %444 : vector<2x32xf32>
    %446 = math.tanh %445 : vector<2x32xf32>
    %cst_147 = arith.constant 1.000000e+00 : f32
    %447 = vector.broadcast %cst_147 : f32 to vector<2x32xf32>
    %448 = arith.subf %447, %440 : vector<2x32xf32>
    %449 = arith.mulf %448, %446 : vector<2x32xf32>
    %450 = arith.mulf %440, %423 : vector<2x32xf32>
    %451 = arith.addf %449, %450 : vector<2x32xf32>
    %cst_148 = arith.constant dense<0.000000e+00> : vector<2x32xf32>
    %452 = tpu.matmul %451, %277, %cst_148 {dimension_numbers = #tpu.dot_dimension_numbers<[1], [0], [0], [1], [0, 0, 1, 1], [], []>} : vector<2x32xf32>, vector<32x32xf32>, vector<2x32xf32> -> vector<2x32xf32>
    %cst_149 = arith.constant dense<0.000000e+00> : vector<2x32xf32>
    %453 = tpu.matmul %451, %279, %cst_149 {dimension_numbers = #tpu.dot_dimension_numbers<[1], [0], [0], [1], [0, 0, 1, 1], [], []>} : vector<2x32xf32>, vector<32x32xf32>, vector<2x32xf32> -> vector<2x32xf32>
    %cst_150 = arith.constant dense<0.000000e+00> : vector<2x32xf32>
    %454 = tpu.matmul %451, %281, %cst_150 {dimension_numbers = #tpu.dot_dimension_numbers<[1], [0], [0], [1], [0, 0, 1, 1], [], []>} : vector<2x32xf32>, vector<32x32xf32>, vector<2x32xf32> -> vector<2x32xf32>
    %455 = vector.extract_strided_slice %261 {offsets = [12, 0], sizes = [2, 32], strides = [1, 1]} : vector<16x32xf32> to vector<2x32xf32>
    %456 = arith.addf %455, %452 : vector<2x32xf32>
    %457 = arith.negf %456 : vector<2x32xf32>
    %458 = math.exp %457 : vector<2x32xf32>
    %cst_151 = arith.constant 1.000000e+00 : f32
    %459 = vector.broadcast %cst_151 : f32 to vector<2x32xf32>
    %460 = arith.addf %459, %458 : vector<2x32xf32>
    %461 = arith.divf %459, %460 : vector<2x32xf32>
    %462 = vector.extract_strided_slice %268 {offsets = [12, 0], sizes = [2, 32], strides = [1, 1]} : vector<16x32xf32> to vector<2x32xf32>
    %463 = arith.addf %462, %453 : vector<2x32xf32>
    %464 = arith.negf %463 : vector<2x32xf32>
    %465 = math.exp %464 : vector<2x32xf32>
    %cst_152 = arith.constant 1.000000e+00 : f32
    %466 = vector.broadcast %cst_152 : f32 to vector<2x32xf32>
    %467 = arith.addf %466, %465 : vector<2x32xf32>
    %468 = arith.divf %466, %467 : vector<2x32xf32>
    %469 = vector.extract_strided_slice %275 {offsets = [12, 0], sizes = [2, 32], strides = [1, 1]} : vector<16x32xf32> to vector<2x32xf32>
    %470 = vector.broadcast %282 : vector<1x32xf32> to vector<2x32xf32>
    %471 = arith.addf %454, %470 : vector<2x32xf32>
    %472 = arith.mulf %461, %471 : vector<2x32xf32>
    %473 = arith.addf %469, %472 : vector<2x32xf32>
    %474 = math.tanh %473 : vector<2x32xf32>
    %cst_153 = arith.constant 1.000000e+00 : f32
    %475 = vector.broadcast %cst_153 : f32 to vector<2x32xf32>
    %476 = arith.subf %475, %468 : vector<2x32xf32>
    %477 = arith.mulf %476, %474 : vector<2x32xf32>
    %478 = arith.mulf %468, %451 : vector<2x32xf32>
    %479 = arith.addf %477, %478 : vector<2x32xf32>
    %cst_154 = arith.constant dense<0.000000e+00> : vector<2x32xf32>
    %480 = tpu.matmul %479, %277, %cst_154 {dimension_numbers = #tpu.dot_dimension_numbers<[1], [0], [0], [1], [0, 0, 1, 1], [], []>} : vector<2x32xf32>, vector<32x32xf32>, vector<2x32xf32> -> vector<2x32xf32>
    %cst_155 = arith.constant dense<0.000000e+00> : vector<2x32xf32>
    %481 = tpu.matmul %479, %279, %cst_155 {dimension_numbers = #tpu.dot_dimension_numbers<[1], [0], [0], [1], [0, 0, 1, 1], [], []>} : vector<2x32xf32>, vector<32x32xf32>, vector<2x32xf32> -> vector<2x32xf32>
    %cst_156 = arith.constant dense<0.000000e+00> : vector<2x32xf32>
    %482 = tpu.matmul %479, %281, %cst_156 {dimension_numbers = #tpu.dot_dimension_numbers<[1], [0], [0], [1], [0, 0, 1, 1], [], []>} : vector<2x32xf32>, vector<32x32xf32>, vector<2x32xf32> -> vector<2x32xf32>
    %483 = vector.extract_strided_slice %261 {offsets = [14, 0], sizes = [2, 32], strides = [1, 1]} : vector<16x32xf32> to vector<2x32xf32>
    %484 = arith.addf %483, %480 : vector<2x32xf32>
    %485 = arith.negf %484 : vector<2x32xf32>
    %486 = math.exp %485 : vector<2x32xf32>
    %cst_157 = arith.constant 1.000000e+00 : f32
    %487 = vector.broadcast %cst_157 : f32 to vector<2x32xf32>
    %488 = arith.addf %487, %486 : vector<2x32xf32>
    %489 = arith.divf %487, %488 : vector<2x32xf32>
    %490 = vector.extract_strided_slice %268 {offsets = [14, 0], sizes = [2, 32], strides = [1, 1]} : vector<16x32xf32> to vector<2x32xf32>
    %491 = arith.addf %490, %481 : vector<2x32xf32>
    %492 = arith.negf %491 : vector<2x32xf32>
    %493 = math.exp %492 : vector<2x32xf32>
    %cst_158 = arith.constant 1.000000e+00 : f32
    %494 = vector.broadcast %cst_158 : f32 to vector<2x32xf32>
    %495 = arith.addf %494, %493 : vector<2x32xf32>
    %496 = arith.divf %494, %495 : vector<2x32xf32>
    %497 = vector.extract_strided_slice %275 {offsets = [14, 0], sizes = [2, 32], strides = [1, 1]} : vector<16x32xf32> to vector<2x32xf32>
    %498 = vector.broadcast %282 : vector<1x32xf32> to vector<2x32xf32>
    %499 = arith.addf %482, %498 : vector<2x32xf32>
    %500 = arith.mulf %489, %499 : vector<2x32xf32>
    %501 = arith.addf %497, %500 : vector<2x32xf32>
    %502 = math.tanh %501 : vector<2x32xf32>
    %cst_159 = arith.constant 1.000000e+00 : f32
    %503 = vector.broadcast %cst_159 : f32 to vector<2x32xf32>
    %504 = arith.subf %503, %496 : vector<2x32xf32>
    %505 = arith.mulf %504, %502 : vector<2x32xf32>
    %506 = arith.mulf %496, %479 : vector<2x32xf32>
    %507 = arith.addf %505, %506 : vector<2x32xf32>
    %508 = arith.addf %253, %507 : vector<2x32xf32>
    %cst_160 = arith.constant 5.000000e-01 : f32
    %509 = vector.broadcast %cst_160 : f32 to vector<2x32xf32>
    %510 = arith.mulf %508, %509 : vector<2x32xf32>
    %c0_161 = arith.constant 0 : index
    %c0_162 = arith.constant 0 : index
    %511 = vector.load %arg10[%c0_161, %c0_162] : memref<32x16xf32, #tpu.memory_space<vmem>>, vector<32x16xf32>
    %cst_163 = arith.constant dense<0.000000e+00> : vector<2x16xf32>
    %512 = tpu.matmul %510, %511, %cst_163 {dimension_numbers = #tpu.dot_dimension_numbers<[1], [0], [0], [1], [0, 0, 1, 1], [], []>} : vector<2x32xf32>, vector<32x16xf32>, vector<2x16xf32> -> vector<2x16xf32>
    %c0_164 = arith.constant 0 : index
    %c0_165 = arith.constant 0 : index
    %513 = vector.load %arg1[%c0_164, %c0_165] : memref<2x5xf32, #tpu.memory_space<vmem>>, vector<2x5xf32>
    %c0_166 = arith.constant 0 : index
    %c0_167 = arith.constant 0 : index
    %514 = vector.load %arg11[%c0_166, %c0_167] : memref<5x16xf32, #tpu.memory_space<vmem>>, vector<5x16xf32>
    %cst_168 = arith.constant dense<0.000000e+00> : vector<2x16xf32>
    %515 = tpu.matmul %513, %514, %cst_168 {dimension_numbers = #tpu.dot_dimension_numbers<[1], [0], [0], [1], [0, 0, 1, 1], [], []>} : vector<2x5xf32>, vector<5x16xf32>, vector<2x16xf32> -> vector<2x16xf32>
    %516 = arith.addf %512, %515 : vector<2x16xf32>
    %c0_169 = arith.constant 0 : index
    %c0_170 = arith.constant 0 : index
    %517 = vector.load %arg12[%c0_169, %c0_170] : memref<1x16xf32, #tpu.memory_space<vmem>>, vector<1x16xf32>
    %518 = vector.broadcast %517 : vector<1x16xf32> to vector<2x16xf32>
    %519 = arith.addf %516, %518 : vector<2x16xf32>
    %cst_171 = arith.constant 0.000000e+00 : f32
    %520 = vector.broadcast %cst_171 : f32 to vector<2x16xf32>
    %521 = arith.maximumf %519, %520 : vector<2x16xf32>
    %c0_172 = arith.constant 0 : index
    %c0_173 = arith.constant 0 : index
    %522 = vector.load %arg13[%c0_172, %c0_173] : memref<16x1xf32, #tpu.memory_space<vmem>>, vector<16x1xf32>
    %cst_174 = arith.constant dense<0.000000e+00> : vector<2x1xf32>
    %523 = tpu.matmul %521, %522, %cst_174 {dimension_numbers = #tpu.dot_dimension_numbers<[1], [0], [0], [1], [0, 0, 1, 1], [], []>} : vector<2x16xf32>, vector<16x1xf32>, vector<2x1xf32> -> vector<2x1xf32>
    %c0_175 = arith.constant 0 : index
    %c0_176 = arith.constant 0 : index
    %524 = vector.load %arg14[%c0_175, %c0_176] : memref<1x1xf32, #tpu.memory_space<vmem>>, vector<1x1xf32>
    %525 = vector.broadcast %524 : vector<1x1xf32> to vector<2x1xf32>
    %526 = arith.addf %523, %525 : vector<2x1xf32>
    %c0_177 = arith.constant 0 : index
    %c0_178 = arith.constant 0 : index
    %527 = vector.load %arg15[%c0_177, %c0_178] : memref<2x1xf32, #tpu.memory_space<vmem>>, vector<2x1xf32>
    tpu.vector_store %arg15[%c0_177, %c0_178], %526 {strides = array<i32>} : memref<2x1xf32, #tpu.memory_space<vmem>>, vector<2x1xf32>,
    return
  }
}

</mosaic_0001>

<llo_original>
// kernel: tpu_custom_call.1
$region0: #{tpu_custom_call.1}
  #allocation0 [shape = 'u32[]', space=smem, size = 0x4, offset = 0x4, fixed_abs, tag = 'smem constant byte address 0x4 - core index']
  #allocation1 [shape = 'u32[144,128]{1,0:T(1,128)}', space=vmem, size = 0x12000, scoped, tag = 'internal scratch']
  #allocation2 [shape = 'f32[1,1]{1,0:T(1,128)S(1)}', space=vmem, size = 0x200, scoped, tag = 'scoped memory for tpu_custom_call.1']
  %s0 = inlined_call_operand.vmem [shape: f32[16,4], index: 0, kind: input, shape index: {}]
  %s1 = inlined_call_operand.hbm [shape: f32[2,5], index: 1, kind: input, shape index: {}]
  %s2 = inlined_call_operand.hbm [shape: f32[3,4,32], index: 2, kind: input, shape index: {}]
  %s3 = inlined_call_operand.hbm [shape: f32[3,1,32], index: 3, kind: input, shape index: {}]
  %s4 = inlined_call_operand.hbm [shape: f32[3,32,32], index: 4, kind: input, shape index: {}]
  %s5 = inlined_call_operand.vmem [shape: f32[1,32], index: 5, kind: input, shape index: {}]
  %s6 = inlined_call_operand.vmem [shape: f32[3,32,32], index: 6, kind: input, shape index: {}]
  %s7 = inlined_call_operand.hbm [shape: f32[3,1,32], index: 7, kind: input, shape index: {}]
  %s8 = inlined_call_operand.hbm [shape: f32[3,32,32], index: 8, kind: input, shape index: {}]
  %s9 = inlined_call_operand.hbm [shape: f32[1,32], index: 9, kind: input, shape index: {}]
  %s10 = inlined_call_operand.vmem [shape: f32[32,16], index: 10, kind: input, shape index: {}]
  %s11 = inlined_call_operand.vmem [shape: f32[5,16], index: 11, kind: input, shape index: {}]
  %s12 = inlined_call_operand.vmem [shape: f32[1,16], index: 12, kind: input, shape index: {}]
  %s13 = inlined_call_operand.vmem [shape: f32[16,1], index: 13, kind: input, shape index: {}]
  %s14 = inlined_call_operand.<no memory space> [shape: f32[1,1], index: 14, kind: input, shape index: {}]
  %s15 = inlined_call_operand.vmem [shape: f32[2,1], index: 15, kind: output, shape index: {}]
  %s16 = sld [smem:[#allocation0]]
  $region98: #{tpu_custom_call.1} parent=0
    _
  %s18 = ssub.s32 1, %s16
  %s19 = scalar_select 0, %s18, %s16
  %v20 = vstv %s14
  %21 = vst [vmem:[#allocation2] sm:$0x1] %v20
  $region1: #{tpu_custom_call.1} parent=0
    #allocation3 [shape = 'u8[1024]{0}', space=vmem, size = 0x400, scoped, tag = 'input window, operand 1, single buffered']
    #allocation4 [shape = 's32[1]{0}', space=sflag, size = 0x4, scoped, tag = 'scoped memory for tpu_custom_call.1']
    #allocation5 [shape = 'u8[6144]{0}', space=vmem, size = 0x1800, scoped, tag = 'input window, operand 2, single buffered']
    #allocation6 [shape = 's32[1]{0}', space=sflag, size = 0x4, scoped, tag = 'scoped memory for tpu_custom_call.1']
    #allocation7 [shape = 'u8[1536]{0}', space=vmem, size = 0x800, scoped, tag = 'input window, operand 3, single buffered']
    #allocation8 [shape = 'u8[49152]{0}', space=vmem, size = 0xc000, scoped, tag = 'input window, operand 4, single buffered']
    #allocation9 [shape = 's32[1]{0}', space=sflag, size = 0x4, scoped, tag = 'scoped memory for tpu_custom_call.1']
    #allocation10 [shape = 'u8[1536]{0}', space=vmem, size = 0x800, scoped, tag = 'input window, operand 7, single buffered']
    #allocation11 [shape = 'u8[49152]{0}', space=vmem, size = 0xc000, scoped, tag = 'input window, operand 8, single buffered']
    #allocation12 [shape = 's32[1]{0}', space=sflag, size = 0x4, scoped, tag = 'scoped memory for tpu_custom_call.1']
    #allocation13 [shape = 'u8[512]{0}', space=vmem, size = 0x400, scoped, tag = 'input window, operand 9, single buffered']
    %22 = vsyncpa [#allocation4], 0
    %23 = vsyncpa [#allocation6], 0
    %24 = vsyncpa [#allocation9], 0
    %25 = vsyncpa [#allocation12], 0
    // Predicated region
    $region2: #{tpu_custom_call.1} parent=1 // pred_check
      _
    $region3: #{tpu_custom_call.1} parent=1 // pred_check_branch
      %27 = sbr.rel (0) target = $region5
    $region4: #{tpu_custom_call.1} parent=1 // pred_region
      _
    $region5: #{tpu_custom_call.1} parent=1 // pred_fallthru
      _
    // Predicated region
    $region6: #{tpu_custom_call.1} parent=1 // pred_check
      _
    $region7: #{tpu_custom_call.1} parent=1 // pred_check_branch
      %29 = sbr.rel (0) target = $region9
    $region8: #{tpu_custom_call.1} parent=1 // pred_region
      %s31 = ssub.s32 32, 32
      %32 = vsyncadd [#allocation4], %s31
      %s34 = sshll.u32 [#allocation3], 4
      %s35 = int_to_ptr.vmem [resolvable:$true] %s34
      %37 = dma.hbm_to_vmem [thread:$0]  %s1, 32, %s35, [#allocation4]
    $region9: #{tpu_custom_call.1} parent=1 // pred_fallthru
      _
    // Predicated region
    $region10: #{tpu_custom_call.1} parent=1 // pred_check
      _
    $region11: #{tpu_custom_call.1} parent=1 // pred_check_branch
      %39 = sbr.rel (0) target = $region13
    $region12: #{tpu_custom_call.1} parent=1 // pred_region
      %s41 = ssub.s32 192, 192
      %42 = vsyncadd [#allocation6], %s41
      %s43 = sshll.u32 [#allocation5], 4
      %s44 = int_to_ptr.vmem [resolvable:$true] %s43
      %49 = dma.hbm_to_vmem [thread:$0]  %s2, 192, %s44, [#allocation6], 64, 64, 4
    $region13: #{tpu_custom_call.1} parent=1 // pred_fallthru
      _
    // Predicated region
    $region14: #{tpu_custom_call.1} parent=1 // pred_check
      _
    $region15: #{tpu_custom_call.1} parent=1 // pred_check_branch
      %51 = sbr.rel (0) target = $region17
    $region16: #{tpu_custom_call.1} parent=1 // pred_region
      %s53 = ssub.s32 48, 48
      %54 = vsyncadd [#allocation6], %s53
      %s55 = sshll.u32 [#allocation7], 4
      %s56 = int_to_ptr.vmem [resolvable:$true] %s55
      %61 = dma.hbm_to_vmem [thread:$0]  %s3, 48, %s56, [#allocation6], 16, 16, 1
    $region17: #{tpu_custom_call.1} parent=1 // pred_fallthru
      _
    // Predicated region
    $region18: #{tpu_custom_call.1} parent=1 // pred_check
      _
    $region19: #{tpu_custom_call.1} parent=1 // pred_check_branch
      %63 = sbr.rel (0) target = $region21
    $region20: #{tpu_custom_call.1} parent=1 // pred_region
      %s65 = ssub.s32 1536, 1536
      %66 = vsyncadd [#allocation9], %s65
      %s67 = sshll.u32 [#allocation8], 4
      %s68 = int_to_ptr.vmem [resolvable:$true] %s67
      %73 = dma.hbm_to_vmem [thread:$0]  %s4, 1536, %s68, [#allocation9], 128, 128, 8
    $region21: #{tpu_custom_call.1} parent=1 // pred_fallthru
      _
    // Predicated region
    $region22: #{tpu_custom_call.1} parent=1 // pred_check
      _
    $region23: #{tpu_custom_call.1} parent=1 // pred_check_branch
      %75 = sbr.rel (0) target = $region25
    $region24: #{tpu_custom_call.1} parent=1 // pred_region
      _
    $region25: #{tpu_custom_call.1} parent=1 // pred_fallthru
      _
    // Predicated region
    $region26: #{tpu_custom_call.1} parent=1 // pred_check
      _
    $region27: #{tpu_custom_call.1} parent=1 // pred_check_branch
      %77 = sbr.rel (0) target = $region29
    $region28: #{tpu_custom_call.1} parent=1 // pred_region
      _
    $region29: #{tpu_custom_call.1} parent=1 // pred_fallthru
      _
    // Predicated region
    $region30: #{tpu_custom_call.1} parent=1 // pred_check
      _
    $region31: #{tpu_custom_call.1} parent=1 // pred_check_branch
      %79 = sbr.rel (0) target = $region33
    $region32: #{tpu_custom_call.1} parent=1 // pred_region
      %s81 = ssub.s32 48, 48
      %82 = vsyncadd [#allocation9], %s81
      %s83 = sshll.u32 [#allocation10], 4
      %s84 = int_to_ptr.vmem [resolvable:$true] %s83
      %89 = dma.hbm_to_vmem [thread:$0]  %s7, 48, %s84, [#allocation9], 16, 16, 1
    $region33: #{tpu_custom_call.1} parent=1 // pred_fallthru
      _
    // Predicated region
    $region34: #{tpu_custom_call.1} parent=1 // pred_check
      _
    $region35: #{tpu_custom_call.1} parent=1 // pred_check_branch
      %91 = sbr.rel (0) target = $region37
    $region36: #{tpu_custom_call.1} parent=1 // pred_region
      %s93 = ssub.s32 1536, 1536
      %94 = vsyncadd [#allocation12], %s93
      %s95 = sshll.u32 [#allocation11], 4
      %s96 = int_to_ptr.vmem [resolvable:$true] %s95
      %101 = dma.hbm_to_vmem [thread:$0]  %s8, 1536, %s96, [#allocation12], 128, 128, 8
    $region37: #{tpu_custom_call.1} parent=1 // pred_fallthru
      _
    // Predicated region
    $region38: #{tpu_custom_call.1} parent=1 // pred_check
      _
    $region39: #{tpu_custom_call.1} parent=1 // pred_check_branch
      %103 = sbr.rel (0) target = $region41
    $region40: #{tpu_custom_call.1} parent=1 // pred_region
      %s105 = ssub.s32 16, 16
      %106 = vsyncadd [#allocation12], %s105
      %s108 = sshll.u32 [#allocation13], 4
      %s109 = int_to_ptr.vmem [resolvable:$true] %s108
      %111 = dma.hbm_to_vmem [thread:$0]  %s9, 16, %s109, [#allocation12]
    $region41: #{tpu_custom_call.1} parent=1 // pred_fallthru
      _
    // Predicated region
    $region42: #{tpu_custom_call.1} parent=1 // pred_check
      _
    $region43: #{tpu_custom_call.1} parent=1 // pred_check_branch
      %113 = sbr.rel (0) target = $region45
    $region44: #{tpu_custom_call.1} parent=1 // pred_region
      _
    $region45: #{tpu_custom_call.1} parent=1 // pred_fallthru
      _
    // Predicated region
    $region46: #{tpu_custom_call.1} parent=1 // pred_check
      _
    $region47: #{tpu_custom_call.1} parent=1 // pred_check_branch
      %115 = sbr.rel (0) target = $region49
    $region48: #{tpu_custom_call.1} parent=1 // pred_region
      _
    $region49: #{tpu_custom_call.1} parent=1 // pred_fallthru
      _
    // Predicated region
    $region50: #{tpu_custom_call.1} parent=1 // pred_check
      _
    $region51: #{tpu_custom_call.1} parent=1 // pred_check_branch
      %117 = sbr.rel (0) target = $region53
    $region52: #{tpu_custom_call.1} parent=1 // pred_region
      _
    $region53: #{tpu_custom_call.1} parent=1 // pred_fallthru
      _
    // Predicated region
    $region54: #{tpu_custom_call.1} parent=1 // pred_check
      _
    $region55: #{tpu_custom_call.1} parent=1 // pred_check_branch
      %119 = sbr.rel (0) target = $region57
    $region56: #{tpu_custom_call.1} parent=1 // pred_region
      _
    $region57: #{tpu_custom_call.1} parent=1 // pred_fallthru
      _
    // Predicated region
    $region58: #{tpu_custom_call.1} parent=1 // pred_check
      _
    $region59: #{tpu_custom_call.1} parent=1 // pred_check_branch
      %121 = sbr.rel (0) target = $region61
    $region60: #{tpu_custom_call.1} parent=1 // pred_region
      _
    $region61: #{tpu_custom_call.1} parent=1 // pred_fallthru
      _
    // Predicated region
    $region62: #{tpu_custom_call.1} parent=1 // pred_check
      _
    $region63: #{tpu_custom_call.1} parent=1 // pred_check_branch
      %123 = sbr.rel (0) target = $region65
    $region64: #{tpu_custom_call.1} parent=1 // pred_region
      %124 = dma.done [#allocation4], 32
    $region65: #{tpu_custom_call.1} parent=1 // pred_fallthru
      _
    // Predicated region
    $region66: #{tpu_custom_call.1} parent=1 // pred_check
      _
    $region67: #{tpu_custom_call.1} parent=1 // pred_check_branch
      %126 = sbr.rel (0) target = $region69
    $region68: #{tpu_custom_call.1} parent=1 // pred_region
      %127 = dma.done [#allocation6], 192
    $region69: #{tpu_custom_call.1} parent=1 // pred_fallthru
      _
    // Predicated region
    $region70: #{tpu_custom_call.1} parent=1 // pred_check
      _
    $region71: #{tpu_custom_call.1} parent=1 // pred_check_branch
      %129 = sbr.rel (0) target = $region73
    $region72: #{tpu_custom_call.1} parent=1 // pred_region
      %130 = dma.done [#allocation6], 48
    $region73: #{tpu_custom_call.1} parent=1 // pred_fallthru
      _
    // Predicated region
    $region74: #{tpu_custom_call.1} parent=1 // pred_check
      _
    $region75: #{tpu_custom_call.1} parent=1 // pred_check_branch
      %132 = sbr.rel (0) target = $region77
    $region76: #{tpu_custom_call.1} parent=1 // pred_region
      %133 = dma.done [#allocation9], 1536
    $region77: #{tpu_custom_call.1} parent=1 // pred_fallthru
      _
    // Predicated region
    $region78: #{tpu_custom_call.1} parent=1 // pred_check
      _
    $region79: #{tpu_custom_call.1} parent=1 // pred_check_branch
      %135 = sbr.rel (0) target = $region81
    $region80: #{tpu_custom_call.1} parent=1 // pred_region
      %136 = dma.done [#allocation9], 48
    $region81: #{tpu_custom_call.1} parent=1 // pred_fallthru
      _
    // Predicated region
    $region82: #{tpu_custom_call.1} parent=1 // pred_check
      _
    $region83: #{tpu_custom_call.1} parent=1 // pred_check_branch
      %138 = sbr.rel (0) target = $region85
    $region84: #{tpu_custom_call.1} parent=1 // pred_region
      %139 = dma.done [#allocation12], 1536
    $region85: #{tpu_custom_call.1} parent=1 // pred_fallthru
      _
    // Predicated region
    $region86: #{tpu_custom_call.1} parent=1 // pred_check
      _
    $region87: #{tpu_custom_call.1} parent=1 // pred_check_branch
      %141 = sbr.rel (0) target = $region89
    $region88: #{tpu_custom_call.1} parent=1 // pred_region
      %142 = dma.done [#allocation12], 16
    $region89: #{tpu_custom_call.1} parent=1 // pred_fallthru
      _
    %v143 = vld [vmem:[%s0] sm:$0xff]
    %v144 = vld [vmem:[%s0 + $0x8] sm:$0xff]
    %v145 = vld [vmem:[#allocation5] sm:$0xf]
    %v146 = vld [vmem:[#allocation7] sm:$0x1]
    %v148 = vlaneseq
    %v149 = vshrl.u32 %v148, 7
    %v150 = vsub.s32 0, %v149
    %v151 = vrot.slane %v146, %v150
    %vm153 = vcmask 31744
    %v155 = vsel %vm153, %v143, 0
    %v158 = vsel %vm153, %v144, 0
    %vm160 = vcmask 1043456
    %v162 = vsel %vm160, %v145, 0
    %164 = vmatprep.subr.mxu0 0.0
    %165 = vmatpush1.msra.mxu0 0.0
    %166 = vmatprep.subr.mxu0 0.0
    %167 = vmatpush1.msra.mxu0 0.0
    %168 = vmatprep.subr.mxu0 0.0
    %169 = vmatpush1.msra.mxu0 0.0
    %170 = vmatprep.subr.mxu0 0.0
    %171 = vmatpush1.msra.mxu0 0.0
    %172 = vmatprep.subr.mxu0 0.0
    %173 = vmatpush1.msra.mxu0 0.0
    %174 = vmatprep.subr.mxu0 0.0
    %175 = vmatpush1.msra.mxu0 0.0
    %176 = vmatprep.subr.mxu0 0.0
    %177 = vmatpush1.msra.mxu0 0.0
    %178 = vmatprep.subr.mxu0 0.0
    %179 = vmatpush1.msra.mxu0 0.0
    %180 = vmatprep.subr.mxu0 0.0
    %181 = vmatpush1.msra.mxu0 0.0
    %182 = vmatprep.subr.mxu0 0.0
    %183 = vmatpush1.msra.mxu0 0.0
    %184 = vmatprep.subr.mxu0 0.0
    %185 = vmatpush1.msra.mxu0 0.0
    %186 = vmatprep.subr.mxu0 0.0
    %187 = vmatpush1.msra.mxu0 0.0
    %188 = vmatprep.subr.mxu0 0.0
    %189 = vmatpush1.msra.mxu0 0.0
    %190 = vmatprep.subr.mxu0 0.0
    %191 = vmatpush1.msra.mxu0 0.0
    %192 = vmatprep.subr.mxu0 0.0
    %193 = vmatpush1.msra.mxu0 0.0
    %194 = vmatprep.subr.mxu0 0.0
    %195 = vmatpush1.msra.mxu0 %v162
    %196 = vmatprep.subr.mxu0 0.0
    %197 = vmatpush2.msra.mxu0 0.0
    %198 = vmatprep.subr.mxu0 0.0
    %199 = vmatpush2.msra.mxu0 0.0
    %200 = vmatprep.subr.mxu0 0.0
    %201 = vmatpush2.msra.mxu0 0.0
    %202 = vmatprep.subr.mxu0 0.0
    %203 = vmatpush2.msra.mxu0 0.0
    %204 = vmatprep.subr.mxu0 0.0
    %205 = vmatpush2.msra.mxu0 0.0
    %206 = vmatprep.subr.mxu0 0.0
    %207 = vmatpush2.msra.mxu0 0.0
    %208 = vmatprep.subr.mxu0 0.0
    %209 = vmatpush2.msra.mxu0 0.0
    %210 = vmatprep.subr.mxu0 0.0
    %211 = vmatpush2.msra.mxu0 0.0
    %212 = vmatprep.subr.mxu0 0.0
    %213 = vmatpush2.msra.mxu0 0.0
    %214 = vmatprep.subr.mxu0 0.0
    %215 = vmatpush2.msra.mxu0 0.0
    %216 = vmatprep.subr.mxu0 0.0
    %217 = vmatpush2.msra.mxu0 0.0
    %218 = vmatprep.subr.mxu0 0.0
    %219 = vmatpush2.msra.mxu0 0.0
    %220 = vmatprep.subr.mxu0 0.0
    %221 = vmatpush2.msra.mxu0 0.0
    %222 = vmatprep.subr.mxu0 0.0
    %223 = vmatpush2.msra.mxu0 0.0
    %224 = vmatprep.subr.mxu0 0.0
    %225 = vmatpush2.msra.mxu0 0.0
    %226 = vmatprep.subr.mxu0 0.0
    %227 = vmatpush2.msra.mxu0 0.0
    %228 = vmatprep.mubr.f32.mxu0 0.0
    %229 = vmatmul.mubr.f32.gmra.mxu0 %v155
    %v230 = vpop.f32.mrf.mxu0
    %v231 = vadd.f32 %v151, %v230
    %v232 = vpop.f32.mrf.mxu0
    %233 = vmatprep.mubr.f32.mxu0 0.0
    %234 = vmatmul.mubr.f32.gmra.mxu0 %v158
    %v235 = vpop.f32.mrf.mxu0
    %v236 = vadd.f32 %v151, %v235
    %v237 = vpop.f32.mrf.mxu0
    %238 = vdwg.mxu0
    %s239 = scalar_lea.vmem [#allocation5], 4
    %v240 = vld [vmem:[%s239] sm:$0xf]
    %s241 = scalar_lea.vmem [#allocation7], 1
    %v242 = vld [vmem:[%s241] sm:$0x1]
    %v244 = vlaneseq
    %v245 = vshrl.u32 %v244, 7
    %v246 = vsub.s32 0, %v245
    %v247 = vrot.slane %v242, %v246
    %v250 = vsel %vm160, %v240, 0
    %252 = vmatprep.subr.mxu0 0.0
    %253 = vmatpush1.msra.mxu0 0.0
    %254 = vmatprep.subr.mxu0 0.0
    %255 = vmatpush1.msra.mxu0 0.0
    %256 = vmatprep.subr.mxu0 0.0
    %257 = vmatpush1.msra.mxu0 0.0
    %258 = vmatprep.subr.mxu0 0.0
    %259 = vmatpush1.msra.mxu0 0.0
    %260 = vmatprep.subr.mxu0 0.0
    %261 = vmatpush1.msra.mxu0 0.0
    %262 = vmatprep.subr.mxu0 0.0
    %263 = vmatpush1.msra.mxu0 0.0
    %264 = vmatprep.subr.mxu0 0.0
    %265 = vmatpush1.msra.mxu0 0.0
    %266 = vmatprep.subr.mxu0 0.0
    %267 = vmatpush1.msra.mxu0 0.0
    %268 = vmatprep.subr.mxu0 0.0
    %269 = vmatpush1.msra.mxu0 0.0
    %270 = vmatprep.subr.mxu0 0.0
    %271 = vmatpush1.msra.mxu0 0.0
    %272 = vmatprep.subr.mxu0 0.0
    %273 = vmatpush1.msra.mxu0 0.0
    %274 = vmatprep.subr.mxu0 0.0
    %275 = vmatpush1.msra.mxu0 0.0
    %276 = vmatprep.subr.mxu0 0.0
    %277 = vmatpush1.msra.mxu0 0.0
    %278 = vmatprep.subr.mxu0 0.0
    %279 = vmatpush1.msra.mxu0 0.0
    %280 = vmatprep.subr.mxu0 0.0
    %281 = vmatpush1.msra.mxu0 0.0
    %282 = vmatprep.subr.mxu0 0.0
    %283 = vmatpush1.msra.mxu0 %v250
    %284 = vmatprep.subr.mxu0 0.0
    %285 = vmatpush2.msra.mxu0 0.0
    %286 = vmatprep.subr.mxu0 0.0
    %287 = vmatpush2.msra.mxu0 0.0
    %288 = vmatprep.subr.mxu0 0.0
    %289 = vmatpush2.msra.mxu0 0.0
    %290 = vmatprep.subr.mxu0 0.0
    %291 = vmatpush2.msra.mxu0 0.0
    %292 = vmatprep.subr.mxu0 0.0
    %293 = vmatpush2.msra.mxu0 0.0
    %294 = vmatprep.subr.mxu0 0.0
    %295 = vmatpush2.msra.mxu0 0.0
    %296 = vmatprep.subr.mxu0 0.0
    %297 = vmatpush2.msra.mxu0 0.0
    %298 = vmatprep.subr.mxu0 0.0
    %299 = vmatpush2.msra.mxu0 0.0
    %300 = vmatprep.subr.mxu0 0.0
    %301 = vmatpush2.msra.mxu0 0.0
    %302 = vmatprep.subr.mxu0 0.0
    %303 = vmatpush2.msra.mxu0 0.0
    %304 = vmatprep.subr.mxu0 0.0
    %305 = vmatpush2.msra.mxu0 0.0
    %306 = vmatprep.subr.mxu0 0.0
    %307 = vmatpush2.msra.mxu0 0.0
    %308 = vmatprep.subr.mxu0 0.0
    %309 = vmatpush2.msra.mxu0 0.0
    %310 = vmatprep.subr.mxu0 0.0
    %311 = vmatpush2.msra.mxu0 0.0
    %312 = vmatprep.subr.mxu0 0.0
    %313 = vmatpush2.msra.mxu0 0.0
    %314 = vmatprep.subr.mxu0 0.0
    %315 = vmatpush2.msra.mxu0 0.0
    %316 = vmatprep.mubr.f32.mxu0 0.0
    %317 = vmatmul.mubr.f32.gmra.mxu0 %v155
    %v318 = vpop.f32.mrf.mxu0
    %v319 = vadd.f32 %v247, %v318
    %v320 = vpop.f32.mrf.mxu0
    %321 = vmatprep.mubr.f32.mxu0 0.0
    %322 = vmatmul.mubr.f32.gmra.mxu0 %v158
    %v323 = vpop.f32.mrf.mxu0
    %v324 = vadd.f32 %v247, %v323
    %v325 = vpop.f32.mrf.mxu0
    %326 = vdwg.mxu0
    %s327 = scalar_lea.vmem [#allocation5], 8
    %v328 = vld [vmem:[%s327] sm:$0xf]
    %s329 = scalar_lea.vmem [#allocation7], 2
    %v330 = vld [vmem:[%s329] sm:$0x1]
    %v332 = vlaneseq
    %v333 = vshrl.u32 %v332, 7
    %v334 = vsub.s32 0, %v333
    %v335 = vrot.slane %v330, %v334
    %v338 = vsel %vm160, %v328, 0
    %340 = vmatprep.subr.mxu0 0.0
    %341 = vmatpush1.msra.mxu0 0.0
    %342 = vmatprep.subr.mxu0 0.0
    %343 = vmatpush1.msra.mxu0 0.0
    %344 = vmatprep.subr.mxu0 0.0
    %345 = vmatpush1.msra.mxu0 0.0
    %346 = vmatprep.subr.mxu0 0.0
    %347 = vmatpush1.msra.mxu0 0.0
    %348 = vmatprep.subr.mxu0 0.0
    %349 = vmatpush1.msra.mxu0 0.0
    %350 = vmatprep.subr.mxu0 0.0
    %351 = vmatpush1.msra.mxu0 0.0
    %352 = vmatprep.subr.mxu0 0.0
    %353 = vmatpush1.msra.mxu0 0.0
    %354 = vmatprep.subr.mxu0 0.0
    %355 = vmatpush1.msra.mxu0 0.0
    %356 = vmatprep.subr.mxu0 0.0
    %357 = vmatpush1.msra.mxu0 0.0
    %358 = vmatprep.subr.mxu0 0.0
    %359 = vmatpush1.msra.mxu0 0.0
    %360 = vmatprep.subr.mxu0 0.0
    %361 = vmatpush1.msra.mxu0 0.0
    %362 = vmatprep.subr.mxu0 0.0
    %363 = vmatpush1.msra.mxu0 0.0
    %364 = vmatprep.subr.mxu0 0.0
    %365 = vmatpush1.msra.mxu0 0.0
    %366 = vmatprep.subr.mxu0 0.0
    %367 = vmatpush1.msra.mxu0 0.0
    %368 = vmatprep.subr.mxu0 0.0
    %369 = vmatpush1.msra.mxu0 0.0
    %370 = vmatprep.subr.mxu0 0.0
    %371 = vmatpush1.msra.mxu0 %v338
    %372 = vmatprep.subr.mxu0 0.0
    %373 = vmatpush2.msra.mxu0 0.0
    %374 = vmatprep.subr.mxu0 0.0
    %375 = vmatpush2.msra.mxu0 0.0
    %376 = vmatprep.subr.mxu0 0.0
    %377 = vmatpush2.msra.mxu0 0.0
    %378 = vmatprep.subr.mxu0 0.0
    %379 = vmatpush2.msra.mxu0 0.0
    %380 = vmatprep.subr.mxu0 0.0
    %381 = vmatpush2.msra.mxu0 0.0
    %382 = vmatprep.subr.mxu0 0.0
    %383 = vmatpush2.msra.mxu0 0.0
    %384 = vmatprep.subr.mxu0 0.0
    %385 = vmatpush2.msra.mxu0 0.0
    %386 = vmatprep.subr.mxu0 0.0
    %387 = vmatpush2.msra.mxu0 0.0
    %388 = vmatprep.subr.mxu0 0.0
    %389 = vmatpush2.msra.mxu0 0.0
    %390 = vmatprep.subr.mxu0 0.0
    %391 = vmatpush2.msra.mxu0 0.0
    %392 = vmatprep.subr.mxu0 0.0
    %393 = vmatpush2.msra.mxu0 0.0
    %394 = vmatprep.subr.mxu0 0.0
    %395 = vmatpush2.msra.mxu0 0.0
    %396 = vmatprep.subr.mxu0 0.0
    %397 = vmatpush2.msra.mxu0 0.0
    %398 = vmatprep.subr.mxu0 0.0
    %399 = vmatpush2.msra.mxu0 0.0
    %400 = vmatprep.subr.mxu0 0.0
    %401 = vmatpush2.msra.mxu0 0.0
    %402 = vmatprep.subr.mxu0 0.0
    %403 = vmatpush2.msra.mxu0 0.0
    %404 = vmatprep.mubr.f32.mxu0 0.0
    %405 = vmatmul.mubr.f32.gmra.mxu0 %v155
    %v406 = vpop.f32.mrf.mxu0
    %v407 = vadd.f32 %v335, %v406
    %v408 = vpop.f32.mrf.mxu0
    %409 = vmatprep.mubr.f32.mxu0 0.0
    %410 = vmatmul.mubr.f32.gmra.mxu0 %v158
    %v411 = vpop.f32.mrf.mxu0
    %v412 = vadd.f32 %v335, %v411
    %v413 = vpop.f32.mrf.mxu0
    %414 = vdwg.mxu0
    %v415 = vld [vmem:[#allocation8] sm:$0xff]
    %v416 = vld [vmem:[#allocation8 + $0x8] sm:$0xff]
    %v417 = vld [vmem:[#allocation8 + $0x10] sm:$0xff]
    %v418 = vld [vmem:[#allocation8 + $0x18] sm:$0xff]
    %s419 = scalar_lea.vmem [#allocation8], 32
    %v420 = vld [vmem:[%s419] sm:$0xff]
    %v421 = vld [vmem:[%s419 + $0x8] sm:$0xff]
    %v422 = vld [vmem:[%s419 + $0x10] sm:$0xff]
    %v423 = vld [vmem:[%s419 + $0x18] sm:$0xff]
    %s424 = scalar_lea.vmem [#allocation8], 64
    %v425 = vld [vmem:[%s424] sm:$0xff]
    %v426 = vld [vmem:[%s424 + $0x8] sm:$0xff]
    %v427 = vld [vmem:[%s424 + $0x10] sm:$0xff]
    %v428 = vld [vmem:[%s424 + $0x18] sm:$0xff]
    %v429 = vld [vmem:[%s5] sm:$0x1]
    %vm430 = vcmask 261120
    %v432 = vsel %vm430, 0.0, 0
    %434 = vmatprep.subr.mxu0 0.0
    %435 = vmatpush1.msra.mxu0 0.0
    %436 = vmatprep.subr.mxu0 0.0
    %437 = vmatpush1.msra.mxu0 0.0
    %438 = vmatprep.subr.mxu0 0.0
    %439 = vmatpush1.msra.mxu0 0.0
    %440 = vmatprep.subr.mxu0 0.0
    %441 = vmatpush1.msra.mxu0 0.0
    %442 = vmatprep.subr.mxu0 0.0
    %443 = vmatpush1.msra.mxu0 0.0
    %444 = vmatprep.subr.mxu0 0.0
    %445 = vmatpush1.msra.mxu0 0.0
    %446 = vmatprep.subr.mxu0 0.0
    %447 = vmatpush1.msra.mxu0 0.0
    %448 = vmatprep.subr.mxu0 0.0
    %449 = vmatpush1.msra.mxu0 0.0
    %450 = vmatprep.subr.mxu0 0.0
    %451 = vmatpush1.msra.mxu0 0.0
    %452 = vmatprep.subr.mxu0 0.0
    %453 = vmatpush1.msra.mxu0 0.0
    %454 = vmatprep.subr.mxu0 0.0
    %455 = vmatpush1.msra.mxu0 0.0
    %456 = vmatprep.subr.mxu0 0.0
    %457 = vmatpush1.msra.mxu0 0.0
    %458 = vmatprep.subr.mxu0 0.0
    %459 = vmatpush1.msra.mxu0 %v418
    %460 = vmatprep.subr.mxu0 0.0
    %461 = vmatpush1.msra.mxu0 %v417
    %462 = vmatprep.subr.mxu0 0.0
    %463 = vmatpush1.msra.mxu0 %v416
    %464 = vmatprep.subr.mxu0 0.0
    %465 = vmatpush1.msra.mxu0 %v415
    %466 = vmatprep.subr.mxu0 0.0
    %467 = vmatpush2.msra.mxu0 0.0
    %468 = vmatprep.subr.mxu0 0.0
    %469 = vmatpush2.msra.mxu0 0.0
    %470 = vmatprep.subr.mxu0 0.0
    %471 = vmatpush2.msra.mxu0 0.0
    %472 = vmatprep.subr.mxu0 0.0
    %473 = vmatpush2.msra.mxu0 0.0
    %474 = vmatprep.subr.mxu0 0.0
    %475 = vmatpush2.msra.mxu0 0.0
    %476 = vmatprep.subr.mxu0 0.0
    %477 = vmatpush2.msra.mxu0 0.0
    %478 = vmatprep.subr.mxu0 0.0
    %479 = vmatpush2.msra.mxu0 0.0
    %480 = vmatprep.subr.mxu0 0.0
    %481 = vmatpush2.msra.mxu0 0.0
    %482 = vmatprep.subr.mxu0 0.0
    %483 = vmatpush2.msra.mxu0 0.0
    %484 = vmatprep.subr.mxu0 0.0
    %485 = vmatpush2.msra.mxu0 0.0
    %486 = vmatprep.subr.mxu0 0.0
    %487 = vmatpush2.msra.mxu0 0.0
    %488 = vmatprep.subr.mxu0 0.0
    %489 = vmatpush2.msra.mxu0 0.0
    %490 = vmatprep.subr.mxu0 0.0
    %491 = vmatpush2.msra.mxu0 0.0
    %492 = vmatprep.subr.mxu0 0.0
    %493 = vmatpush2.msra.mxu0 0.0
    %494 = vmatprep.subr.mxu0 0.0
    %495 = vmatpush2.msra.mxu0 0.0
    %496 = vmatprep.subr.mxu0 0.0
    %497 = vmatpush2.msra.mxu0 0.0
    %498 = vmatprep.mubr.f32.mxu0 0.0
    %499 = vmatmul.mubr.f32.gmra.mxu0 %v432
    %v500 = vpop.f32.mrf.mxu0
    %v501 = vadd.f32 0.0, %v500
    %v502 = vpop.f32.mrf.mxu0
    %503 = vdwg.mxu0
    %504 = vmatprep.subr.mxu0 0.0
    %505 = vmatpush1.msra.mxu0 0.0
    %506 = vmatprep.subr.mxu0 0.0
    %507 = vmatpush1.msra.mxu0 0.0
    %508 = vmatprep.subr.mxu0 0.0
    %509 = vmatpush1.msra.mxu0 0.0
    %510 = vmatprep.subr.mxu0 0.0
    %511 = vmatpush1.msra.mxu0 0.0
    %512 = vmatprep.subr.mxu0 0.0
    %513 = vmatpush1.msra.mxu0 0.0
    %514 = vmatprep.subr.mxu0 0.0
    %515 = vmatpush1.msra.mxu0 0.0
    %516 = vmatprep.subr.mxu0 0.0
    %517 = vmatpush1.msra.mxu0 0.0
    %518 = vmatprep.subr.mxu0 0.0
    %519 = vmatpush1.msra.mxu0 0.0
    %520 = vmatprep.subr.mxu0 0.0
    %521 = vmatpush1.msra.mxu0 0.0
    %522 = vmatprep.subr.mxu0 0.0
    %523 = vmatpush1.msra.mxu0 0.0
    %524 = vmatprep.subr.mxu0 0.0
    %525 = vmatpush1.msra.mxu0 0.0
    %526 = vmatprep.subr.mxu0 0.0
    %527 = vmatpush1.msra.mxu0 0.0
    %528 = vmatprep.subr.mxu0 0.0
    %529 = vmatpush1.msra.mxu0 %v423
    %530 = vmatprep.subr.mxu0 0.0
    %531 = vmatpush1.msra.mxu0 %v422
    %532 = vmatprep.subr.mxu0 0.0
    %533 = vmatpush1.msra.mxu0 %v421
    %534 = vmatprep.subr.mxu0 0.0
    %535 = vmatpush1.msra.mxu0 %v420
    %536 = vmatprep.subr.mxu0 0.0
    %537 = vmatpush2.msra.mxu0 0.0
    %538 = vmatprep.subr.mxu0 0.0
    %539 = vmatpush2.msra.mxu0 0.0
    %540 = vmatprep.subr.mxu0 0.0
    %541 = vmatpush2.msra.mxu0 0.0
    %542 = vmatprep.subr.mxu0 0.0
    %543 = vmatpush2.msra.mxu0 0.0
    %544 = vmatprep.subr.mxu0 0.0
    %545 = vmatpush2.msra.mxu0 0.0
    %546 = vmatprep.subr.mxu0 0.0
    %547 = vmatpush2.msra.mxu0 0.0
    %548 = vmatprep.subr.mxu0 0.0
    %549 = vmatpush2.msra.mxu0 0.0
    %550 = vmatprep.subr.mxu0 0.0
    %551 = vmatpush2.msra.mxu0 0.0
    %552 = vmatprep.subr.mxu0 0.0
    %553 = vmatpush2.msra.mxu0 0.0
    %554 = vmatprep.subr.mxu0 0.0
    %555 = vmatpush2.msra.mxu0 0.0
    %556 = vmatprep.subr.mxu0 0.0
    %557 = vmatpush2.msra.mxu0 0.0
    %558 = vmatprep.subr.mxu0 0.0
    %559 = vmatpush2.msra.mxu0 0.0
    %560 = vmatprep.subr.mxu0 0.0
    %561 = vmatpush2.msra.mxu0 0.0
    %562 = vmatprep.subr.mxu0 0.0
    %563 = vmatpush2.msra.mxu0 0.0
    %564 = vmatprep.subr.mxu0 0.0
    %565 = vmatpush2.msra.mxu0 0.0
    %566 = vmatprep.subr.mxu0 0.0
    %567 = vmatpush2.msra.mxu0 0.0
    %568 = vmatprep.mubr.f32.mxu0 0.0
    %569 = vmatmul.mubr.f32.gmra.mxu0 %v432
    %v570 = vpop.f32.mrf.mxu0
    %v571 = vadd.f32 0.0, %v570
    %v572 = vpop.f32.mrf.mxu0
    %573 = vdwg.mxu0
    %v574 = vadd.f32 %v231, %v501
    %v575 = vxor.u32 %v574, 2147483648
    %v576 = vmul.f32 %v575, 1.442695
    %v577 = vpow.pop %v576
    %v578 = vadd.f32 %v577, 1.0
    %v579 = vrcp.pop %v578
    %v580 = vmul.f32 1.0, %v579
    %v581 = vadd.f32 %v319, %v571
    %v582 = vxor.u32 %v581, 2147483648
    %v583 = vmul.f32 %v582, 1.442695
    %v584 = vpow.pop %v583
    %v585 = vadd.f32 %v584, 1.0
    %v586 = vrcp.pop %v585
    %v587 = vmul.f32 1.0, %v586
    %v589 = vlaneseq
    %v590 = vshrl.u32 %v589, 7
    %v591 = vsub.s32 0, %v590
    %v592 = vrot.slane %v429, %v591
    %594 = vmatprep.subr.mxu0 0.0
    %595 = vmatpush1.msra.mxu0 0.0
    %596 = vmatprep.subr.mxu0 0.0
    %597 = vmatpush1.msra.mxu0 0.0
    %598 = vmatprep.subr.mxu0 0.0
    %599 = vmatpush1.msra.mxu0 0.0
    %600 = vmatprep.subr.mxu0 0.0
    %601 = vmatpush1.msra.mxu0 0.0
    %602 = vmatprep.subr.mxu0 0.0
    %603 = vmatpush1.msra.mxu0 0.0
    %604 = vmatprep.subr.mxu0 0.0
    %605 = vmatpush1.msra.mxu0 0.0
    %606 = vmatprep.subr.mxu0 0.0
    %607 = vmatpush1.msra.mxu0 0.0
    %608 = vmatprep.subr.mxu0 0.0
    %609 = vmatpush1.msra.mxu0 0.0
    %610 = vmatprep.subr.mxu0 0.0
    %611 = vmatpush1.msra.mxu0 0.0
    %612 = vmatprep.subr.mxu0 0.0
    %613 = vmatpush1.msra.mxu0 0.0
    %614 = vmatprep.subr.mxu0 0.0
    %615 = vmatpush1.msra.mxu0 0.0
    %616 = vmatprep.subr.mxu0 0.0
    %617 = vmatpush1.msra.mxu0 0.0
    %618 = vmatprep.subr.mxu0 0.0
    %619 = vmatpush1.msra.mxu0 %v428
    %620 = vmatprep.subr.mxu0 0.0
    %621 = vmatpush1.msra.mxu0 %v427
    %622 = vmatprep.subr.mxu0 0.0
    %623 = vmatpush1.msra.mxu0 %v426
    %624 = vmatprep.subr.mxu0 0.0
    %625 = vmatpush1.msra.mxu0 %v425
    %626 = vmatprep.subr.mxu0 0.0
    %627 = vmatpush2.msra.mxu0 0.0
    %628 = vmatprep.subr.mxu0 0.0
    %629 = vmatpush2.msra.mxu0 0.0
    %630 = vmatprep.subr.mxu0 0.0
    %631 = vmatpush2.msra.mxu0 0.0
    %632 = vmatprep.subr.mxu0 0.0
    %633 = vmatpush2.msra.mxu0 0.0
    %634 = vmatprep.subr.mxu0 0.0
    %635 = vmatpush2.msra.mxu0 0.0
    %636 = vmatprep.subr.mxu0 0.0
    %637 = vmatpush2.msra.mxu0 0.0
    %638 = vmatprep.subr.mxu0 0.0
    %639 = vmatpush2.msra.mxu0 0.0
    %640 = vmatprep.subr.mxu0 0.0
    %641 = vmatpush2.msra.mxu0 0.0
    %642 = vmatprep.subr.mxu0 0.0
    %643 = vmatpush2.msra.mxu0 0.0
    %644 = vmatprep.subr.mxu0 0.0
    %645 = vmatpush2.msra.mxu0 0.0
    %646 = vmatprep.subr.mxu0 0.0
    %647 = vmatpush2.msra.mxu0 0.0
    %648 = vmatprep.subr.mxu0 0.0
    %649 = vmatpush2.msra.mxu0 0.0
    %650 = vmatprep.subr.mxu0 0.0
    %651 = vmatpush2.msra.mxu0 0.0
    %652 = vmatprep.subr.mxu0 0.0
    %653 = vmatpush2.msra.mxu0 0.0
    %654 = vmatprep.subr.mxu0 0.0
    %655 = vmatpush2.msra.mxu0 0.0
    %656 = vmatprep.subr.mxu0 0.0
    %657 = vmatpush2.msra.mxu0 0.0
    %658 = vmatprep.mubr.f32.mxu0 0.0
    %659 = vmatmul.mubr.f32.gmra.mxu0 %v432
    %v660 = vpop.f32.mrf.mxu0
    %v661 = vadd.f32 %v592, %v660
    %v662 = vpop.f32.mrf.mxu0
    %663 = vdwg.mxu0
    %v664 = vmul.f32 %v580, %v661
    %v665 = vadd.f32 %v407, %v664
    %v666 = vtanh.pop %v665
    %v667 = vsub.f32 1.0, %v587
    %v668 = vmul.f32 %v667, %v666
    %v669 = vmul.f32 %v587, 0.0
    %v670 = vadd.f32 %v668, %v669
    %v672 = vsel %vm430, %v670, 0
    %674 = vmatprep.subr.mxu0 0.0
    %675 = vmatpush1.msra.mxu0 0.0
    %676 = vmatprep.subr.mxu0 0.0
    %677 = vmatpush1.msra.mxu0 0.0
    %678 = vmatprep.subr.mxu0 0.0
    %679 = vmatpush1.msra.mxu0 0.0
    %680 = vmatprep.subr.mxu0 0.0
    %681 = vmatpush1.msra.mxu0 0.0
    %682 = vmatprep.subr.mxu0 0.0
    %683 = vmatpush1.msra.mxu0 0.0
    %684 = vmatprep.subr.mxu0 0.0
    %685 = vmatpush1.msra.mxu0 0.0
    %686 = vmatprep.subr.mxu0 0.0
    %687 = vmatpush1.msra.mxu0 0.0
    %688 = vmatprep.subr.mxu0 0.0
    %689 = vmatpush1.msra.mxu0 0.0
    %690 = vmatprep.subr.mxu0 0.0
    %691 = vmatpush1.msra.mxu0 0.0
    %692 = vmatprep.subr.mxu0 0.0
    %693 = vmatpush1.msra.mxu0 0.0
    %694 = vmatprep.subr.mxu0 0.0
    %695 = vmatpush1.msra.mxu0 0.0
    %696 = vmatprep.subr.mxu0 0.0
    %697 = vmatpush1.msra.mxu0 0.0
    %698 = vmatprep.subr.mxu0 0.0
    %699 = vmatpush1.msra.mxu0 %v418
    %700 = vmatprep.subr.mxu0 0.0
    %701 = vmatpush1.msra.mxu0 %v417
    %702 = vmatprep.subr.mxu0 0.0
    %703 = vmatpush1.msra.mxu0 %v416
    %704 = vmatprep.subr.mxu0 0.0
    %705 = vmatpush1.msra.mxu0 %v415
    %706 = vmatprep.subr.mxu0 0.0
    %707 = vmatpush2.msra.mxu0 0.0
    %708 = vmatprep.subr.mxu0 0.0
    %709 = vmatpush2.msra.mxu0 0.0
    %710 = vmatprep.subr.mxu0 0.0
    %711 = vmatpush2.msra.mxu0 0.0
    %712 = vmatprep.subr.mxu0 0.0
    %713 = vmatpush2.msra.mxu0 0.0
    %714 = vmatprep.subr.mxu0 0.0
    %715 = vmatpush2.msra.mxu0 0.0
    %716 = vmatprep.subr.mxu0 0.0
    %717 = vmatpush2.msra.mxu0 0.0
    %718 = vmatprep.subr.mxu0 0.0
    %719 = vmatpush2.msra.mxu0 0.0
    %720 = vmatprep.subr.mxu0 0.0
    %721 = vmatpush2.msra.mxu0 0.0
    %722 = vmatprep.subr.mxu0 0.0
    %723 = vmatpush2.msra.mxu0 0.0
    %724 = vmatprep.subr.mxu0 0.0
    %725 = vmatpush2.msra.mxu0 0.0
    %726 = vmatprep.subr.mxu0 0.0
    %727 = vmatpush2.msra.mxu0 0.0
    %728 = vmatprep.subr.mxu0 0.0
    %729 = vmatpush2.msra.mxu0 0.0
    %730 = vmatprep.subr.mxu0 0.0
    %731 = vmatpush2.msra.mxu0 0.0
    %732 = vmatprep.subr.mxu0 0.0
    %733 = vmatpush2.msra.mxu0 0.0
    %734 = vmatprep.subr.mxu0 0.0
    %735 = vmatpush2.msra.mxu0 0.0
    %736 = vmatprep.subr.mxu0 0.0
    %737 = vmatpush2.msra.mxu0 0.0
    %738 = vmatprep.mubr.f32.mxu0 0.0
    %739 = vmatmul.mubr.f32.gmra.mxu0 %v672
    %v740 = vpop.f32.mrf.mxu0
    %v741 = vadd.f32 0.0, %v740
    %v742 = vpop.f32.mrf.mxu0
    %743 = vdwg.mxu0
    %744 = vmatprep.subr.mxu0 0.0
    %745 = vmatpush1.msra.mxu0 0.0
    %746 = vmatprep.subr.mxu0 0.0
    %747 = vmatpush1.msra.mxu0 0.0
    %748 = vmatprep.subr.mxu0 0.0
    %749 = vmatpush1.msra.mxu0 0.0
    %750 = vmatprep.subr.mxu0 0.0
    %751 = vmatpush1.msra.mxu0 0.0
    %752 = vmatprep.subr.mxu0 0.0
    %753 = vmatpush1.msra.mxu0 0.0
    %754 = vmatprep.subr.mxu0 0.0
    %755 = vmatpush1.msra.mxu0 0.0
    %756 = vmatprep.subr.mxu0 0.0
    %757 = vmatpush1.msra.mxu0 0.0
    %758 = vmatprep.subr.mxu0 0.0
    %759 = vmatpush1.msra.mxu0 0.0
    %760 = vmatprep.subr.mxu0 0.0
    %761 = vmatpush1.msra.mxu0 0.0
    %762 = vmatprep.subr.mxu0 0.0
    %763 = vmatpush1.msra.mxu0 0.0
    %764 = vmatprep.subr.mxu0 0.0
    %765 = vmatpush1.msra.mxu0 0.0
    %766 = vmatprep.subr.mxu0 0.0
    %767 = vmatpush1.msra.mxu0 0.0
    %768 = vmatprep.subr.mxu0 0.0
    %769 = vmatpush1.msra.mxu0 %v423
    %770 = vmatprep.subr.mxu0 0.0
    %771 = vmatpush1.msra.mxu0 %v422
    %772 = vmatprep.subr.mxu0 0.0
    %773 = vmatpush1.msra.mxu0 %v421
    %774 = vmatprep.subr.mxu0 0.0
    %775 = vmatpush1.msra.mxu0 %v420
    %776 = vmatprep.subr.mxu0 0.0
    %777 = vmatpush2.msra.mxu0 0.0
    %778 = vmatprep.subr.mxu0 0.0
    %779 = vmatpush2.msra.mxu0 0.0
    %780 = vmatprep.subr.mxu0 0.0
    %781 = vmatpush2.msra.mxu0 0.0
    %782 = vmatprep.subr.mxu0 0.0
    %783 = vmatpush2.msra.mxu0 0.0
    %784 = vmatprep.subr.mxu0 0.0
    %785 = vmatpush2.msra.mxu0 0.0
    %786 = vmatprep.subr.mxu0 0.0
    %787 = vmatpush2.msra.mxu0 0.0
    %788 = vmatprep.subr.mxu0 0.0
    %789 = vmatpush2.msra.mxu0 0.0
    %790 = vmatprep.subr.mxu0 0.0
    %791 = vmatpush2.msra.mxu0 0.0
    %792 = vmatprep.subr.mxu0 0.0
    %793 = vmatpush2.msra.mxu0 0.0
    %794 = vmatprep.subr.mxu0 0.0
    %795 = vmatpush2.msra.mxu0 0.0
    %796 = vmatprep.subr.mxu0 0.0
    %797 = vmatpush2.msra.mxu0 0.0
    %798 = vmatprep.subr.mxu0 0.0
    %799 = vmatpush2.msra.mxu0 0.0
    %800 = vmatprep.subr.mxu0 0.0
    %801 = vmatpush2.msra.mxu0 0.0
    %802 = vmatprep.subr.mxu0 0.0
    %803 = vmatpush2.msra.mxu0 0.0
    %804 = vmatprep.subr.mxu0 0.0
    %805 = vmatpush2.msra.mxu0 0.0
    %806 = vmatprep.subr.mxu0 0.0
    %807 = vmatpush2.msra.mxu0 0.0
    %808 = vmatprep.mubr.f32.mxu0 0.0
    %809 = vmatmul.mubr.f32.gmra.mxu0 %v672
    %v810 = vpop.f32.mrf.mxu0
    %v811 = vadd.f32 0.0, %v810
    %v812 = vpop.f32.mrf.mxu0
    %813 = vdwg.mxu0
    %v815 = vrot.slane %v741, 6
    %v817 = vadd.f32 %v231, %v815
    %v818 = vxor.u32 %v817, 2147483648
    %v819 = vmul.f32 %v818, 1.442695
    %v820 = vpow.pop %v819
    %v821 = vadd.f32 %v820, 1.0
    %v822 = vrcp.pop %v821
    %v823 = vmul.f32 1.0, %v822
    %v825 = vrot.slane %v811, 6
    %v827 = vadd.f32 %v319, %v825
    %v828 = vxor.u32 %v827, 2147483648
    %v829 = vmul.f32 %v828, 1.442695
    %v830 = vpow.pop %v829
    %v831 = vadd.f32 %v830, 1.0
    %v832 = vrcp.pop %v831
    %v833 = vmul.f32 1.0, %v832
    %834 = vmatprep.subr.mxu0 0.0
    %835 = vmatpush1.msra.mxu0 0.0
    %836 = vmatprep.subr.mxu0 0.0
    %837 = vmatpush1.msra.mxu0 0.0
    %838 = vmatprep.subr.mxu0 0.0
    %839 = vmatpush1.msra.mxu0 0.0
    %840 = vmatprep.subr.mxu0 0.0
    %841 = vmatpush1.msra.mxu0 0.0
    %842 = vmatprep.subr.mxu0 0.0
    %843 = vmatpush1.msra.mxu0 0.0
    %844 = vmatprep.subr.mxu0 0.0
    %845 = vmatpush1.msra.mxu0 0.0
    %846 = vmatprep.subr.mxu0 0.0
    %847 = vmatpush1.msra.mxu0 0.0
    %848 = vmatprep.subr.mxu0 0.0
    %849 = vmatpush1.msra.mxu0 0.0
    %850 = vmatprep.subr.mxu0 0.0
    %851 = vmatpush1.msra.mxu0 0.0
    %852 = vmatprep.subr.mxu0 0.0
    %853 = vmatpush1.msra.mxu0 0.0
    %854 = vmatprep.subr.mxu0 0.0
    %855 = vmatpush1.msra.mxu0 0.0
    %856 = vmatprep.subr.mxu0 0.0
    %857 = vmatpush1.msra.mxu0 0.0
    %858 = vmatprep.subr.mxu0 0.0
    %859 = vmatpush1.msra.mxu0 %v428
    %860 = vmatprep.subr.mxu0 0.0
    %861 = vmatpush1.msra.mxu0 %v427
    %862 = vmatprep.subr.mxu0 0.0
    %863 = vmatpush1.msra.mxu0 %v426
    %864 = vmatprep.subr.mxu0 0.0
    %865 = vmatpush1.msra.mxu0 %v425
    %866 = vmatprep.subr.mxu0 0.0
    %867 = vmatpush2.msra.mxu0 0.0
    %868 = vmatprep.subr.mxu0 0.0
    %869 = vmatpush2.msra.mxu0 0.0
    %870 = vmatprep.subr.mxu0 0.0
    %871 = vmatpush2.msra.mxu0 0.0
    %872 = vmatprep.subr.mxu0 0.0
    %873 = vmatpush2.msra.mxu0 0.0
    %874 = vmatprep.subr.mxu0 0.0
    %875 = vmatpush2.msra.mxu0 0.0
    %876 = vmatprep.subr.mxu0 0.0
    %877 = vmatpush2.msra.mxu0 0.0
    %878 = vmatprep.subr.mxu0 0.0
    %879 = vmatpush2.msra.mxu0 0.0
    %880 = vmatprep.subr.mxu0 0.0
    %881 = vmatpush2.msra.mxu0 0.0
    %882 = vmatprep.subr.mxu0 0.0
    %883 = vmatpush2.msra.mxu0 0.0
    %884 = vmatprep.subr.mxu0 0.0
    %885 = vmatpush2.msra.mxu0 0.0
    %886 = vmatprep.subr.mxu0 0.0
    %887 = vmatpush2.msra.mxu0 0.0
    %888 = vmatprep.subr.mxu0 0.0
    %889 = vmatpush2.msra.mxu0 0.0
    %890 = vmatprep.subr.mxu0 0.0
    %891 = vmatpush2.msra.mxu0 0.0
    %892 = vmatprep.subr.mxu0 0.0
    %893 = vmatpush2.msra.mxu0 0.0
    %894 = vmatprep.subr.mxu0 0.0
    %895 = vmatpush2.msra.mxu0 0.0
    %896 = vmatprep.subr.mxu0 0.0
    %897 = vmatpush2.msra.mxu0 0.0
    %898 = vmatprep.mubr.f32.mxu0 0.0
    %899 = vmatmul.mubr.f32.gmra.mxu0 %v672
    %v900 = vpop.f32.mrf.mxu0
    %v901 = vadd.f32 %v592, %v900
    %v902 = vpop.f32.mrf.mxu0
    %903 = vdwg.mxu0
    %v905 = vrot.slane %v901, 6
    %v907 = vmul.f32 %v823, %v905
    %v908 = vadd.f32 %v407, %v907
    %v909 = vtanh.pop %v908
    %v910 = vsub.f32 1.0, %v833
    %v911 = vmul.f32 %v910, %v909
    %v912 = vrot.slane %v670, 6
    %v914 = vmul.f32 %v833, %v912
    %v915 = vadd.f32 %v911, %v914
    %v917 = vrot.slane %v915, 2
    %v918 = vsel %vm430, %v917, 0
    %920 = vmatprep.subr.mxu0 0.0
    %921 = vmatpush1.msra.mxu0 0.0
    %922 = vmatprep.subr.mxu0 0.0
    %923 = vmatpush1.msra.mxu0 0.0
    %924 = vmatprep.subr.mxu0 0.0
    %925 = vmatpush1.msra.mxu0 0.0
    %926 = vmatprep.subr.mxu0 0.0
    %927 = vmatpush1.msra.mxu0 0.0
    %928 = vmatprep.subr.mxu0 0.0
    %929 = vmatpush1.msra.mxu0 0.0
    %930 = vmatprep.subr.mxu0 0.0
    %931 = vmatpush1.msra.mxu0 0.0
    %932 = vmatprep.subr.mxu0 0.0
    %933 = vmatpush1.msra.mxu0 0.0
    %934 = vmatprep.subr.mxu0 0.0
    %935 = vmatpush1.msra.mxu0 0.0
    %936 = vmatprep.subr.mxu0 0.0
    %937 = vmatpush1.msra.mxu0 0.0
    %938 = vmatprep.subr.mxu0 0.0
    %939 = vmatpush1.msra.mxu0 0.0
    %940 = vmatprep.subr.mxu0 0.0
    %941 = vmatpush1.msra.mxu0 0.0
    %942 = vmatprep.subr.mxu0 0.0
    %943 = vmatpush1.msra.mxu0 0.0
    %944 = vmatprep.subr.mxu0 0.0
    %945 = vmatpush1.msra.mxu0 %v418
    %946 = vmatprep.subr.mxu0 0.0
    %947 = vmatpush1.msra.mxu0 %v417
    %948 = vmatprep.subr.mxu0 0.0
    %949 = vmatpush1.msra.mxu0 %v416
    %950 = vmatprep.subr.mxu0 0.0
    %951 = vmatpush1.msra.mxu0 %v415
    %952 = vmatprep.subr.mxu0 0.0
    %953 = vmatpush2.msra.mxu0 0.0
    %954 = vmatprep.subr.mxu0 0.0
    %955 = vmatpush2.msra.mxu0 0.0
    %956 = vmatprep.subr.mxu0 0.0
    %957 = vmatpush2.msra.mxu0 0.0
    %958 = vmatprep.subr.mxu0 0.0
    %959 = vmatpush2.msra.mxu0 0.0
    %960 = vmatprep.subr.mxu0 0.0
    %961 = vmatpush2.msra.mxu0 0.0
    %962 = vmatprep.subr.mxu0 0.0
    %963 = vmatpush2.msra.mxu0 0.0
    %964 = vmatprep.subr.mxu0 0.0
    %965 = vmatpush2.msra.mxu0 0.0
    %966 = vmatprep.subr.mxu0 0.0
    %967 = vmatpush2.msra.mxu0 0.0
    %968 = vmatprep.subr.mxu0 0.0
    %969 = vmatpush2.msra.mxu0 0.0
    %970 = vmatprep.subr.mxu0 0.0
    %971 = vmatpush2.msra.mxu0 0.0
    %972 = vmatprep.subr.mxu0 0.0
    %973 = vmatpush2.msra.mxu0 0.0
    %974 = vmatprep.subr.mxu0 0.0
    %975 = vmatpush2.msra.mxu0 0.0
    %976 = vmatprep.subr.mxu0 0.0
    %977 = vmatpush2.msra.mxu0 0.0
    %978 = vmatprep.subr.mxu0 0.0
    %979 = vmatpush2.msra.mxu0 0.0
    %980 = vmatprep.subr.mxu0 0.0
    %981 = vmatpush2.msra.mxu0 0.0
    %982 = vmatprep.subr.mxu0 0.0
    %983 = vmatpush2.msra.mxu0 0.0
    %984 = vmatprep.mubr.f32.mxu0 0.0
    %985 = vmatmul.mubr.f32.gmra.mxu0 %v918
    %v986 = vpop.f32.mrf.mxu0
    %v987 = vadd.f32 0.0, %v986
    %v988 = vpop.f32.mrf.mxu0
    %989 = vdwg.mxu0
    %990 = vmatprep.subr.mxu0 0.0
    %991 = vmatpush1.msra.mxu0 0.0
    %992 = vmatprep.subr.mxu0 0.0
    %993 = vmatpush1.msra.mxu0 0.0
    %994 = vmatprep.subr.mxu0 0.0
    %995 = vmatpush1.msra.mxu0 0.0
    %996 = vmatprep.subr.mxu0 0.0
    %997 = vmatpush1.msra.mxu0 0.0
    %998 = vmatprep.subr.mxu0 0.0
    %999 = vmatpush1.msra.mxu0 0.0
    %1000 = vmatprep.subr.mxu0 0.0
    %1001 = vmatpush1.msra.mxu0 0.0
    %1002 = vmatprep.subr.mxu0 0.0
    %1003 = vmatpush1.msra.mxu0 0.0
    %1004 = vmatprep.subr.mxu0 0.0
    %1005 = vmatpush1.msra.mxu0 0.0
    %1006 = vmatprep.subr.mxu0 0.0
    %1007 = vmatpush1.msra.mxu0 0.0
    %1008 = vmatprep.subr.mxu0 0.0
    %1009 = vmatpush1.msra.mxu0 0.0
    %1010 = vmatprep.subr.mxu0 0.0
    %1011 = vmatpush1.msra.mxu0 0.0
    %1012 = vmatprep.subr.mxu0 0.0
    %1013 = vmatpush1.msra.mxu0 0.0
    %1014 = vmatprep.subr.mxu0 0.0
    %1015 = vmatpush1.msra.mxu0 %v423
    %1016 = vmatprep.subr.mxu0 0.0
    %1017 = vmatpush1.msra.mxu0 %v422
    %1018 = vmatprep.subr.mxu0 0.0
    %1019 = vmatpush1.msra.mxu0 %v421
    %1020 = vmatprep.subr.mxu0 0.0
    %1021 = vmatpush1.msra.mxu0 %v420
    %1022 = vmatprep.subr.mxu0 0.0
    %1023 = vmatpush2.msra.mxu0 0.0
    %1024 = vmatprep.subr.mxu0 0.0
    %1025 = vmatpush2.msra.mxu0 0.0
    %1026 = vmatprep.subr.mxu0 0.0
    %1027 = vmatpush2.msra.mxu0 0.0
    %1028 = vmatprep.subr.mxu0 0.0
    %1029 = vmatpush2.msra.mxu0 0.0
    %1030 = vmatprep.subr.mxu0 0.0
    %1031 = vmatpush2.msra.mxu0 0.0
    %1032 = vmatprep.subr.mxu0 0.0
    %1033 = vmatpush2.msra.mxu0 0.0
    %1034 = vmatprep.subr.mxu0 0.0
    %1035 = vmatpush2.msra.mxu0 0.0
    %1036 = vmatprep.subr.mxu0 0.0
    %1037 = vmatpush2.msra.mxu0 0.0
    %1038 = vmatprep.subr.mxu0 0.0
    %1039 = vmatpush2.msra.mxu0 0.0
    %1040 = vmatprep.subr.mxu0 0.0
    %1041 = vmatpush2.msra.mxu0 0.0
    %1042 = vmatprep.subr.mxu0 0.0
    %1043 = vmatpush2.msra.mxu0 0.0
    %1044 = vmatprep.subr.mxu0 0.0
    %1045 = vmatpush2.msra.mxu0 0.0
    %1046 = vmatprep.subr.mxu0 0.0
    %1047 = vmatpush2.msra.mxu0 0.0
    %1048 = vmatprep.subr.mxu0 0.0
    %1049 = vmatpush2.msra.mxu0 0.0
    %1050 = vmatprep.subr.mxu0 0.0
    %1051 = vmatpush2.msra.mxu0 0.0
    %1052 = vmatprep.subr.mxu0 0.0
    %1053 = vmatpush2.msra.mxu0 0.0
    %1054 = vmatprep.mubr.f32.mxu0 0.0
    %1055 = vmatmul.mubr.f32.gmra.mxu0 %v918
    %v1056 = vpop.f32.mrf.mxu0
    %v1057 = vadd.f32 0.0, %v1056
    %v1058 = vpop.f32.mrf.mxu0
    %1059 = vdwg.mxu0
    %v1061 = vrot.slane %v987, 4
    %v1063 = vadd.f32 %v231, %v1061
    %v1064 = vxor.u32 %v1063, 2147483648
    %v1065 = vmul.f32 %v1064, 1.442695
    %v1066 = vpow.pop %v1065
    %v1067 = vadd.f32 %v1066, 1.0
    %v1068 = vrcp.pop %v1067
    %v1069 = vmul.f32 1.0, %v1068
    %v1071 = vrot.slane %v1057, 4
    %v1073 = vadd.f32 %v319, %v1071
    %v1074 = vxor.u32 %v1073, 2147483648
    %v1075 = vmul.f32 %v1074, 1.442695
    %v1076 = vpow.pop %v1075
    %v1077 = vadd.f32 %v1076, 1.0
    %v1078 = vrcp.pop %v1077
    %v1079 = vmul.f32 1.0, %v1078
    %1080 = vmatprep.subr.mxu0 0.0
    %1081 = vmatpush1.msra.mxu0 0.0
    %1082 = vmatprep.subr.mxu0 0.0
    %1083 = vmatpush1.msra.mxu0 0.0
    %1084 = vmatprep.subr.mxu0 0.0
    %1085 = vmatpush1.msra.mxu0 0.0
    %1086 = vmatprep.subr.mxu0 0.0
    %1087 = vmatpush1.msra.mxu0 0.0
    %1088 = vmatprep.subr.mxu0 0.0
    %1089 = vmatpush1.msra.mxu0 0.0
    %1090 = vmatprep.subr.mxu0 0.0
    %1091 = vmatpush1.msra.mxu0 0.0
    %1092 = vmatprep.subr.mxu0 0.0
    %1093 = vmatpush1.msra.mxu0 0.0
    %1094 = vmatprep.subr.mxu0 0.0
    %1095 = vmatpush1.msra.mxu0 0.0
    %1096 = vmatprep.subr.mxu0 0.0
    %1097 = vmatpush1.msra.mxu0 0.0
    %1098 = vmatprep.subr.mxu0 0.0
    %1099 = vmatpush1.msra.mxu0 0.0
    %1100 = vmatprep.subr.mxu0 0.0
    %1101 = vmatpush1.msra.mxu0 0.0
    %1102 = vmatprep.subr.mxu0 0.0
    %1103 = vmatpush1.msra.mxu0 0.0
    %1104 = vmatprep.subr.mxu0 0.0
    %1105 = vmatpush1.msra.mxu0 %v428
    %1106 = vmatprep.subr.mxu0 0.0
    %1107 = vmatpush1.msra.mxu0 %v427
    %1108 = vmatprep.subr.mxu0 0.0
    %1109 = vmatpush1.msra.mxu0 %v426
    %1110 = vmatprep.subr.mxu0 0.0
    %1111 = vmatpush1.msra.mxu0 %v425
    %1112 = vmatprep.subr.mxu0 0.0
    %1113 = vmatpush2.msra.mxu0 0.0
    %1114 = vmatprep.subr.mxu0 0.0
    %1115 = vmatpush2.msra.mxu0 0.0
    %1116 = vmatprep.subr.mxu0 0.0
    %1117 = vmatpush2.msra.mxu0 0.0
    %1118 = vmatprep.subr.mxu0 0.0
    %1119 = vmatpush2.msra.mxu0 0.0
    %1120 = vmatprep.subr.mxu0 0.0
    %1121 = vmatpush2.msra.mxu0 0.0
    %1122 = vmatprep.subr.mxu0 0.0
    %1123 = vmatpush2.msra.mxu0 0.0
    %1124 = vmatprep.subr.mxu0 0.0
    %1125 = vmatpush2.msra.mxu0 0.0
    %1126 = vmatprep.subr.mxu0 0.0
    %1127 = vmatpush2.msra.mxu0 0.0
    %1128 = vmatprep.subr.mxu0 0.0
    %1129 = vmatpush2.msra.mxu0 0.0
    %1130 = vmatprep.subr.mxu0 0.0
    %1131 = vmatpush2.msra.mxu0 0.0
    %1132 = vmatprep.subr.mxu0 0.0
    %1133 = vmatpush2.msra.mxu0 0.0
    %1134 = vmatprep.subr.mxu0 0.0
    %1135 = vmatpush2.msra.mxu0 0.0
    %1136 = vmatprep.subr.mxu0 0.0
    %1137 = vmatpush2.msra.mxu0 0.0
    %1138 = vmatprep.subr.mxu0 0.0
    %1139 = vmatpush2.msra.mxu0 0.0
    %1140 = vmatprep.subr.mxu0 0.0
    %1141 = vmatpush2.msra.mxu0 0.0
    %1142 = vmatprep.subr.mxu0 0.0
    %1143 = vmatpush2.msra.mxu0 0.0
    %1144 = vmatprep.mubr.f32.mxu0 0.0
    %1145 = vmatmul.mubr.f32.gmra.mxu0 %v918
    %v1146 = vpop.f32.mrf.mxu0
    %v1147 = vadd.f32 %v592, %v1146
    %v1148 = vpop.f32.mrf.mxu0
    %1149 = vdwg.mxu0
    %v1151 = vrot.slane %v1147, 4
    %v1153 = vmul.f32 %v1069, %v1151
    %v1154 = vadd.f32 %v407, %v1153
    %v1155 = vtanh.pop %v1154
    %v1156 = vsub.f32 1.0, %v1079
    %v1157 = vmul.f32 %v1156, %v1155
    %v1158 = vrot.slane %v915, 6
    %v1160 = vmul.f32 %v1079, %v1158
    %v1161 = vadd.f32 %v1157, %v1160
    %v1163 = vrot.slane %v1161, 4
    %v1164 = vsel %vm430, %v1163, 0
    %1166 = vmatprep.subr.mxu0 0.0
    %1167 = vmatpush1.msra.mxu0 0.0
    %1168 = vmatprep.subr.mxu0 0.0
    %1169 = vmatpush1.msra.mxu0 0.0
    %1170 = vmatprep.subr.mxu0 0.0
    %1171 = vmatpush1.msra.mxu0 0.0
    %1172 = vmatprep.subr.mxu0 0.0
    %1173 = vmatpush1.msra.mxu0 0.0
    %1174 = vmatprep.subr.mxu0 0.0
    %1175 = vmatpush1.msra.mxu0 0.0
    %1176 = vmatprep.subr.mxu0 0.0
    %1177 = vmatpush1.msra.mxu0 0.0
    %1178 = vmatprep.subr.mxu0 0.0
    %1179 = vmatpush1.msra.mxu0 0.0
    %1180 = vmatprep.subr.mxu0 0.0
    %1181 = vmatpush1.msra.mxu0 0.0
    %1182 = vmatprep.subr.mxu0 0.0
    %1183 = vmatpush1.msra.mxu0 0.0
    %1184 = vmatprep.subr.mxu0 0.0
    %1185 = vmatpush1.msra.mxu0 0.0
    %1186 = vmatprep.subr.mxu0 0.0
    %1187 = vmatpush1.msra.mxu0 0.0
    %1188 = vmatprep.subr.mxu0 0.0
    %1189 = vmatpush1.msra.mxu0 0.0
    %1190 = vmatprep.subr.mxu0 0.0
    %1191 = vmatpush1.msra.mxu0 %v418
    %1192 = vmatprep.subr.mxu0 0.0
    %1193 = vmatpush1.msra.mxu0 %v417
    %1194 = vmatprep.subr.mxu0 0.0
    %1195 = vmatpush1.msra.mxu0 %v416
    %1196 = vmatprep.subr.mxu0 0.0
    %1197 = vmatpush1.msra.mxu0 %v415
    %1198 = vmatprep.subr.mxu0 0.0
    %1199 = vmatpush2.msra.mxu0 0.0
    %1200 = vmatprep.subr.mxu0 0.0
    %1201 = vmatpush2.msra.mxu0 0.0
    %1202 = vmatprep.subr.mxu0 0.0
    %1203 = vmatpush2.msra.mxu0 0.0
    %1204 = vmatprep.subr.mxu0 0.0
    %1205 = vmatpush2.msra.mxu0 0.0
    %1206 = vmatprep.subr.mxu0 0.0
    %1207 = vmatpush2.msra.mxu0 0.0
    %1208 = vmatprep.subr.mxu0 0.0
    %1209 = vmatpush2.msra.mxu0 0.0
    %1210 = vmatprep.subr.mxu0 0.0
    %1211 = vmatpush2.msra.mxu0 0.0
    %1212 = vmatprep.subr.mxu0 0.0
    %1213 = vmatpush2.msra.mxu0 0.0
    %1214 = vmatprep.subr.mxu0 0.0
    %1215 = vmatpush2.msra.mxu0 0.0
    %1216 = vmatprep.subr.mxu0 0.0
    %1217 = vmatpush2.msra.mxu0 0.0
    %1218 = vmatprep.subr.mxu0 0.0
    %1219 = vmatpush2.msra.mxu0 0.0
    %1220 = vmatprep.subr.mxu0 0.0
    %1221 = vmatpush2.msra.mxu0 0.0
    %1222 = vmatprep.subr.mxu0 0.0
    %1223 = vmatpush2.msra.mxu0 0.0
    %1224 = vmatprep.subr.mxu0 0.0
    %1225 = vmatpush2.msra.mxu0 0.0
    %1226 = vmatprep.subr.mxu0 0.0
    %1227 = vmatpush2.msra.mxu0 0.0
    %1228 = vmatprep.subr.mxu0 0.0
    %1229 = vmatpush2.msra.mxu0 0.0
    %1230 = vmatprep.mubr.f32.mxu0 0.0
    %1231 = vmatmul.mubr.f32.gmra.mxu0 %v1164
    %v1232 = vpop.f32.mrf.mxu0
    %v1233 = vadd.f32 0.0, %v1232
    %v1234 = vpop.f32.mrf.mxu0
    %1235 = vdwg.mxu0
    %1236 = vmatprep.subr.mxu0 0.0
    %1237 = vmatpush1.msra.mxu0 0.0
    %1238 = vmatprep.subr.mxu0 0.0
    %1239 = vmatpush1.msra.mxu0 0.0
    %1240 = vmatprep.subr.mxu0 0.0
    %1241 = vmatpush1.msra.mxu0 0.0
    %1242 = vmatprep.subr.mxu0 0.0
    %1243 = vmatpush1.msra.mxu0 0.0
    %1244 = vmatprep.subr.mxu0 0.0
    %1245 = vmatpush1.msra.mxu0 0.0
    %1246 = vmatprep.subr.mxu0 0.0
    %1247 = vmatpush1.msra.mxu0 0.0
    %1248 = vmatprep.subr.mxu0 0.0
    %1249 = vmatpush1.msra.mxu0 0.0
    %1250 = vmatprep.subr.mxu0 0.0
    %1251 = vmatpush1.msra.mxu0 0.0
    %1252 = vmatprep.subr.mxu0 0.0
    %1253 = vmatpush1.msra.mxu0 0.0
    %1254 = vmatprep.subr.mxu0 0.0
    %1255 = vmatpush1.msra.mxu0 0.0
    %1256 = vmatprep.subr.mxu0 0.0
    %1257 = vmatpush1.msra.mxu0 0.0
    %1258 = vmatprep.subr.mxu0 0.0
    %1259 = vmatpush1.msra.mxu0 0.0
    %1260 = vmatprep.subr.mxu0 0.0
    %1261 = vmatpush1.msra.mxu0 %v423
    %1262 = vmatprep.subr.mxu0 0.0
    %1263 = vmatpush1.msra.mxu0 %v422
    %1264 = vmatprep.subr.mxu0 0.0
    %1265 = vmatpush1.msra.mxu0 %v421
    %1266 = vmatprep.subr.mxu0 0.0
    %1267 = vmatpush1.msra.mxu0 %v420
    %1268 = vmatprep.subr.mxu0 0.0
    %1269 = vmatpush2.msra.mxu0 0.0
    %1270 = vmatprep.subr.mxu0 0.0
    %1271 = vmatpush2.msra.mxu0 0.0
    %1272 = vmatprep.subr.mxu0 0.0
    %1273 = vmatpush2.msra.mxu0 0.0
    %1274 = vmatprep.subr.mxu0 0.0
    %1275 = vmatpush2.msra.mxu0 0.0
    %1276 = vmatprep.subr.mxu0 0.0
    %1277 = vmatpush2.msra.mxu0 0.0
    %1278 = vmatprep.subr.mxu0 0.0
    %1279 = vmatpush2.msra.mxu0 0.0
    %1280 = vmatprep.subr.mxu0 0.0
    %1281 = vmatpush2.msra.mxu0 0.0
    %1282 = vmatprep.subr.mxu0 0.0
    %1283 = vmatpush2.msra.mxu0 0.0
    %1284 = vmatprep.subr.mxu0 0.0
    %1285 = vmatpush2.msra.mxu0 0.0
    %1286 = vmatprep.subr.mxu0 0.0
    %1287 = vmatpush2.msra.mxu0 0.0
    %1288 = vmatprep.subr.mxu0 0.0
    %1289 = vmatpush2.msra.mxu0 0.0
    %1290 = vmatprep.subr.mxu0 0.0
    %1291 = vmatpush2.msra.mxu0 0.0
    %1292 = vmatprep.subr.mxu0 0.0
    %1293 = vmatpush2.msra.mxu0 0.0
    %1294 = vmatprep.subr.mxu0 0.0
    %1295 = vmatpush2.msra.mxu0 0.0
    %1296 = vmatprep.subr.mxu0 0.0
    %1297 = vmatpush2.msra.mxu0 0.0
    %1298 = vmatprep.subr.mxu0 0.0
    %1299 = vmatpush2.msra.mxu0 0.0
    %1300 = vmatprep.mubr.f32.mxu0 0.0
    %1301 = vmatmul.mubr.f32.gmra.mxu0 %v1164
    %v1302 = vpop.f32.mrf.mxu0
    %v1303 = vadd.f32 0.0, %v1302
    %v1304 = vpop.f32.mrf.mxu0
    %1305 = vdwg.mxu0
    %v1307 = vrot.slane %v1233, 2
    %v1309 = vadd.f32 %v231, %v1307
    %v1310 = vxor.u32 %v1309, 2147483648
    %v1311 = vmul.f32 %v1310, 1.442695
    %v1312 = vpow.pop %v1311
    %v1313 = vadd.f32 %v1312, 1.0
    %v1314 = vrcp.pop %v1313
    %v1315 = vmul.f32 1.0, %v1314
    %v1317 = vrot.slane %v1303, 2
    %v1319 = vadd.f32 %v319, %v1317
    %v1320 = vxor.u32 %v1319, 2147483648
    %v1321 = vmul.f32 %v1320, 1.442695
    %v1322 = vpow.pop %v1321
    %v1323 = vadd.f32 %v1322, 1.0
    %v1324 = vrcp.pop %v1323
    %v1325 = vmul.f32 1.0, %v1324
    %1326 = vmatprep.subr.mxu0 0.0
    %1327 = vmatpush1.msra.mxu0 0.0
    %1328 = vmatprep.subr.mxu0 0.0
    %1329 = vmatpush1.msra.mxu0 0.0
    %1330 = vmatprep.subr.mxu0 0.0
    %1331 = vmatpush1.msra.mxu0 0.0
    %1332 = vmatprep.subr.mxu0 0.0
    %1333 = vmatpush1.msra.mxu0 0.0
    %1334 = vmatprep.subr.mxu0 0.0
    %1335 = vmatpush1.msra.mxu0 0.0
    %1336 = vmatprep.subr.mxu0 0.0
    %1337 = vmatpush1.msra.mxu0 0.0
    %1338 = vmatprep.subr.mxu0 0.0
    %1339 = vmatpush1.msra.mxu0 0.0
    %1340 = vmatprep.subr.mxu0 0.0
    %1341 = vmatpush1.msra.mxu0 0.0
    %1342 = vmatprep.subr.mxu0 0.0
    %1343 = vmatpush1.msra.mxu0 0.0
    %1344 = vmatprep.subr.mxu0 0.0
    %1345 = vmatpush1.msra.mxu0 0.0
    %1346 = vmatprep.subr.mxu0 0.0
    %1347 = vmatpush1.msra.mxu0 0.0
    %1348 = vmatprep.subr.mxu0 0.0
    %1349 = vmatpush1.msra.mxu0 0.0
    %1350 = vmatprep.subr.mxu0 0.0
    %1351 = vmatpush1.msra.mxu0 %v428
    %1352 = vmatprep.subr.mxu0 0.0
    %1353 = vmatpush1.msra.mxu0 %v427
    %1354 = vmatprep.subr.mxu0 0.0
    %1355 = vmatpush1.msra.mxu0 %v426
    %1356 = vmatprep.subr.mxu0 0.0
    %1357 = vmatpush1.msra.mxu0 %v425
    %1358 = vmatprep.subr.mxu0 0.0
    %1359 = vmatpush2.msra.mxu0 0.0
    %1360 = vmatprep.subr.mxu0 0.0
    %1361 = vmatpush2.msra.mxu0 0.0
    %1362 = vmatprep.subr.mxu0 0.0
    %1363 = vmatpush2.msra.mxu0 0.0
    %1364 = vmatprep.subr.mxu0 0.0
    %1365 = vmatpush2.msra.mxu0 0.0
    %1366 = vmatprep.subr.mxu0 0.0
    %1367 = vmatpush2.msra.mxu0 0.0
    %1368 = vmatprep.subr.mxu0 0.0
    %1369 = vmatpush2.msra.mxu0 0.0
    %1370 = vmatprep.subr.mxu0 0.0
    %1371 = vmatpush2.msra.mxu0 0.0
    %1372 = vmatprep.subr.mxu0 0.0
    %1373 = vmatpush2.msra.mxu0 0.0
    %1374 = vmatprep.subr.mxu0 0.0
    %1375 = vmatpush2.msra.mxu0 0.0
    %1376 = vmatprep.subr.mxu0 0.0
    %1377 = vmatpush2.msra.mxu0 0.0
    %1378 = vmatprep.subr.mxu0 0.0
    %1379 = vmatpush2.msra.mxu0 0.0
    %1380 = vmatprep.subr.mxu0 0.0
    %1381 = vmatpush2.msra.mxu0 0.0
    %1382 = vmatprep.subr.mxu0 0.0
    %1383 = vmatpush2.msra.mxu0 0.0
    %1384 = vmatprep.subr.mxu0 0.0
    %1385 = vmatpush2.msra.mxu0 0.0
    %1386 = vmatprep.subr.mxu0 0.0
    %1387 = vmatpush2.msra.mxu0 0.0
    %1388 = vmatprep.subr.mxu0 0.0
    %1389 = vmatpush2.msra.mxu0 0.0
    %1390 = vmatprep.mubr.f32.mxu0 0.0
    %1391 = vmatmul.mubr.f32.gmra.mxu0 %v1164
    %v1392 = vpop.f32.mrf.mxu0
    %v1393 = vadd.f32 %v592, %v1392
    %v1394 = vpop.f32.mrf.mxu0
    %1395 = vdwg.mxu0
    %v1397 = vrot.slane %v1393, 2
    %v1399 = vmul.f32 %v1315, %v1397
    %v1400 = vadd.f32 %v407, %v1399
    %v1401 = vtanh.pop %v1400
    %v1402 = vsub.f32 1.0, %v1325
    %v1403 = vmul.f32 %v1402, %v1401
    %v1404 = vrot.slane %v1161, 6
    %v1406 = vmul.f32 %v1325, %v1404
    %v1407 = vadd.f32 %v1403, %v1406
    %v1409 = vrot.slane %v1407, 6
    %v1410 = vsel %vm430, %v1409, 0
    %1412 = vmatprep.subr.mxu0 0.0
    %1413 = vmatpush1.msra.mxu0 0.0
    %1414 = vmatprep.subr.mxu0 0.0
    %1415 = vmatpush1.msra.mxu0 0.0
    %1416 = vmatprep.subr.mxu0 0.0
    %1417 = vmatpush1.msra.mxu0 0.0
    %1418 = vmatprep.subr.mxu0 0.0
    %1419 = vmatpush1.msra.mxu0 0.0
    %1420 = vmatprep.subr.mxu0 0.0
    %1421 = vmatpush1.msra.mxu0 0.0
    %1422 = vmatprep.subr.mxu0 0.0
    %1423 = vmatpush1.msra.mxu0 0.0
    %1424 = vmatprep.subr.mxu0 0.0
    %1425 = vmatpush1.msra.mxu0 0.0
    %1426 = vmatprep.subr.mxu0 0.0
    %1427 = vmatpush1.msra.mxu0 0.0
    %1428 = vmatprep.subr.mxu0 0.0
    %1429 = vmatpush1.msra.mxu0 0.0
    %1430 = vmatprep.subr.mxu0 0.0
    %1431 = vmatpush1.msra.mxu0 0.0
    %1432 = vmatprep.subr.mxu0 0.0
    %1433 = vmatpush1.msra.mxu0 0.0
    %1434 = vmatprep.subr.mxu0 0.0
    %1435 = vmatpush1.msra.mxu0 0.0
    %1436 = vmatprep.subr.mxu0 0.0
    %1437 = vmatpush1.msra.mxu0 %v418
    %1438 = vmatprep.subr.mxu0 0.0
    %1439 = vmatpush1.msra.mxu0 %v417
    %1440 = vmatprep.subr.mxu0 0.0
    %1441 = vmatpush1.msra.mxu0 %v416
    %1442 = vmatprep.subr.mxu0 0.0
    %1443 = vmatpush1.msra.mxu0 %v415
    %1444 = vmatprep.subr.mxu0 0.0
    %1445 = vmatpush2.msra.mxu0 0.0
    %1446 = vmatprep.subr.mxu0 0.0
    %1447 = vmatpush2.msra.mxu0 0.0
    %1448 = vmatprep.subr.mxu0 0.0
    %1449 = vmatpush2.msra.mxu0 0.0
    %1450 = vmatprep.subr.mxu0 0.0
    %1451 = vmatpush2.msra.mxu0 0.0
    %1452 = vmatprep.subr.mxu0 0.0
    %1453 = vmatpush2.msra.mxu0 0.0
    %1454 = vmatprep.subr.mxu0 0.0
    %1455 = vmatpush2.msra.mxu0 0.0
    %1456 = vmatprep.subr.mxu0 0.0
    %1457 = vmatpush2.msra.mxu0 0.0
    %1458 = vmatprep.subr.mxu0 0.0
    %1459 = vmatpush2.msra.mxu0 0.0
    %1460 = vmatprep.subr.mxu0 0.0
    %1461 = vmatpush2.msra.mxu0 0.0
    %1462 = vmatprep.subr.mxu0 0.0
    %1463 = vmatpush2.msra.mxu0 0.0
    %1464 = vmatprep.subr.mxu0 0.0
    %1465 = vmatpush2.msra.mxu0 0.0
    %1466 = vmatprep.subr.mxu0 0.0
    %1467 = vmatpush2.msra.mxu0 0.0
    %1468 = vmatprep.subr.mxu0 0.0
    %1469 = vmatpush2.msra.mxu0 0.0
    %1470 = vmatprep.subr.mxu0 0.0
    %1471 = vmatpush2.msra.mxu0 0.0
    %1472 = vmatprep.subr.mxu0 0.0
    %1473 = vmatpush2.msra.mxu0 0.0
    %1474 = vmatprep.subr.mxu0 0.0
    %1475 = vmatpush2.msra.mxu0 0.0
    %1476 = vmatprep.mubr.f32.mxu0 0.0
    %1477 = vmatmul.mubr.f32.gmra.mxu0 %v1410
    %v1478 = vpop.f32.mrf.mxu0
    %v1479 = vadd.f32 0.0, %v1478
    %v1480 = vpop.f32.mrf.mxu0
    %1481 = vdwg.mxu0
    %1482 = vmatprep.subr.mxu0 0.0
    %1483 = vmatpush1.msra.mxu0 0.0
    %1484 = vmatprep.subr.mxu0 0.0
    %1485 = vmatpush1.msra.mxu0 0.0
    %1486 = vmatprep.subr.mxu0 0.0
    %1487 = vmatpush1.msra.mxu0 0.0
    %1488 = vmatprep.subr.mxu0 0.0
    %1489 = vmatpush1.msra.mxu0 0.0
    %1490 = vmatprep.subr.mxu0 0.0
    %1491 = vmatpush1.msra.mxu0 0.0
    %1492 = vmatprep.subr.mxu0 0.0
    %1493 = vmatpush1.msra.mxu0 0.0
    %1494 = vmatprep.subr.mxu0 0.0
    %1495 = vmatpush1.msra.mxu0 0.0
    %1496 = vmatprep.subr.mxu0 0.0
    %1497 = vmatpush1.msra.mxu0 0.0
    %1498 = vmatprep.subr.mxu0 0.0
    %1499 = vmatpush1.msra.mxu0 0.0
    %1500 = vmatprep.subr.mxu0 0.0
    %1501 = vmatpush1.msra.mxu0 0.0
    %1502 = vmatprep.subr.mxu0 0.0
    %1503 = vmatpush1.msra.mxu0 0.0
    %1504 = vmatprep.subr.mxu0 0.0
    %1505 = vmatpush1.msra.mxu0 0.0
    %1506 = vmatprep.subr.mxu0 0.0
    %1507 = vmatpush1.msra.mxu0 %v423
    %1508 = vmatprep.subr.mxu0 0.0
    %1509 = vmatpush1.msra.mxu0 %v422
    %1510 = vmatprep.subr.mxu0 0.0
    %1511 = vmatpush1.msra.mxu0 %v421
    %1512 = vmatprep.subr.mxu0 0.0
    %1513 = vmatpush1.msra.mxu0 %v420
    %1514 = vmatprep.subr.mxu0 0.0
    %1515 = vmatpush2.msra.mxu0 0.0
    %1516 = vmatprep.subr.mxu0 0.0
    %1517 = vmatpush2.msra.mxu0 0.0
    %1518 = vmatprep.subr.mxu0 0.0
    %1519 = vmatpush2.msra.mxu0 0.0
    %1520 = vmatprep.subr.mxu0 0.0
    %1521 = vmatpush2.msra.mxu0 0.0
    %1522 = vmatprep.subr.mxu0 0.0
    %1523 = vmatpush2.msra.mxu0 0.0
    %1524 = vmatprep.subr.mxu0 0.0
    %1525 = vmatpush2.msra.mxu0 0.0
    %1526 = vmatprep.subr.mxu0 0.0
    %1527 = vmatpush2.msra.mxu0 0.0
    %1528 = vmatprep.subr.mxu0 0.0
    %1529 = vmatpush2.msra.mxu0 0.0
    %1530 = vmatprep.subr.mxu0 0.0
    %1531 = vmatpush2.msra.mxu0 0.0
    %1532 = vmatprep.subr.mxu0 0.0
    %1533 = vmatpush2.msra.mxu0 0.0
    %1534 = vmatprep.subr.mxu0 0.0
    %1535 = vmatpush2.msra.mxu0 0.0
    %1536 = vmatprep.subr.mxu0 0.0
    %1537 = vmatpush2.msra.mxu0 0.0
    %1538 = vmatprep.subr.mxu0 0.0
    %1539 = vmatpush2.msra.mxu0 0.0
    %1540 = vmatprep.subr.mxu0 0.0
    %1541 = vmatpush2.msra.mxu0 0.0
    %1542 = vmatprep.subr.mxu0 0.0
    %1543 = vmatpush2.msra.mxu0 0.0
    %1544 = vmatprep.subr.mxu0 0.0
    %1545 = vmatpush2.msra.mxu0 0.0
    %1546 = vmatprep.mubr.f32.mxu0 0.0
    %1547 = vmatmul.mubr.f32.gmra.mxu0 %v1410
    %v1548 = vpop.f32.mrf.mxu0
    %v1549 = vadd.f32 0.0, %v1548
    %v1550 = vpop.f32.mrf.mxu0
    %1551 = vdwg.mxu0
    %v1552 = vadd.f32 %v236, %v1479
    %v1553 = vxor.u32 %v1552, 2147483648
    %v1554 = vmul.f32 %v1553, 1.442695
    %v1555 = vpow.pop %v1554
    %v1556 = vadd.f32 %v1555, 1.0
    %v1557 = vrcp.pop %v1556
    %v1558 = vmul.f32 1.0, %v1557
    %v1559 = vadd.f32 %v324, %v1549
    %v1560 = vxor.u32 %v1559, 2147483648
    %v1561 = vmul.f32 %v1560, 1.442695
    %v1562 = vpow.pop %v1561
    %v1563 = vadd.f32 %v1562, 1.0
    %v1564 = vrcp.pop %v1563
    %v1565 = vmul.f32 1.0, %v1564
    %1566 = vmatprep.subr.mxu0 0.0
    %1567 = vmatpush1.msra.mxu0 0.0
    %1568 = vmatprep.subr.mxu0 0.0
    %1569 = vmatpush1.msra.mxu0 0.0
    %1570 = vmatprep.subr.mxu0 0.0
    %1571 = vmatpush1.msra.mxu0 0.0
    %1572 = vmatprep.subr.mxu0 0.0
    %1573 = vmatpush1.msra.mxu0 0.0
    %1574 = vmatprep.subr.mxu0 0.0
    %1575 = vmatpush1.msra.mxu0 0.0
    %1576 = vmatprep.subr.mxu0 0.0
    %1577 = vmatpush1.msra.mxu0 0.0
    %1578 = vmatprep.subr.mxu0 0.0
    %1579 = vmatpush1.msra.mxu0 0.0
    %1580 = vmatprep.subr.mxu0 0.0
    %1581 = vmatpush1.msra.mxu0 0.0
    %1582 = vmatprep.subr.mxu0 0.0
    %1583 = vmatpush1.msra.mxu0 0.0
    %1584 = vmatprep.subr.mxu0 0.0
    %1585 = vmatpush1.msra.mxu0 0.0
    %1586 = vmatprep.subr.mxu0 0.0
    %1587 = vmatpush1.msra.mxu0 0.0
    %1588 = vmatprep.subr.mxu0 0.0
    %1589 = vmatpush1.msra.mxu0 0.0
    %1590 = vmatprep.subr.mxu0 0.0
    %1591 = vmatpush1.msra.mxu0 %v428
    %1592 = vmatprep.subr.mxu0 0.0
    %1593 = vmatpush1.msra.mxu0 %v427
    %1594 = vmatprep.subr.mxu0 0.0
    %1595 = vmatpush1.msra.mxu0 %v426
    %1596 = vmatprep.subr.mxu0 0.0
    %1597 = vmatpush1.msra.mxu0 %v425
    %1598 = vmatprep.subr.mxu0 0.0
    %1599 = vmatpush2.msra.mxu0 0.0
    %1600 = vmatprep.subr.mxu0 0.0
    %1601 = vmatpush2.msra.mxu0 0.0
    %1602 = vmatprep.subr.mxu0 0.0
    %1603 = vmatpush2.msra.mxu0 0.0
    %1604 = vmatprep.subr.mxu0 0.0
    %1605 = vmatpush2.msra.mxu0 0.0
    %1606 = vmatprep.subr.mxu0 0.0
    %1607 = vmatpush2.msra.mxu0 0.0
    %1608 = vmatprep.subr.mxu0 0.0
    %1609 = vmatpush2.msra.mxu0 0.0
    %1610 = vmatprep.subr.mxu0 0.0
    %1611 = vmatpush2.msra.mxu0 0.0
    %1612 = vmatprep.subr.mxu0 0.0
    %1613 = vmatpush2.msra.mxu0 0.0
    %1614 = vmatprep.subr.mxu0 0.0
    %1615 = vmatpush2.msra.mxu0 0.0
    %1616 = vmatprep.subr.mxu0 0.0
    %1617 = vmatpush2.msra.mxu0 0.0
    %1618 = vmatprep.subr.mxu0 0.0
    %1619 = vmatpush2.msra.mxu0 0.0
    %1620 = vmatprep.subr.mxu0 0.0
    %1621 = vmatpush2.msra.mxu0 0.0
    %1622 = vmatprep.subr.mxu0 0.0
    %1623 = vmatpush2.msra.mxu0 0.0
    %1624 = vmatprep.subr.mxu0 0.0
    %1625 = vmatpush2.msra.mxu0 0.0
    %1626 = vmatprep.subr.mxu0 0.0
    %1627 = vmatpush2.msra.mxu0 0.0
    %1628 = vmatprep.subr.mxu0 0.0
    %1629 = vmatpush2.msra.mxu0 0.0
    %1630 = vmatprep.mubr.f32.mxu0 0.0
    %1631 = vmatmul.mubr.f32.gmra.mxu0 %v1410
    %v1632 = vpop.f32.mrf.mxu0
    %v1633 = vadd.f32 %v592, %v1632
    %v1634 = vpop.f32.mrf.mxu0
    %1635 = vdwg.mxu0
    %v1636 = vmul.f32 %v1558, %v1633
    %v1637 = vadd.f32 %v412, %v1636
    %v1638 = vtanh.pop %v1637
    %v1639 = vsub.f32 1.0, %v1565
    %v1640 = vmul.f32 %v1639, %v1638
    %v1642 = vmul.f32 %v1565, %v1409
    %v1643 = vadd.f32 %v1640, %v1642
    %v1645 = vsel %vm430, %v1643, 0
    %1647 = vmatprep.subr.mxu0 0.0
    %1648 = vmatpush1.msra.mxu0 0.0
    %1649 = vmatprep.subr.mxu0 0.0
    %1650 = vmatpush1.msra.mxu0 0.0
    %1651 = vmatprep.subr.mxu0 0.0
    %1652 = vmatpush1.msra.mxu0 0.0
    %1653 = vmatprep.subr.mxu0 0.0
    %1654 = vmatpush1.msra.mxu0 0.0
    %1655 = vmatprep.subr.mxu0 0.0
    %1656 = vmatpush1.msra.mxu0 0.0
    %1657 = vmatprep.subr.mxu0 0.0
    %1658 = vmatpush1.msra.mxu0 0.0
    %1659 = vmatprep.subr.mxu0 0.0
    %1660 = vmatpush1.msra.mxu0 0.0
    %1661 = vmatprep.subr.mxu0 0.0
    %1662 = vmatpush1.msra.mxu0 0.0
    %1663 = vmatprep.subr.mxu0 0.0
    %1664 = vmatpush1.msra.mxu0 0.0
    %1665 = vmatprep.subr.mxu0 0.0
    %1666 = vmatpush1.msra.mxu0 0.0
    %1667 = vmatprep.subr.mxu0 0.0
    %1668 = vmatpush1.msra.mxu0 0.0
    %1669 = vmatprep.subr.mxu0 0.0
    %1670 = vmatpush1.msra.mxu0 0.0
    %1671 = vmatprep.subr.mxu0 0.0
    %1672 = vmatpush1.msra.mxu0 %v418
    %1673 = vmatprep.subr.mxu0 0.0
    %1674 = vmatpush1.msra.mxu0 %v417
    %1675 = vmatprep.subr.mxu0 0.0
    %1676 = vmatpush1.msra.mxu0 %v416
    %1677 = vmatprep.subr.mxu0 0.0
    %1678 = vmatpush1.msra.mxu0 %v415
    %1679 = vmatprep.subr.mxu0 0.0
    %1680 = vmatpush2.msra.mxu0 0.0
    %1681 = vmatprep.subr.mxu0 0.0
    %1682 = vmatpush2.msra.mxu0 0.0
    %1683 = vmatprep.subr.mxu0 0.0
    %1684 = vmatpush2.msra.mxu0 0.0
    %1685 = vmatprep.subr.mxu0 0.0
    %1686 = vmatpush2.msra.mxu0 0.0
    %1687 = vmatprep.subr.mxu0 0.0
    %1688 = vmatpush2.msra.mxu0 0.0
    %1689 = vmatprep.subr.mxu0 0.0
    %1690 = vmatpush2.msra.mxu0 0.0
    %1691 = vmatprep.subr.mxu0 0.0
    %1692 = vmatpush2.msra.mxu0 0.0
    %1693 = vmatprep.subr.mxu0 0.0
    %1694 = vmatpush2.msra.mxu0 0.0
    %1695 = vmatprep.subr.mxu0 0.0
    %1696 = vmatpush2.msra.mxu0 0.0
    %1697 = vmatprep.subr.mxu0 0.0
    %1698 = vmatpush2.msra.mxu0 0.0
    %1699 = vmatprep.subr.mxu0 0.0
    %1700 = vmatpush2.msra.mxu0 0.0
    %1701 = vmatprep.subr.mxu0 0.0
    %1702 = vmatpush2.msra.mxu0 0.0
    %1703 = vmatprep.subr.mxu0 0.0
    %1704 = vmatpush2.msra.mxu0 0.0
    %1705 = vmatprep.subr.mxu0 0.0
    %1706 = vmatpush2.msra.mxu0 0.0
    %1707 = vmatprep.subr.mxu0 0.0
    %1708 = vmatpush2.msra.mxu0 0.0
    %1709 = vmatprep.subr.mxu0 0.0
    %1710 = vmatpush2.msra.mxu0 0.0
    %1711 = vmatprep.mubr.f32.mxu0 0.0
    %1712 = vmatmul.mubr.f32.gmra.mxu0 %v1645
    %v1713 = vpop.f32.mrf.mxu0
    %v1714 = vadd.f32 0.0, %v1713
    %v1715 = vpop.f32.mrf.mxu0
    %1716 = vdwg.mxu0
    %1717 = vmatprep.subr.mxu0 0.0
    %1718 = vmatpush1.msra.mxu0 0.0
    %1719 = vmatprep.subr.mxu0 0.0
    %1720 = vmatpush1.msra.mxu0 0.0
    %1721 = vmatprep.subr.mxu0 0.0
    %1722 = vmatpush1.msra.mxu0 0.0
    %1723 = vmatprep.subr.mxu0 0.0
    %1724 = vmatpush1.msra.mxu0 0.0
    %1725 = vmatprep.subr.mxu0 0.0
    %1726 = vmatpush1.msra.mxu0 0.0
    %1727 = vmatprep.subr.mxu0 0.0
    %1728 = vmatpush1.msra.mxu0 0.0
    %1729 = vmatprep.subr.mxu0 0.0
    %1730 = vmatpush1.msra.mxu0 0.0
    %1731 = vmatprep.subr.mxu0 0.0
    %1732 = vmatpush1.msra.mxu0 0.0
    %1733 = vmatprep.subr.mxu0 0.0
    %1734 = vmatpush1.msra.mxu0 0.0
    %1735 = vmatprep.subr.mxu0 0.0
    %1736 = vmatpush1.msra.mxu0 0.0
    %1737 = vmatprep.subr.mxu0 0.0
    %1738 = vmatpush1.msra.mxu0 0.0
    %1739 = vmatprep.subr.mxu0 0.0
    %1740 = vmatpush1.msra.mxu0 0.0
    %1741 = vmatprep.subr.mxu0 0.0
    %1742 = vmatpush1.msra.mxu0 %v423
    %1743 = vmatprep.subr.mxu0 0.0
    %1744 = vmatpush1.msra.mxu0 %v422
    %1745 = vmatprep.subr.mxu0 0.0
    %1746 = vmatpush1.msra.mxu0 %v421
    %1747 = vmatprep.subr.mxu0 0.0
    %1748 = vmatpush1.msra.mxu0 %v420
    %1749 = vmatprep.subr.mxu0 0.0
    %1750 = vmatpush2.msra.mxu0 0.0
    %1751 = vmatprep.subr.mxu0 0.0
    %1752 = vmatpush2.msra.mxu0 0.0
    %1753 = vmatprep.subr.mxu0 0.0
    %1754 = vmatpush2.msra.mxu0 0.0
    %1755 = vmatprep.subr.mxu0 0.0
    %1756 = vmatpush2.msra.mxu0 0.0
    %1757 = vmatprep.subr.mxu0 0.0
    %1758 = vmatpush2.msra.mxu0 0.0
    %1759 = vmatprep.subr.mxu0 0.0
    %1760 = vmatpush2.msra.mxu0 0.0
    %1761 = vmatprep.subr.mxu0 0.0
    %1762 = vmatpush2.msra.mxu0 0.0
    %1763 = vmatprep.subr.mxu0 0.0
    %1764 = vmatpush2.msra.mxu0 0.0
    %1765 = vmatprep.subr.mxu0 0.0
    %1766 = vmatpush2.msra.mxu0 0.0
    %1767 = vmatprep.subr.mxu0 0.0
    %1768 = vmatpush2.msra.mxu0 0.0
    %1769 = vmatprep.subr.mxu0 0.0
    %1770 = vmatpush2.msra.mxu0 0.0
    %1771 = vmatprep.subr.mxu0 0.0
    %1772 = vmatpush2.msra.mxu0 0.0
    %1773 = vmatprep.subr.mxu0 0.0
    %1774 = vmatpush2.msra.mxu0 0.0
    %1775 = vmatprep.subr.mxu0 0.0
    %1776 = vmatpush2.msra.mxu0 0.0
    %1777 = vmatprep.subr.mxu0 0.0
    %1778 = vmatpush2.msra.mxu0 0.0
    %1779 = vmatprep.subr.mxu0 0.0
    %1780 = vmatpush2.msra.mxu0 0.0
    %1781 = vmatprep.mubr.f32.mxu0 0.0
    %1782 = vmatmul.mubr.f32.gmra.mxu0 %v1645
    %v1783 = vpop.f32.mrf.mxu0
    %v1784 = vadd.f32 0.0, %v1783
    %v1785 = vpop.f32.mrf.mxu0
    %1786 = vdwg.mxu0
    %v1788 = vrot.slane %v1714, 6
    %v1790 = vadd.f32 %v236, %v1788
    %v1791 = vxor.u32 %v1790, 2147483648
    %v1792 = vmul.f32 %v1791, 1.442695
    %v1793 = vpow.pop %v1792
    %v1794 = vadd.f32 %v1793, 1.0
    %v1795 = vrcp.pop %v1794
    %v1796 = vmul.f32 1.0, %v1795
    %v1798 = vrot.slane %v1784, 6
    %v1800 = vadd.f32 %v324, %v1798
    %v1801 = vxor.u32 %v1800, 2147483648
    %v1802 = vmul.f32 %v1801, 1.442695
    %v1803 = vpow.pop %v1802
    %v1804 = vadd.f32 %v1803, 1.0
    %v1805 = vrcp.pop %v1804
    %v1806 = vmul.f32 1.0, %v1805
    %1807 = vmatprep.subr.mxu0 0.0
    %1808 = vmatpush1.msra.mxu0 0.0
    %1809 = vmatprep.subr.mxu0 0.0
    %1810 = vmatpush1.msra.mxu0 0.0
    %1811 = vmatprep.subr.mxu0 0.0
    %1812 = vmatpush1.msra.mxu0 0.0
    %1813 = vmatprep.subr.mxu0 0.0
    %1814 = vmatpush1.msra.mxu0 0.0
    %1815 = vmatprep.subr.mxu0 0.0
    %1816 = vmatpush1.msra.mxu0 0.0
    %1817 = vmatprep.subr.mxu0 0.0
    %1818 = vmatpush1.msra.mxu0 0.0
    %1819 = vmatprep.subr.mxu0 0.0
    %1820 = vmatpush1.msra.mxu0 0.0
    %1821 = vmatprep.subr.mxu0 0.0
    %1822 = vmatpush1.msra.mxu0 0.0
    %1823 = vmatprep.subr.mxu0 0.0
    %1824 = vmatpush1.msra.mxu0 0.0
    %1825 = vmatprep.subr.mxu0 0.0
    %1826 = vmatpush1.msra.mxu0 0.0
    %1827 = vmatprep.subr.mxu0 0.0
    %1828 = vmatpush1.msra.mxu0 0.0
    %1829 = vmatprep.subr.mxu0 0.0
    %1830 = vmatpush1.msra.mxu0 0.0
    %1831 = vmatprep.subr.mxu0 0.0
    %1832 = vmatpush1.msra.mxu0 %v428
    %1833 = vmatprep.subr.mxu0 0.0
    %1834 = vmatpush1.msra.mxu0 %v427
    %1835 = vmatprep.subr.mxu0 0.0
    %1836 = vmatpush1.msra.mxu0 %v426
    %1837 = vmatprep.subr.mxu0 0.0
    %1838 = vmatpush1.msra.mxu0 %v425
    %1839 = vmatprep.subr.mxu0 0.0
    %1840 = vmatpush2.msra.mxu0 0.0
    %1841 = vmatprep.subr.mxu0 0.0
    %1842 = vmatpush2.msra.mxu0 0.0
    %1843 = vmatprep.subr.mxu0 0.0
    %1844 = vmatpush2.msra.mxu0 0.0
    %1845 = vmatprep.subr.mxu0 0.0
    %1846 = vmatpush2.msra.mxu0 0.0
    %1847 = vmatprep.subr.mxu0 0.0
    %1848 = vmatpush2.msra.mxu0 0.0
    %1849 = vmatprep.subr.mxu0 0.0
    %1850 = vmatpush2.msra.mxu0 0.0
    %1851 = vmatprep.subr.mxu0 0.0
    %1852 = vmatpush2.msra.mxu0 0.0
    %1853 = vmatprep.subr.mxu0 0.0
    %1854 = vmatpush2.msra.mxu0 0.0
    %1855 = vmatprep.subr.mxu0 0.0
    %1856 = vmatpush2.msra.mxu0 0.0
    %1857 = vmatprep.subr.mxu0 0.0
    %1858 = vmatpush2.msra.mxu0 0.0
    %1859 = vmatprep.subr.mxu0 0.0
    %1860 = vmatpush2.msra.mxu0 0.0
    %1861 = vmatprep.subr.mxu0 0.0
    %1862 = vmatpush2.msra.mxu0 0.0
    %1863 = vmatprep.subr.mxu0 0.0
    %1864 = vmatpush2.msra.mxu0 0.0
    %1865 = vmatprep.subr.mxu0 0.0
    %1866 = vmatpush2.msra.mxu0 0.0
    %1867 = vmatprep.subr.mxu0 0.0
    %1868 = vmatpush2.msra.mxu0 0.0
    %1869 = vmatprep.subr.mxu0 0.0
    %1870 = vmatpush2.msra.mxu0 0.0
    %1871 = vmatprep.mubr.f32.mxu0 0.0
    %1872 = vmatmul.mubr.f32.gmra.mxu0 %v1645
    %v1873 = vpop.f32.mrf.mxu0
    %v1874 = vadd.f32 %v592, %v1873
    %v1875 = vpop.f32.mrf.mxu0
    %1876 = vdwg.mxu0
    %v1878 = vrot.slane %v1874, 6
    %v1880 = vmul.f32 %v1796, %v1878
    %v1881 = vadd.f32 %v412, %v1880
    %v1882 = vtanh.pop %v1881
    %v1883 = vsub.f32 1.0, %v1806
    %v1884 = vmul.f32 %v1883, %v1882
    %v1885 = vrot.slane %v1643, 6
    %v1887 = vmul.f32 %v1806, %v1885
    %v1888 = vadd.f32 %v1884, %v1887
    %v1890 = vrot.slane %v1888, 2
    %v1891 = vsel %vm430, %v1890, 0
    %1893 = vmatprep.subr.mxu0 0.0
    %1894 = vmatpush1.msra.mxu0 0.0
    %1895 = vmatprep.subr.mxu0 0.0
    %1896 = vmatpush1.msra.mxu0 0.0
    %1897 = vmatprep.subr.mxu0 0.0
    %1898 = vmatpush1.msra.mxu0 0.0
    %1899 = vmatprep.subr.mxu0 0.0
    %1900 = vmatpush1.msra.mxu0 0.0
    %1901 = vmatprep.subr.mxu0 0.0
    %1902 = vmatpush1.msra.mxu0 0.0
    %1903 = vmatprep.subr.mxu0 0.0
    %1904 = vmatpush1.msra.mxu0 0.0
    %1905 = vmatprep.subr.mxu0 0.0
    %1906 = vmatpush1.msra.mxu0 0.0
    %1907 = vmatprep.subr.mxu0 0.0
    %1908 = vmatpush1.msra.mxu0 0.0
    %1909 = vmatprep.subr.mxu0 0.0
    %1910 = vmatpush1.msra.mxu0 0.0
    %1911 = vmatprep.subr.mxu0 0.0
    %1912 = vmatpush1.msra.mxu0 0.0
    %1913 = vmatprep.subr.mxu0 0.0
    %1914 = vmatpush1.msra.mxu0 0.0
    %1915 = vmatprep.subr.mxu0 0.0
    %1916 = vmatpush1.msra.mxu0 0.0
    %1917 = vmatprep.subr.mxu0 0.0
    %1918 = vmatpush1.msra.mxu0 %v418
    %1919 = vmatprep.subr.mxu0 0.0
    %1920 = vmatpush1.msra.mxu0 %v417
    %1921 = vmatprep.subr.mxu0 0.0
    %1922 = vmatpush1.msra.mxu0 %v416
    %1923 = vmatprep.subr.mxu0 0.0
    %1924 = vmatpush1.msra.mxu0 %v415
    %1925 = vmatprep.subr.mxu0 0.0
    %1926 = vmatpush2.msra.mxu0 0.0
    %1927 = vmatprep.subr.mxu0 0.0
    %1928 = vmatpush2.msra.mxu0 0.0
    %1929 = vmatprep.subr.mxu0 0.0
    %1930 = vmatpush2.msra.mxu0 0.0
    %1931 = vmatprep.subr.mxu0 0.0
    %1932 = vmatpush2.msra.mxu0 0.0
    %1933 = vmatprep.subr.mxu0 0.0
    %1934 = vmatpush2.msra.mxu0 0.0
    %1935 = vmatprep.subr.mxu0 0.0
    %1936 = vmatpush2.msra.mxu0 0.0
    %1937 = vmatprep.subr.mxu0 0.0
    %1938 = vmatpush2.msra.mxu0 0.0
    %1939 = vmatprep.subr.mxu0 0.0
    %1940 = vmatpush2.msra.mxu0 0.0
    %1941 = vmatprep.subr.mxu0 0.0
    %1942 = vmatpush2.msra.mxu0 0.0
    %1943 = vmatprep.subr.mxu0 0.0
    %1944 = vmatpush2.msra.mxu0 0.0
    %1945 = vmatprep.subr.mxu0 0.0
    %1946 = vmatpush2.msra.mxu0 0.0
    %1947 = vmatprep.subr.mxu0 0.0
    %1948 = vmatpush2.msra.mxu0 0.0
    %1949 = vmatprep.subr.mxu0 0.0
    %1950 = vmatpush2.msra.mxu0 0.0
    %1951 = vmatprep.subr.mxu0 0.0
    %1952 = vmatpush2.msra.mxu0 0.0
    %1953 = vmatprep.subr.mxu0 0.0
    %1954 = vmatpush2.msra.mxu0 0.0
    %1955 = vmatprep.subr.mxu0 0.0
    %1956 = vmatpush2.msra.mxu0 0.0
    %1957 = vmatprep.mubr.f32.mxu0 0.0
    %1958 = vmatmul.mubr.f32.gmra.mxu0 %v1891
    %v1959 = vpop.f32.mrf.mxu0
    %v1960 = vadd.f32 0.0, %v1959
    %v1961 = vpop.f32.mrf.mxu0
    %1962 = vdwg.mxu0
    %1963 = vmatprep.subr.mxu0 0.0
    %1964 = vmatpush1.msra.mxu0 0.0
    %1965 = vmatprep.subr.mxu0 0.0
    %1966 = vmatpush1.msra.mxu0 0.0
    %1967 = vmatprep.subr.mxu0 0.0
    %1968 = vmatpush1.msra.mxu0 0.0
    %1969 = vmatprep.subr.mxu0 0.0
    %1970 = vmatpush1.msra.mxu0 0.0
    %1971 = vmatprep.subr.mxu0 0.0
    %1972 = vmatpush1.msra.mxu0 0.0
    %1973 = vmatprep.subr.mxu0 0.0
    %1974 = vmatpush1.msra.mxu0 0.0
    %1975 = vmatprep.subr.mxu0 0.0
    %1976 = vmatpush1.msra.mxu0 0.0
    %1977 = vmatprep.subr.mxu0 0.0
    %1978 = vmatpush1.msra.mxu0 0.0
    %1979 = vmatprep.subr.mxu0 0.0
    %1980 = vmatpush1.msra.mxu0 0.0
    %1981 = vmatprep.subr.mxu0 0.0
    %1982 = vmatpush1.msra.mxu0 0.0
    %1983 = vmatprep.subr.mxu0 0.0
    %1984 = vmatpush1.msra.mxu0 0.0
    %1985 = vmatprep.subr.mxu0 0.0
    %1986 = vmatpush1.msra.mxu0 0.0
    %1987 = vmatprep.subr.mxu0 0.0
    %1988 = vmatpush1.msra.mxu0 %v423
    %1989 = vmatprep.subr.mxu0 0.0
    %1990 = vmatpush1.msra.mxu0 %v422
    %1991 = vmatprep.subr.mxu0 0.0
    %1992 = vmatpush1.msra.mxu0 %v421
    %1993 = vmatprep.subr.mxu0 0.0
    %1994 = vmatpush1.msra.mxu0 %v420
    %1995 = vmatprep.subr.mxu0 0.0
    %1996 = vmatpush2.msra.mxu0 0.0
    %1997 = vmatprep.subr.mxu0 0.0
    %1998 = vmatpush2.msra.mxu0 0.0
    %1999 = vmatprep.subr.mxu0 0.0
    %2000 = vmatpush2.msra.mxu0 0.0
    %2001 = vmatprep.subr.mxu0 0.0
    %2002 = vmatpush2.msra.mxu0 0.0
    %2003 = vmatprep.subr.mxu0 0.0
    %2004 = vmatpush2.msra.mxu0 0.0
    %2005 = vmatprep.subr.mxu0 0.0
    %2006 = vmatpush2.msra.mxu0 0.0
    %2007 = vmatprep.subr.mxu0 0.0
    %2008 = vmatpush2.msra.mxu0 0.0
    %2009 = vmatprep.subr.mxu0 0.0
    %2010 = vmatpush2.msra.mxu0 0.0
    %2011 = vmatprep.subr.mxu0 0.0
    %2012 = vmatpush2.msra.mxu0 0.0
    %2013 = vmatprep.subr.mxu0 0.0
    %2014 = vmatpush2.msra.mxu0 0.0
    %2015 = vmatprep.subr.mxu0 0.0
    %2016 = vmatpush2.msra.mxu0 0.0
    %2017 = vmatprep.subr.mxu0 0.0
    %2018 = vmatpush2.msra.mxu0 0.0
    %2019 = vmatprep.subr.mxu0 0.0
    %2020 = vmatpush2.msra.mxu0 0.0
    %2021 = vmatprep.subr.mxu0 0.0
    %2022 = vmatpush2.msra.mxu0 0.0
    %2023 = vmatprep.subr.mxu0 0.0
    %2024 = vmatpush2.msra.mxu0 0.0
    %2025 = vmatprep.subr.mxu0 0.0
    %2026 = vmatpush2.msra.mxu0 0.0
    %2027 = vmatprep.mubr.f32.mxu0 0.0
    %2028 = vmatmul.mubr.f32.gmra.mxu0 %v1891
    %v2029 = vpop.f32.mrf.mxu0
    %v2030 = vadd.f32 0.0, %v2029
    %v2031 = vpop.f32.mrf.mxu0
    %2032 = vdwg.mxu0
    %v2034 = vrot.slane %v1960, 4
    %v2036 = vadd.f32 %v236, %v2034
    %v2037 = vxor.u32 %v2036, 2147483648
    %v2038 = vmul.f32 %v2037, 1.442695
    %v2039 = vpow.pop %v2038
    %v2040 = vadd.f32 %v2039, 1.0
    %v2041 = vrcp.pop %v2040
    %v2042 = vmul.f32 1.0, %v2041
    %v2044 = vrot.slane %v2030, 4
    %v2046 = vadd.f32 %v324, %v2044
    %v2047 = vxor.u32 %v2046, 2147483648
    %v2048 = vmul.f32 %v2047, 1.442695
    %v2049 = vpow.pop %v2048
    %v2050 = vadd.f32 %v2049, 1.0
    %v2051 = vrcp.pop %v2050
    %v2052 = vmul.f32 1.0, %v2051
    %2053 = vmatprep.subr.mxu0 0.0
    %2054 = vmatpush1.msra.mxu0 0.0
    %2055 = vmatprep.subr.mxu0 0.0
    %2056 = vmatpush1.msra.mxu0 0.0
    %2057 = vmatprep.subr.mxu0 0.0
    %2058 = vmatpush1.msra.mxu0 0.0
    %2059 = vmatprep.subr.mxu0 0.0
    %2060 = vmatpush1.msra.mxu0 0.0
    %2061 = vmatprep.subr.mxu0 0.0
    %2062 = vmatpush1.msra.mxu0 0.0
    %2063 = vmatprep.subr.mxu0 0.0
    %2064 = vmatpush1.msra.mxu0 0.0
    %2065 = vmatprep.subr.mxu0 0.0
    %2066 = vmatpush1.msra.mxu0 0.0
    %2067 = vmatprep.subr.mxu0 0.0
    %2068 = vmatpush1.msra.mxu0 0.0
    %2069 = vmatprep.subr.mxu0 0.0
    %2070 = vmatpush1.msra.mxu0 0.0
    %2071 = vmatprep.subr.mxu0 0.0
    %2072 = vmatpush1.msra.mxu0 0.0
    %2073 = vmatprep.subr.mxu0 0.0
    %2074 = vmatpush1.msra.mxu0 0.0
    %2075 = vmatprep.subr.mxu0 0.0
    %2076 = vmatpush1.msra.mxu0 0.0
    %2077 = vmatprep.subr.mxu0 0.0
    %2078 = vmatpush1.msra.mxu0 %v428
    %2079 = vmatprep.subr.mxu0 0.0
    %2080 = vmatpush1.msra.mxu0 %v427
    %2081 = vmatprep.subr.mxu0 0.0
    %2082 = vmatpush1.msra.mxu0 %v426
    %2083 = vmatprep.subr.mxu0 0.0
    %2084 = vmatpush1.msra.mxu0 %v425
    %2085 = vmatprep.subr.mxu0 0.0
    %2086 = vmatpush2.msra.mxu0 0.0
    %2087 = vmatprep.subr.mxu0 0.0
    %2088 = vmatpush2.msra.mxu0 0.0
    %2089 = vmatprep.subr.mxu0 0.0
    %2090 = vmatpush2.msra.mxu0 0.0
    %2091 = vmatprep.subr.mxu0 0.0
    %2092 = vmatpush2.msra.mxu0 0.0
    %2093 = vmatprep.subr.mxu0 0.0
    %2094 = vmatpush2.msra.mxu0 0.0
    %2095 = vmatprep.subr.mxu0 0.0
    %2096 = vmatpush2.msra.mxu0 0.0
    %2097 = vmatprep.subr.mxu0 0.0
    %2098 = vmatpush2.msra.mxu0 0.0
    %2099 = vmatprep.subr.mxu0 0.0
    %2100 = vmatpush2.msra.mxu0 0.0
    %2101 = vmatprep.subr.mxu0 0.0
    %2102 = vmatpush2.msra.mxu0 0.0
    %2103 = vmatprep.subr.mxu0 0.0
    %2104 = vmatpush2.msra.mxu0 0.0
    %2105 = vmatprep.subr.mxu0 0.0
    %2106 = vmatpush2.msra.mxu0 0.0
    %2107 = vmatprep.subr.mxu0 0.0
    %2108 = vmatpush2.msra.mxu0 0.0
    %2109 = vmatprep.subr.mxu0 0.0
    %2110 = vmatpush2.msra.mxu0 0.0
    %2111 = vmatprep.subr.mxu0 0.0
    %2112 = vmatpush2.msra.mxu0 0.0
    %2113 = vmatprep.subr.mxu0 0.0
    %2114 = vmatpush2.msra.mxu0 0.0
    %2115 = vmatprep.subr.mxu0 0.0
    %2116 = vmatpush2.msra.mxu0 0.0
    %2117 = vmatprep.mubr.f32.mxu0 0.0
    %2118 = vmatmul.mubr.f32.gmra.mxu0 %v1891
    %v2119 = vpop.f32.mrf.mxu0
    %v2120 = vadd.f32 %v592, %v2119
    %v2121 = vpop.f32.mrf.mxu0
    %2122 = vdwg.mxu0
    %v2124 = vrot.slane %v2120, 4
    %v2126 = vmul.f32 %v2042, %v2124
    %v2127 = vadd.f32 %v412, %v2126
    %v2128 = vtanh.pop %v2127
    %v2129 = vsub.f32 1.0, %v2052
    %v2130 = vmul.f32 %v2129, %v2128
    %v2131 = vrot.slane %v1888, 6
    %v2133 = vmul.f32 %v2052, %v2131
    %v2134 = vadd.f32 %v2130, %v2133
    %v2136 = vrot.slane %v2134, 4
    %v2137 = vsel %vm430, %v2136, 0
    %2139 = vmatprep.subr.mxu0 0.0
    %2140 = vmatpush1.msra.mxu0 0.0
    %2141 = vmatprep.subr.mxu0 0.0
    %2142 = vmatpush1.msra.mxu0 0.0
    %2143 = vmatprep.subr.mxu0 0.0
    %2144 = vmatpush1.msra.mxu0 0.0
    %2145 = vmatprep.subr.mxu0 0.0
    %2146 = vmatpush1.msra.mxu0 0.0
    %2147 = vmatprep.subr.mxu0 0.0
    %2148 = vmatpush1.msra.mxu0 0.0
    %2149 = vmatprep.subr.mxu0 0.0
    %2150 = vmatpush1.msra.mxu0 0.0
    %2151 = vmatprep.subr.mxu0 0.0
    %2152 = vmatpush1.msra.mxu0 0.0
    %2153 = vmatprep.subr.mxu0 0.0
    %2154 = vmatpush1.msra.mxu0 0.0
    %2155 = vmatprep.subr.mxu0 0.0
    %2156 = vmatpush1.msra.mxu0 0.0
    %2157 = vmatprep.subr.mxu0 0.0
    %2158 = vmatpush1.msra.mxu0 0.0
    %2159 = vmatprep.subr.mxu0 0.0
    %2160 = vmatpush1.msra.mxu0 0.0
    %2161 = vmatprep.subr.mxu0 0.0
    %2162 = vmatpush1.msra.mxu0 0.0
    %2163 = vmatprep.subr.mxu0 0.0
    %2164 = vmatpush1.msra.mxu0 %v418
    %2165 = vmatprep.subr.mxu0 0.0
    %2166 = vmatpush1.msra.mxu0 %v417
    %2167 = vmatprep.subr.mxu0 0.0
    %2168 = vmatpush1.msra.mxu0 %v416
    %2169 = vmatprep.subr.mxu0 0.0
    %2170 = vmatpush1.msra.mxu0 %v415
    %2171 = vmatprep.subr.mxu0 0.0
    %2172 = vmatpush2.msra.mxu0 0.0
    %2173 = vmatprep.subr.mxu0 0.0
    %2174 = vmatpush2.msra.mxu0 0.0
    %2175 = vmatprep.subr.mxu0 0.0
    %2176 = vmatpush2.msra.mxu0 0.0
    %2177 = vmatprep.subr.mxu0 0.0
    %2178 = vmatpush2.msra.mxu0 0.0
    %2179 = vmatprep.subr.mxu0 0.0
    %2180 = vmatpush2.msra.mxu0 0.0
    %2181 = vmatprep.subr.mxu0 0.0
    %2182 = vmatpush2.msra.mxu0 0.0
    %2183 = vmatprep.subr.mxu0 0.0
    %2184 = vmatpush2.msra.mxu0 0.0
    %2185 = vmatprep.subr.mxu0 0.0
    %2186 = vmatpush2.msra.mxu0 0.0
    %2187 = vmatprep.subr.mxu0 0.0
    %2188 = vmatpush2.msra.mxu0 0.0
    %2189 = vmatprep.subr.mxu0 0.0
    %2190 = vmatpush2.msra.mxu0 0.0
    %2191 = vmatprep.subr.mxu0 0.0
    %2192 = vmatpush2.msra.mxu0 0.0
    %2193 = vmatprep.subr.mxu0 0.0
    %2194 = vmatpush2.msra.mxu0 0.0
    %2195 = vmatprep.subr.mxu0 0.0
    %2196 = vmatpush2.msra.mxu0 0.0
    %2197 = vmatprep.subr.mxu0 0.0
    %2198 = vmatpush2.msra.mxu0 0.0
    %2199 = vmatprep.subr.mxu0 0.0
    %2200 = vmatpush2.msra.mxu0 0.0
    %2201 = vmatprep.subr.mxu0 0.0
    %2202 = vmatpush2.msra.mxu0 0.0
    %2203 = vmatprep.mubr.f32.mxu0 0.0
    %2204 = vmatmul.mubr.f32.gmra.mxu0 %v2137
    %v2205 = vpop.f32.mrf.mxu0
    %v2206 = vadd.f32 0.0, %v2205
    %v2207 = vpop.f32.mrf.mxu0
    %2208 = vdwg.mxu0
    %2209 = vmatprep.subr.mxu0 0.0
    %2210 = vmatpush1.msra.mxu0 0.0
    %2211 = vmatprep.subr.mxu0 0.0
    %2212 = vmatpush1.msra.mxu0 0.0
    %2213 = vmatprep.subr.mxu0 0.0
    %2214 = vmatpush1.msra.mxu0 0.0
    %2215 = vmatprep.subr.mxu0 0.0
    %2216 = vmatpush1.msra.mxu0 0.0
    %2217 = vmatprep.subr.mxu0 0.0
    %2218 = vmatpush1.msra.mxu0 0.0
    %2219 = vmatprep.subr.mxu0 0.0
    %2220 = vmatpush1.msra.mxu0 0.0
    %2221 = vmatprep.subr.mxu0 0.0
    %2222 = vmatpush1.msra.mxu0 0.0
    %2223 = vmatprep.subr.mxu0 0.0
    %2224 = vmatpush1.msra.mxu0 0.0
    %2225 = vmatprep.subr.mxu0 0.0
    %2226 = vmatpush1.msra.mxu0 0.0
    %2227 = vmatprep.subr.mxu0 0.0
    %2228 = vmatpush1.msra.mxu0 0.0
    %2229 = vmatprep.subr.mxu0 0.0
    %2230 = vmatpush1.msra.mxu0 0.0
    %2231 = vmatprep.subr.mxu0 0.0
    %2232 = vmatpush1.msra.mxu0 0.0
    %2233 = vmatprep.subr.mxu0 0.0
    %2234 = vmatpush1.msra.mxu0 %v423
    %2235 = vmatprep.subr.mxu0 0.0
    %2236 = vmatpush1.msra.mxu0 %v422
    %2237 = vmatprep.subr.mxu0 0.0
    %2238 = vmatpush1.msra.mxu0 %v421
    %2239 = vmatprep.subr.mxu0 0.0
    %2240 = vmatpush1.msra.mxu0 %v420
    %2241 = vmatprep.subr.mxu0 0.0
    %2242 = vmatpush2.msra.mxu0 0.0
    %2243 = vmatprep.subr.mxu0 0.0
    %2244 = vmatpush2.msra.mxu0 0.0
    %2245 = vmatprep.subr.mxu0 0.0
    %2246 = vmatpush2.msra.mxu0 0.0
    %2247 = vmatprep.subr.mxu0 0.0
    %2248 = vmatpush2.msra.mxu0 0.0
    %2249 = vmatprep.subr.mxu0 0.0
    %2250 = vmatpush2.msra.mxu0 0.0
    %2251 = vmatprep.subr.mxu0 0.0
    %2252 = vmatpush2.msra.mxu0 0.0
    %2253 = vmatprep.subr.mxu0 0.0
    %2254 = vmatpush2.msra.mxu0 0.0
    %2255 = vmatprep.subr.mxu0 0.0
    %2256 = vmatpush2.msra.mxu0 0.0
    %2257 = vmatprep.subr.mxu0 0.0
    %2258 = vmatpush2.msra.mxu0 0.0
    %2259 = vmatprep.subr.mxu0 0.0
    %2260 = vmatpush2.msra.mxu0 0.0
    %2261 = vmatprep.subr.mxu0 0.0
    %2262 = vmatpush2.msra.mxu0 0.0
    %2263 = vmatprep.subr.mxu0 0.0
    %2264 = vmatpush2.msra.mxu0 0.0
    %2265 = vmatprep.subr.mxu0 0.0
    %2266 = vmatpush2.msra.mxu0 0.0
    %2267 = vmatprep.subr.mxu0 0.0
    %2268 = vmatpush2.msra.mxu0 0.0
    %2269 = vmatprep.subr.mxu0 0.0
    %2270 = vmatpush2.msra.mxu0 0.0
    %2271 = vmatprep.subr.mxu0 0.0
    %2272 = vmatpush2.msra.mxu0 0.0
    %2273 = vmatprep.mubr.f32.mxu0 0.0
    %2274 = vmatmul.mubr.f32.gmra.mxu0 %v2137
    %v2275 = vpop.f32.mrf.mxu0
    %v2276 = vadd.f32 0.0, %v2275
    %v2277 = vpop.f32.mrf.mxu0
    %2278 = vdwg.mxu0
    %v2280 = vrot.slane %v2206, 2
    %v2282 = vadd.f32 %v236, %v2280
    %v2283 = vxor.u32 %v2282, 2147483648
    %v2284 = vmul.f32 %v2283, 1.442695
    %v2285 = vpow.pop %v2284
    %v2286 = vadd.f32 %v2285, 1.0
    %v2287 = vrcp.pop %v2286
    %v2288 = vmul.f32 1.0, %v2287
    %v2290 = vrot.slane %v2276, 2
    %v2292 = vadd.f32 %v324, %v2290
    %v2293 = vxor.u32 %v2292, 2147483648
    %v2294 = vmul.f32 %v2293, 1.442695
    %v2295 = vpow.pop %v2294
    %v2296 = vadd.f32 %v2295, 1.0
    %v2297 = vrcp.pop %v2296
    %v2298 = vmul.f32 1.0, %v2297
    %2299 = vmatprep.subr.mxu0 0.0
    %2300 = vmatpush1.msra.mxu0 0.0
    %2301 = vmatprep.subr.mxu0 0.0
    %2302 = vmatpush1.msra.mxu0 0.0
    %2303 = vmatprep.subr.mxu0 0.0
    %2304 = vmatpush1.msra.mxu0 0.0
    %2305 = vmatprep.subr.mxu0 0.0
    %2306 = vmatpush1.msra.mxu0 0.0
    %2307 = vmatprep.subr.mxu0 0.0
    %2308 = vmatpush1.msra.mxu0 0.0
    %2309 = vmatprep.subr.mxu0 0.0
    %2310 = vmatpush1.msra.mxu0 0.0
    %2311 = vmatprep.subr.mxu0 0.0
    %2312 = vmatpush1.msra.mxu0 0.0
    %2313 = vmatprep.subr.mxu0 0.0
    %2314 = vmatpush1.msra.mxu0 0.0
    %2315 = vmatprep.subr.mxu0 0.0
    %2316 = vmatpush1.msra.mxu0 0.0
    %2317 = vmatprep.subr.mxu0 0.0
    %2318 = vmatpush1.msra.mxu0 0.0
    %2319 = vmatprep.subr.mxu0 0.0
    %2320 = vmatpush1.msra.mxu0 0.0
    %2321 = vmatprep.subr.mxu0 0.0
    %2322 = vmatpush1.msra.mxu0 0.0
    %2323 = vmatprep.subr.mxu0 0.0
    %2324 = vmatpush1.msra.mxu0 %v428
    %2325 = vmatprep.subr.mxu0 0.0
    %2326 = vmatpush1.msra.mxu0 %v427
    %2327 = vmatprep.subr.mxu0 0.0
    %2328 = vmatpush1.msra.mxu0 %v426
    %2329 = vmatprep.subr.mxu0 0.0
    %2330 = vmatpush1.msra.mxu0 %v425
    %2331 = vmatprep.subr.mxu0 0.0
    %2332 = vmatpush2.msra.mxu0 0.0
    %2333 = vmatprep.subr.mxu0 0.0
    %2334 = vmatpush2.msra.mxu0 0.0
    %2335 = vmatprep.subr.mxu0 0.0
    %2336 = vmatpush2.msra.mxu0 0.0
    %2337 = vmatprep.subr.mxu0 0.0
    %2338 = vmatpush2.msra.mxu0 0.0
    %2339 = vmatprep.subr.mxu0 0.0
    %2340 = vmatpush2.msra.mxu0 0.0
    %2341 = vmatprep.subr.mxu0 0.0
    %2342 = vmatpush2.msra.mxu0 0.0
    %2343 = vmatprep.subr.mxu0 0.0
    %2344 = vmatpush2.msra.mxu0 0.0
    %2345 = vmatprep.subr.mxu0 0.0
    %2346 = vmatpush2.msra.mxu0 0.0
    %2347 = vmatprep.subr.mxu0 0.0
    %2348 = vmatpush2.msra.mxu0 0.0
    %2349 = vmatprep.subr.mxu0 0.0
    %2350 = vmatpush2.msra.mxu0 0.0
    %2351 = vmatprep.subr.mxu0 0.0
    %2352 = vmatpush2.msra.mxu0 0.0
    %2353 = vmatprep.subr.mxu0 0.0
    %2354 = vmatpush2.msra.mxu0 0.0
    %2355 = vmatprep.subr.mxu0 0.0
    %2356 = vmatpush2.msra.mxu0 0.0
    %2357 = vmatprep.subr.mxu0 0.0
    %2358 = vmatpush2.msra.mxu0 0.0
    %2359 = vmatprep.subr.mxu0 0.0
    %2360 = vmatpush2.msra.mxu0 0.0
    %2361 = vmatprep.subr.mxu0 0.0
    %2362 = vmatpush2.msra.mxu0 0.0
    %2363 = vmatprep.mubr.f32.mxu0 0.0
    %2364 = vmatmul.mubr.f32.gmra.mxu0 %v2137
    %v2365 = vpop.f32.mrf.mxu0
    %v2366 = vadd.f32 %v592, %v2365
    %v2367 = vpop.f32.mrf.mxu0
    %2368 = vdwg.mxu0
    %v2370 = vrot.slane %v2366, 2
    %v2372 = vmul.f32 %v2288, %v2370
    %v2373 = vadd.f32 %v412, %v2372
    %v2374 = vtanh.pop %v2373
    %v2375 = vsub.f32 1.0, %v2298
    %v2376 = vmul.f32 %v2375, %v2374
    %v2377 = vrot.slane %v2134, 6
    %v2379 = vmul.f32 %v2298, %v2377
    %v2380 = vadd.f32 %v2376, %v2379
    %vm2381 = vcmask 1041408
    %v2382 = vsel %vm2381, %v670, %v915
    %v2383 = vsel %vm160, %v2382, %v1161
    %vm2384 = vcmask 1045504
    %v2385 = vsel %vm2384, %v2383, %v1407
    %v2386 = vsel %vm2381, %v1643, %v1888
    %v2387 = vsel %vm160, %v2386, %v2134
    %v2388 = vsel %vm2384, %v2387, %v2380
    %v2389 = vld [vmem:[%s6] sm:$0xff]
    %v2390 = vld [vmem:[%s6 + $0x8] sm:$0xff]
    %v2391 = vld [vmem:[%s6 + $0x10] sm:$0xff]
    %v2392 = vld [vmem:[%s6 + $0x18] sm:$0xff]
    %v2393 = vld [vmem:[#allocation10] sm:$0x1]
    %v2395 = vlaneseq
    %v2396 = vshrl.u32 %v2395, 7
    %v2397 = vsub.s32 0, %v2396
    %v2398 = vrot.slane %v2393, %v2397
    %v2401 = vsel %vm430, %v2385, 0
    %v2404 = vsel %vm430, %v2388, 0
    %2406 = vmatprep.subr.mxu0 0.0
    %2407 = vmatpush1.msra.mxu0 0.0
    %2408 = vmatprep.subr.mxu0 0.0
    %2409 = vmatpush1.msra.mxu0 0.0
    %2410 = vmatprep.subr.mxu0 0.0
    %2411 = vmatpush1.msra.mxu0 0.0
    %2412 = vmatprep.subr.mxu0 0.0
    %2413 = vmatpush1.msra.mxu0 0.0
    %2414 = vmatprep.subr.mxu0 0.0
    %2415 = vmatpush1.msra.mxu0 0.0
    %2416 = vmatprep.subr.mxu0 0.0
    %2417 = vmatpush1.msra.mxu0 0.0
    %2418 = vmatprep.subr.mxu0 0.0
    %2419 = vmatpush1.msra.mxu0 0.0
    %2420 = vmatprep.subr.mxu0 0.0
    %2421 = vmatpush1.msra.mxu0 0.0
    %2422 = vmatprep.subr.mxu0 0.0
    %2423 = vmatpush1.msra.mxu0 0.0
    %2424 = vmatprep.subr.mxu0 0.0
    %2425 = vmatpush1.msra.mxu0 0.0
    %2426 = vmatprep.subr.mxu0 0.0
    %2427 = vmatpush1.msra.mxu0 0.0
    %2428 = vmatprep.subr.mxu0 0.0
    %2429 = vmatpush1.msra.mxu0 0.0
    %2430 = vmatprep.subr.mxu0 0.0
    %2431 = vmatpush1.msra.mxu0 %v2392
    %2432 = vmatprep.subr.mxu0 0.0
    %2433 = vmatpush1.msra.mxu0 %v2391
    %2434 = vmatprep.subr.mxu0 0.0
    %2435 = vmatpush1.msra.mxu0 %v2390
    %2436 = vmatprep.subr.mxu0 0.0
    %2437 = vmatpush1.msra.mxu0 %v2389
    %2438 = vmatprep.subr.mxu0 0.0
    %2439 = vmatpush2.msra.mxu0 0.0
    %2440 = vmatprep.subr.mxu0 0.0
    %2441 = vmatpush2.msra.mxu0 0.0
    %2442 = vmatprep.subr.mxu0 0.0
    %2443 = vmatpush2.msra.mxu0 0.0
    %2444 = vmatprep.subr.mxu0 0.0
    %2445 = vmatpush2.msra.mxu0 0.0
    %2446 = vmatprep.subr.mxu0 0.0
    %2447 = vmatpush2.msra.mxu0 0.0
    %2448 = vmatprep.subr.mxu0 0.0
    %2449 = vmatpush2.msra.mxu0 0.0
    %2450 = vmatprep.subr.mxu0 0.0
    %2451 = vmatpush2.msra.mxu0 0.0
    %2452 = vmatprep.subr.mxu0 0.0
    %2453 = vmatpush2.msra.mxu0 0.0
    %2454 = vmatprep.subr.mxu0 0.0
    %2455 = vmatpush2.msra.mxu0 0.0
    %2456 = vmatprep.subr.mxu0 0.0
    %2457 = vmatpush2.msra.mxu0 0.0
    %2458 = vmatprep.subr.mxu0 0.0
    %2459 = vmatpush2.msra.mxu0 0.0
    %2460 = vmatprep.subr.mxu0 0.0
    %2461 = vmatpush2.msra.mxu0 0.0
    %2462 = vmatprep.subr.mxu0 0.0
    %2463 = vmatpush2.msra.mxu0 0.0
    %2464 = vmatprep.subr.mxu0 0.0
    %2465 = vmatpush2.msra.mxu0 0.0
    %2466 = vmatprep.subr.mxu0 0.0
    %2467 = vmatpush2.msra.mxu0 0.0
    %2468 = vmatprep.subr.mxu0 0.0
    %2469 = vmatpush2.msra.mxu0 0.0
    %2470 = vmatprep.mubr.f32.mxu0 0.0
    %2471 = vmatmul.mubr.f32.gmra.mxu0 %v2401
    %v2472 = vpop.f32.mrf.mxu0
    %v2473 = vadd.f32 %v2398, %v2472
    %v2474 = vpop.f32.mrf.mxu0
    %2475 = vmatprep.mubr.f32.mxu0 0.0
    %2476 = vmatmul.mubr.f32.gmra.mxu0 %v2404
    %v2477 = vpop.f32.mrf.mxu0
    %v2478 = vadd.f32 %v2398, %v2477
    %v2479 = vpop.f32.mrf.mxu0
    %2480 = vdwg.mxu0
    %s2481 = scalar_lea.vmem %s6, 32
    %v2482 = vld [vmem:[%s2481] sm:$0xff]
    %v2483 = vld [vmem:[%s2481 + $0x8] sm:$0xff]
    %v2484 = vld [vmem:[%s2481 + $0x10] sm:$0xff]
    %v2485 = vld [vmem:[%s2481 + $0x18] sm:$0xff]
    %s2486 = scalar_lea.vmem [#allocation10], 1
    %v2487 = vld [vmem:[%s2486] sm:$0x1]
    %v2489 = vlaneseq
    %v2490 = vshrl.u32 %v2489, 7
    %v2491 = vsub.s32 0, %v2490
    %v2492 = vrot.slane %v2487, %v2491
    %2494 = vmatprep.subr.mxu0 0.0
    %2495 = vmatpush1.msra.mxu0 0.0
    %2496 = vmatprep.subr.mxu0 0.0
    %2497 = vmatpush1.msra.mxu0 0.0
    %2498 = vmatprep.subr.mxu0 0.0
    %2499 = vmatpush1.msra.mxu0 0.0
    %2500 = vmatprep.subr.mxu0 0.0
    %2501 = vmatpush1.msra.mxu0 0.0
    %2502 = vmatprep.subr.mxu0 0.0
    %2503 = vmatpush1.msra.mxu0 0.0
    %2504 = vmatprep.subr.mxu0 0.0
    %2505 = vmatpush1.msra.mxu0 0.0
    %2506 = vmatprep.subr.mxu0 0.0
    %2507 = vmatpush1.msra.mxu0 0.0
    %2508 = vmatprep.subr.mxu0 0.0
    %2509 = vmatpush1.msra.mxu0 0.0
    %2510 = vmatprep.subr.mxu0 0.0
    %2511 = vmatpush1.msra.mxu0 0.0
    %2512 = vmatprep.subr.mxu0 0.0
    %2513 = vmatpush1.msra.mxu0 0.0
    %2514 = vmatprep.subr.mxu0 0.0
    %2515 = vmatpush1.msra.mxu0 0.0
    %2516 = vmatprep.subr.mxu0 0.0
    %2517 = vmatpush1.msra.mxu0 0.0
    %2518 = vmatprep.subr.mxu0 0.0
    %2519 = vmatpush1.msra.mxu0 %v2485
    %2520 = vmatprep.subr.mxu0 0.0
    %2521 = vmatpush1.msra.mxu0 %v2484
    %2522 = vmatprep.subr.mxu0 0.0
    %2523 = vmatpush1.msra.mxu0 %v2483
    %2524 = vmatprep.subr.mxu0 0.0
    %2525 = vmatpush1.msra.mxu0 %v2482
    %2526 = vmatprep.subr.mxu0 0.0
    %2527 = vmatpush2.msra.mxu0 0.0
    %2528 = vmatprep.subr.mxu0 0.0
    %2529 = vmatpush2.msra.mxu0 0.0
    %2530 = vmatprep.subr.mxu0 0.0
    %2531 = vmatpush2.msra.mxu0 0.0
    %2532 = vmatprep.subr.mxu0 0.0
    %2533 = vmatpush2.msra.mxu0 0.0
    %2534 = vmatprep.subr.mxu0 0.0
    %2535 = vmatpush2.msra.mxu0 0.0
    %2536 = vmatprep.subr.mxu0 0.0
    %2537 = vmatpush2.msra.mxu0 0.0
    %2538 = vmatprep.subr.mxu0 0.0
    %2539 = vmatpush2.msra.mxu0 0.0
    %2540 = vmatprep.subr.mxu0 0.0
    %2541 = vmatpush2.msra.mxu0 0.0
    %2542 = vmatprep.subr.mxu0 0.0
    %2543 = vmatpush2.msra.mxu0 0.0
    %2544 = vmatprep.subr.mxu0 0.0
    %2545 = vmatpush2.msra.mxu0 0.0
    %2546 = vmatprep.subr.mxu0 0.0
    %2547 = vmatpush2.msra.mxu0 0.0
    %2548 = vmatprep.subr.mxu0 0.0
    %2549 = vmatpush2.msra.mxu0 0.0
    %2550 = vmatprep.subr.mxu0 0.0
    %2551 = vmatpush2.msra.mxu0 0.0
    %2552 = vmatprep.subr.mxu0 0.0
    %2553 = vmatpush2.msra.mxu0 0.0
    %2554 = vmatprep.subr.mxu0 0.0
    %2555 = vmatpush2.msra.mxu0 0.0
    %2556 = vmatprep.subr.mxu0 0.0
    %2557 = vmatpush2.msra.mxu0 0.0
    %2558 = vmatprep.mubr.f32.mxu0 0.0
    %2559 = vmatmul.mubr.f32.gmra.mxu0 %v2401
    %v2560 = vpop.f32.mrf.mxu0
    %v2561 = vadd.f32 %v2492, %v2560
    %v2562 = vpop.f32.mrf.mxu0
    %2563 = vmatprep.mubr.f32.mxu0 0.0
    %2564 = vmatmul.mubr.f32.gmra.mxu0 %v2404
    %v2565 = vpop.f32.mrf.mxu0
    %v2566 = vadd.f32 %v2492, %v2565
    %v2567 = vpop.f32.mrf.mxu0
    %2568 = vdwg.mxu0
    %s2569 = scalar_lea.vmem %s6, 64
    %v2570 = vld [vmem:[%s2569] sm:$0xff]
    %v2571 = vld [vmem:[%s2569 + $0x8] sm:$0xff]
    %v2572 = vld [vmem:[%s2569 + $0x10] sm:$0xff]
    %v2573 = vld [vmem:[%s2569 + $0x18] sm:$0xff]
    %s2574 = scalar_lea.vmem [#allocation10], 2
    %v2575 = vld [vmem:[%s2574] sm:$0x1]
    %v2577 = vlaneseq
    %v2578 = vshrl.u32 %v2577, 7
    %v2579 = vsub.s32 0, %v2578
    %v2580 = vrot.slane %v2575, %v2579
    %2582 = vmatprep.subr.mxu0 0.0
    %2583 = vmatpush1.msra.mxu0 0.0
    %2584 = vmatprep.subr.mxu0 0.0
    %2585 = vmatpush1.msra.mxu0 0.0
    %2586 = vmatprep.subr.mxu0 0.0
    %2587 = vmatpush1.msra.mxu0 0.0
    %2588 = vmatprep.subr.mxu0 0.0
    %2589 = vmatpush1.msra.mxu0 0.0
    %2590 = vmatprep.subr.mxu0 0.0
    %2591 = vmatpush1.msra.mxu0 0.0
    %2592 = vmatprep.subr.mxu0 0.0
    %2593 = vmatpush1.msra.mxu0 0.0
    %2594 = vmatprep.subr.mxu0 0.0
    %2595 = vmatpush1.msra.mxu0 0.0
    %2596 = vmatprep.subr.mxu0 0.0
    %2597 = vmatpush1.msra.mxu0 0.0
    %2598 = vmatprep.subr.mxu0 0.0
    %2599 = vmatpush1.msra.mxu0 0.0
    %2600 = vmatprep.subr.mxu0 0.0
    %2601 = vmatpush1.msra.mxu0 0.0
    %2602 = vmatprep.subr.mxu0 0.0
    %2603 = vmatpush1.msra.mxu0 0.0
    %2604 = vmatprep.subr.mxu0 0.0
    %2605 = vmatpush1.msra.mxu0 0.0
    %2606 = vmatprep.subr.mxu0 0.0
    %2607 = vmatpush1.msra.mxu0 %v2573
    %2608 = vmatprep.subr.mxu0 0.0
    %2609 = vmatpush1.msra.mxu0 %v2572
    %2610 = vmatprep.subr.mxu0 0.0
    %2611 = vmatpush1.msra.mxu0 %v2571
    %2612 = vmatprep.subr.mxu0 0.0
    %2613 = vmatpush1.msra.mxu0 %v2570
    %2614 = vmatprep.subr.mxu0 0.0
    %2615 = vmatpush2.msra.mxu0 0.0
    %2616 = vmatprep.subr.mxu0 0.0
    %2617 = vmatpush2.msra.mxu0 0.0
    %2618 = vmatprep.subr.mxu0 0.0
    %2619 = vmatpush2.msra.mxu0 0.0
    %2620 = vmatprep.subr.mxu0 0.0
    %2621 = vmatpush2.msra.mxu0 0.0
    %2622 = vmatprep.subr.mxu0 0.0
    %2623 = vmatpush2.msra.mxu0 0.0
    %2624 = vmatprep.subr.mxu0 0.0
    %2625 = vmatpush2.msra.mxu0 0.0
    %2626 = vmatprep.subr.mxu0 0.0
    %2627 = vmatpush2.msra.mxu0 0.0
    %2628 = vmatprep.subr.mxu0 0.0
    %2629 = vmatpush2.msra.mxu0 0.0
    %2630 = vmatprep.subr.mxu0 0.0
    %2631 = vmatpush2.msra.mxu0 0.0
    %2632 = vmatprep.subr.mxu0 0.0
    %2633 = vmatpush2.msra.mxu0 0.0
    %2634 = vmatprep.subr.mxu0 0.0
    %2635 = vmatpush2.msra.mxu0 0.0
    %2636 = vmatprep.subr.mxu0 0.0
    %2637 = vmatpush2.msra.mxu0 0.0
    %2638 = vmatprep.subr.mxu0 0.0
    %2639 = vmatpush2.msra.mxu0 0.0
    %2640 = vmatprep.subr.mxu0 0.0
    %2641 = vmatpush2.msra.mxu0 0.0
    %2642 = vmatprep.subr.mxu0 0.0
    %2643 = vmatpush2.msra.mxu0 0.0
    %2644 = vmatprep.subr.mxu0 0.0
    %2645 = vmatpush2.msra.mxu0 0.0
    %2646 = vmatprep.mubr.f32.mxu0 0.0
    %2647 = vmatmul.mubr.f32.gmra.mxu0 %v2401
    %v2648 = vpop.f32.mrf.mxu0
    %v2649 = vadd.f32 %v2580, %v2648
    %v2650 = vpop.f32.mrf.mxu0
    %2651 = vmatprep.mubr.f32.mxu0 0.0
    %2652 = vmatmul.mubr.f32.gmra.mxu0 %v2404
    %v2653 = vpop.f32.mrf.mxu0
    %v2654 = vadd.f32 %v2580, %v2653
    %v2655 = vpop.f32.mrf.mxu0
    %2656 = vdwg.mxu0
    %v2657 = vld [vmem:[#allocation11] sm:$0xff]
    %v2658 = vld [vmem:[#allocation11 + $0x8] sm:$0xff]
    %v2659 = vld [vmem:[#allocation11 + $0x10] sm:$0xff]
    %v2660 = vld [vmem:[#allocation11 + $0x18] sm:$0xff]
    %s2661 = scalar_lea.vmem [#allocation11], 32
    %v2662 = vld [vmem:[%s2661] sm:$0xff]
    %v2663 = vld [vmem:[%s2661 + $0x8] sm:$0xff]
    %v2664 = vld [vmem:[%s2661 + $0x10] sm:$0xff]
    %v2665 = vld [vmem:[%s2661 + $0x18] sm:$0xff]
    %s2666 = scalar_lea.vmem [#allocation11], 64
    %v2667 = vld [vmem:[%s2666] sm:$0xff]
    %v2668 = vld [vmem:[%s2666 + $0x8] sm:$0xff]
    %v2669 = vld [vmem:[%s2666 + $0x10] sm:$0xff]
    %v2670 = vld [vmem:[%s2666 + $0x18] sm:$0xff]
    %v2671 = vld [vmem:[#allocation13] sm:$0x1]
    %2672 = vmatprep.subr.mxu0 0.0
    %2673 = vmatpush1.msra.mxu0 0.0
    %2674 = vmatprep.subr.mxu0 0.0
    %2675 = vmatpush1.msra.mxu0 0.0
    %2676 = vmatprep.subr.mxu0 0.0
    %2677 = vmatpush1.msra.mxu0 0.0
    %2678 = vmatprep.subr.mxu0 0.0
    %2679 = vmatpush1.msra.mxu0 0.0
    %2680 = vmatprep.subr.mxu0 0.0
    %2681 = vmatpush1.msra.mxu0 0.0
    %2682 = vmatprep.subr.mxu0 0.0
    %2683 = vmatpush1.msra.mxu0 0.0
    %2684 = vmatprep.subr.mxu0 0.0
    %2685 = vmatpush1.msra.mxu0 0.0
    %2686 = vmatprep.subr.mxu0 0.0
    %2687 = vmatpush1.msra.mxu0 0.0
    %2688 = vmatprep.subr.mxu0 0.0
    %2689 = vmatpush1.msra.mxu0 0.0
    %2690 = vmatprep.subr.mxu0 0.0
    %2691 = vmatpush1.msra.mxu0 0.0
    %2692 = vmatprep.subr.mxu0 0.0
    %2693 = vmatpush1.msra.mxu0 0.0
    %2694 = vmatprep.subr.mxu0 0.0
    %2695 = vmatpush1.msra.mxu0 0.0
    %2696 = vmatprep.subr.mxu0 0.0
    %2697 = vmatpush1.msra.mxu0 %v2660
    %2698 = vmatprep.subr.mxu0 0.0
    %2699 = vmatpush1.msra.mxu0 %v2659
    %2700 = vmatprep.subr.mxu0 0.0
    %2701 = vmatpush1.msra.mxu0 %v2658
    %2702 = vmatprep.subr.mxu0 0.0
    %2703 = vmatpush1.msra.mxu0 %v2657
    %2704 = vmatprep.subr.mxu0 0.0
    %2705 = vmatpush2.msra.mxu0 0.0
    %2706 = vmatprep.subr.mxu0 0.0
    %2707 = vmatpush2.msra.mxu0 0.0
    %2708 = vmatprep.subr.mxu0 0.0
    %2709 = vmatpush2.msra.mxu0 0.0
    %2710 = vmatprep.subr.mxu0 0.0
    %2711 = vmatpush2.msra.mxu0 0.0
    %2712 = vmatprep.subr.mxu0 0.0
    %2713 = vmatpush2.msra.mxu0 0.0
    %2714 = vmatprep.subr.mxu0 0.0
    %2715 = vmatpush2.msra.mxu0 0.0
    %2716 = vmatprep.subr.mxu0 0.0
    %2717 = vmatpush2.msra.mxu0 0.0
    %2718 = vmatprep.subr.mxu0 0.0
    %2719 = vmatpush2.msra.mxu0 0.0
    %2720 = vmatprep.subr.mxu0 0.0
    %2721 = vmatpush2.msra.mxu0 0.0
    %2722 = vmatprep.subr.mxu0 0.0
    %2723 = vmatpush2.msra.mxu0 0.0
    %2724 = vmatprep.subr.mxu0 0.0
    %2725 = vmatpush2.msra.mxu0 0.0
    %2726 = vmatprep.subr.mxu0 0.0
    %2727 = vmatpush2.msra.mxu0 0.0
    %2728 = vmatprep.subr.mxu0 0.0
    %2729 = vmatpush2.msra.mxu0 0.0
    %2730 = vmatprep.subr.mxu0 0.0
    %2731 = vmatpush2.msra.mxu0 0.0
    %2732 = vmatprep.subr.mxu0 0.0
    %2733 = vmatpush2.msra.mxu0 0.0
    %2734 = vmatprep.subr.mxu0 0.0
    %2735 = vmatpush2.msra.mxu0 0.0
    %2736 = vmatprep.mubr.f32.mxu0 0.0
    %2737 = vmatmul.mubr.f32.gmra.mxu0 %v432
    %v2738 = vpop.f32.mrf.mxu0
    %v2739 = vadd.f32 0.0, %v2738
    %v2740 = vpop.f32.mrf.mxu0
    %2741 = vdwg.mxu0
    %2742 = vmatprep.subr.mxu0 0.0
    %2743 = vmatpush1.msra.mxu0 0.0
    %2744 = vmatprep.subr.mxu0 0.0
    %2745 = vmatpush1.msra.mxu0 0.0
    %2746 = vmatprep.subr.mxu0 0.0
    %2747 = vmatpush1.msra.mxu0 0.0
    %2748 = vmatprep.subr.mxu0 0.0
    %2749 = vmatpush1.msra.mxu0 0.0
    %2750 = vmatprep.subr.mxu0 0.0
    %2751 = vmatpush1.msra.mxu0 0.0
    %2752 = vmatprep.subr.mxu0 0.0
    %2753 = vmatpush1.msra.mxu0 0.0
    %2754 = vmatprep.subr.mxu0 0.0
    %2755 = vmatpush1.msra.mxu0 0.0
    %2756 = vmatprep.subr.mxu0 0.0
    %2757 = vmatpush1.msra.mxu0 0.0
    %2758 = vmatprep.subr.mxu0 0.0
    %2759 = vmatpush1.msra.mxu0 0.0
    %2760 = vmatprep.subr.mxu0 0.0
    %2761 = vmatpush1.msra.mxu0 0.0
    %2762 = vmatprep.subr.mxu0 0.0
    %2763 = vmatpush1.msra.mxu0 0.0
    %2764 = vmatprep.subr.mxu0 0.0
    %2765 = vmatpush1.msra.mxu0 0.0
    %2766 = vmatprep.subr.mxu0 0.0
    %2767 = vmatpush1.msra.mxu0 %v2665
    %2768 = vmatprep.subr.mxu0 0.0
    %2769 = vmatpush1.msra.mxu0 %v2664
    %2770 = vmatprep.subr.mxu0 0.0
    %2771 = vmatpush1.msra.mxu0 %v2663
    %2772 = vmatprep.subr.mxu0 0.0
    %2773 = vmatpush1.msra.mxu0 %v2662
    %2774 = vmatprep.subr.mxu0 0.0
    %2775 = vmatpush2.msra.mxu0 0.0
    %2776 = vmatprep.subr.mxu0 0.0
    %2777 = vmatpush2.msra.mxu0 0.0
    %2778 = vmatprep.subr.mxu0 0.0
    %2779 = vmatpush2.msra.mxu0 0.0
    %2780 = vmatprep.subr.mxu0 0.0
    %2781 = vmatpush2.msra.mxu0 0.0
    %2782 = vmatprep.subr.mxu0 0.0
    %2783 = vmatpush2.msra.mxu0 0.0
    %2784 = vmatprep.subr.mxu0 0.0
    %2785 = vmatpush2.msra.mxu0 0.0
    %2786 = vmatprep.subr.mxu0 0.0
    %2787 = vmatpush2.msra.mxu0 0.0
    %2788 = vmatprep.subr.mxu0 0.0
    %2789 = vmatpush2.msra.mxu0 0.0
    %2790 = vmatprep.subr.mxu0 0.0
    %2791 = vmatpush2.msra.mxu0 0.0
    %2792 = vmatprep.subr.mxu0 0.0
    %2793 = vmatpush2.msra.mxu0 0.0
    %2794 = vmatprep.subr.mxu0 0.0
    %2795 = vmatpush2.msra.mxu0 0.0
    %2796 = vmatprep.subr.mxu0 0.0
    %2797 = vmatpush2.msra.mxu0 0.0
    %2798 = vmatprep.subr.mxu0 0.0
    %2799 = vmatpush2.msra.mxu0 0.0
    %2800 = vmatprep.subr.mxu0 0.0
    %2801 = vmatpush2.msra.mxu0 0.0
    %2802 = vmatprep.subr.mxu0 0.0
    %2803 = vmatpush2.msra.mxu0 0.0
    %2804 = vmatprep.subr.mxu0 0.0
    %2805 = vmatpush2.msra.mxu0 0.0
    %2806 = vmatprep.mubr.f32.mxu0 0.0
    %2807 = vmatmul.mubr.f32.gmra.mxu0 %v432
    %v2808 = vpop.f32.mrf.mxu0
    %v2809 = vadd.f32 0.0, %v2808
    %v2810 = vpop.f32.mrf.mxu0
    %2811 = vdwg.mxu0
    %v2812 = vadd.f32 %v2473, %v2739
    %v2813 = vxor.u32 %v2812, 2147483648
    %v2814 = vmul.f32 %v2813, 1.442695
    %v2815 = vpow.pop %v2814
    %v2816 = vadd.f32 %v2815, 1.0
    %v2817 = vrcp.pop %v2816
    %v2818 = vmul.f32 1.0, %v2817
    %v2819 = vadd.f32 %v2561, %v2809
    %v2820 = vxor.u32 %v2819, 2147483648
    %v2821 = vmul.f32 %v2820, 1.442695
    %v2822 = vpow.pop %v2821
    %v2823 = vadd.f32 %v2822, 1.0
    %v2824 = vrcp.pop %v2823
    %v2825 = vmul.f32 1.0, %v2824
    %v2827 = vlaneseq
    %v2828 = vshrl.u32 %v2827, 7
    %v2829 = vsub.s32 0, %v2828
    %v2830 = vrot.slane %v2671, %v2829
    %2832 = vmatprep.subr.mxu0 0.0
    %2833 = vmatpush1.msra.mxu0 0.0
    %2834 = vmatprep.subr.mxu0 0.0
    %2835 = vmatpush1.msra.mxu0 0.0
    %2836 = vmatprep.subr.mxu0 0.0
    %2837 = vmatpush1.msra.mxu0 0.0
    %2838 = vmatprep.subr.mxu0 0.0
    %2839 = vmatpush1.msra.mxu0 0.0
    %2840 = vmatprep.subr.mxu0 0.0
    %2841 = vmatpush1.msra.mxu0 0.0
    %2842 = vmatprep.subr.mxu0 0.0
    %2843 = vmatpush1.msra.mxu0 0.0
    %2844 = vmatprep.subr.mxu0 0.0
    %2845 = vmatpush1.msra.mxu0 0.0
    %2846 = vmatprep.subr.mxu0 0.0
    %2847 = vmatpush1.msra.mxu0 0.0
    %2848 = vmatprep.subr.mxu0 0.0
    %2849 = vmatpush1.msra.mxu0 0.0
    %2850 = vmatprep.subr.mxu0 0.0
    %2851 = vmatpush1.msra.mxu0 0.0
    %2852 = vmatprep.subr.mxu0 0.0
    %2853 = vmatpush1.msra.mxu0 0.0
    %2854 = vmatprep.subr.mxu0 0.0
    %2855 = vmatpush1.msra.mxu0 0.0
    %2856 = vmatprep.subr.mxu0 0.0
    %2857 = vmatpush1.msra.mxu0 %v2670
    %2858 = vmatprep.subr.mxu0 0.0
    %2859 = vmatpush1.msra.mxu0 %v2669
    %2860 = vmatprep.subr.mxu0 0.0
    %2861 = vmatpush1.msra.mxu0 %v2668
    %2862 = vmatprep.subr.mxu0 0.0
    %2863 = vmatpush1.msra.mxu0 %v2667
    %2864 = vmatprep.subr.mxu0 0.0
    %2865 = vmatpush2.msra.mxu0 0.0
    %2866 = vmatprep.subr.mxu0 0.0
    %2867 = vmatpush2.msra.mxu0 0.0
    %2868 = vmatprep.subr.mxu0 0.0
    %2869 = vmatpush2.msra.mxu0 0.0
    %2870 = vmatprep.subr.mxu0 0.0
    %2871 = vmatpush2.msra.mxu0 0.0
    %2872 = vmatprep.subr.mxu0 0.0
    %2873 = vmatpush2.msra.mxu0 0.0
    %2874 = vmatprep.subr.mxu0 0.0
    %2875 = vmatpush2.msra.mxu0 0.0
    %2876 = vmatprep.subr.mxu0 0.0
    %2877 = vmatpush2.msra.mxu0 0.0
    %2878 = vmatprep.subr.mxu0 0.0
    %2879 = vmatpush2.msra.mxu0 0.0
    %2880 = vmatprep.subr.mxu0 0.0
    %2881 = vmatpush2.msra.mxu0 0.0
    %2882 = vmatprep.subr.mxu0 0.0
    %2883 = vmatpush2.msra.mxu0 0.0
    %2884 = vmatprep.subr.mxu0 0.0
    %2885 = vmatpush2.msra.mxu0 0.0
    %2886 = vmatprep.subr.mxu0 0.0
    %2887 = vmatpush2.msra.mxu0 0.0
    %2888 = vmatprep.subr.mxu0 0.0
    %2889 = vmatpush2.msra.mxu0 0.0
    %2890 = vmatprep.subr.mxu0 0.0
    %2891 = vmatpush2.msra.mxu0 0.0
    %2892 = vmatprep.subr.mxu0 0.0
    %2893 = vmatpush2.msra.mxu0 0.0
    %2894 = vmatprep.subr.mxu0 0.0
    %2895 = vmatpush2.msra.mxu0 0.0
    %2896 = vmatprep.mubr.f32.mxu0 0.0
    %2897 = vmatmul.mubr.f32.gmra.mxu0 %v432
    %v2898 = vpop.f32.mrf.mxu0
    %v2899 = vadd.f32 %v2830, %v2898
    %v2900 = vpop.f32.mrf.mxu0
    %2901 = vdwg.mxu0
    %v2902 = vmul.f32 %v2818, %v2899
    %v2903 = vadd.f32 %v2649, %v2902
    %v2904 = vtanh.pop %v2903
    %v2905 = vsub.f32 1.0, %v2825
    %v2906 = vmul.f32 %v2905, %v2904
    %v2907 = vmul.f32 %v2825, 0.0
    %v2908 = vadd.f32 %v2906, %v2907
    %v2910 = vsel %vm430, %v2908, 0
    %2912 = vmatprep.subr.mxu0 0.0
    %2913 = vmatpush1.msra.mxu0 0.0
    %2914 = vmatprep.subr.mxu0 0.0
    %2915 = vmatpush1.msra.mxu0 0.0
    %2916 = vmatprep.subr.mxu0 0.0
    %2917 = vmatpush1.msra.mxu0 0.0
    %2918 = vmatprep.subr.mxu0 0.0
    %2919 = vmatpush1.msra.mxu0 0.0
    %2920 = vmatprep.subr.mxu0 0.0
    %2921 = vmatpush1.msra.mxu0 0.0
    %2922 = vmatprep.subr.mxu0 0.0
    %2923 = vmatpush1.msra.mxu0 0.0
    %2924 = vmatprep.subr.mxu0 0.0
    %2925 = vmatpush1.msra.mxu0 0.0
    %2926 = vmatprep.subr.mxu0 0.0
    %2927 = vmatpush1.msra.mxu0 0.0
    %2928 = vmatprep.subr.mxu0 0.0
    %2929 = vmatpush1.msra.mxu0 0.0
    %2930 = vmatprep.subr.mxu0 0.0
    %2931 = vmatpush1.msra.mxu0 0.0
    %2932 = vmatprep.subr.mxu0 0.0
    %2933 = vmatpush1.msra.mxu0 0.0
    %2934 = vmatprep.subr.mxu0 0.0
    %2935 = vmatpush1.msra.mxu0 0.0
    %2936 = vmatprep.subr.mxu0 0.0
    %2937 = vmatpush1.msra.mxu0 %v2660
    %2938 = vmatprep.subr.mxu0 0.0
    %2939 = vmatpush1.msra.mxu0 %v2659
    %2940 = vmatprep.subr.mxu0 0.0
    %2941 = vmatpush1.msra.mxu0 %v2658
    %2942 = vmatprep.subr.mxu0 0.0
    %2943 = vmatpush1.msra.mxu0 %v2657
    %2944 = vmatprep.subr.mxu0 0.0
    %2945 = vmatpush2.msra.mxu0 0.0
    %2946 = vmatprep.subr.mxu0 0.0
    %2947 = vmatpush2.msra.mxu0 0.0
    %2948 = vmatprep.subr.mxu0 0.0
    %2949 = vmatpush2.msra.mxu0 0.0
    %2950 = vmatprep.subr.mxu0 0.0
    %2951 = vmatpush2.msra.mxu0 0.0
    %2952 = vmatprep.subr.mxu0 0.0
    %2953 = vmatpush2.msra.mxu0 0.0
    %2954 = vmatprep.subr.mxu0 0.0
    %2955 = vmatpush2.msra.mxu0 0.0
    %2956 = vmatprep.subr.mxu0 0.0
    %2957 = vmatpush2.msra.mxu0 0.0
    %2958 = vmatprep.subr.mxu0 0.0
    %2959 = vmatpush2.msra.mxu0 0.0
    %2960 = vmatprep.subr.mxu0 0.0
    %2961 = vmatpush2.msra.mxu0 0.0
    %2962 = vmatprep.subr.mxu0 0.0
    %2963 = vmatpush2.msra.mxu0 0.0
    %2964 = vmatprep.subr.mxu0 0.0
    %2965 = vmatpush2.msra.mxu0 0.0
    %2966 = vmatprep.subr.mxu0 0.0
    %2967 = vmatpush2.msra.mxu0 0.0
    %2968 = vmatprep.subr.mxu0 0.0
    %2969 = vmatpush2.msra.mxu0 0.0
    %2970 = vmatprep.subr.mxu0 0.0
    %2971 = vmatpush2.msra.mxu0 0.0
    %2972 = vmatprep.subr.mxu0 0.0
    %2973 = vmatpush2.msra.mxu0 0.0
    %2974 = vmatprep.subr.mxu0 0.0
    %2975 = vmatpush2.msra.mxu0 0.0
    %2976 = vmatprep.mubr.f32.mxu0 0.0
    %2977 = vmatmul.mubr.f32.gmra.mxu0 %v2910
    %v2978 = vpop.f32.mrf.mxu0
    %v2979 = vadd.f32 0.0, %v2978
    %v2980 = vpop.f32.mrf.mxu0
    %2981 = vdwg.mxu0
    %2982 = vmatprep.subr.mxu0 0.0
    %2983 = vmatpush1.msra.mxu0 0.0
    %2984 = vmatprep.subr.mxu0 0.0
    %2985 = vmatpush1.msra.mxu0 0.0
    %2986 = vmatprep.subr.mxu0 0.0
    %2987 = vmatpush1.msra.mxu0 0.0
    %2988 = vmatprep.subr.mxu0 0.0
    %2989 = vmatpush1.msra.mxu0 0.0
    %2990 = vmatprep.subr.mxu0 0.0
    %2991 = vmatpush1.msra.mxu0 0.0
    %2992 = vmatprep.subr.mxu0 0.0
    %2993 = vmatpush1.msra.mxu0 0.0
    %2994 = vmatprep.subr.mxu0 0.0
    %2995 = vmatpush1.msra.mxu0 0.0
    %2996 = vmatprep.subr.mxu0 0.0
    %2997 = vmatpush1.msra.mxu0 0.0
    %2998 = vmatprep.subr.mxu0 0.0
    %2999 = vmatpush1.msra.mxu0 0.0
    %3000 = vmatprep.subr.mxu0 0.0
    %3001 = vmatpush1.msra.mxu0 0.0
    %3002 = vmatprep.subr.mxu0 0.0
    %3003 = vmatpush1.msra.mxu0 0.0
    %3004 = vmatprep.subr.mxu0 0.0
    %3005 = vmatpush1.msra.mxu0 0.0
    %3006 = vmatprep.subr.mxu0 0.0
    %3007 = vmatpush1.msra.mxu0 %v2665
    %3008 = vmatprep.subr.mxu0 0.0
    %3009 = vmatpush1.msra.mxu0 %v2664
    %3010 = vmatprep.subr.mxu0 0.0
    %3011 = vmatpush1.msra.mxu0 %v2663
    %3012 = vmatprep.subr.mxu0 0.0
    %3013 = vmatpush1.msra.mxu0 %v2662
    %3014 = vmatprep.subr.mxu0 0.0
    %3015 = vmatpush2.msra.mxu0 0.0
    %3016 = vmatprep.subr.mxu0 0.0
    %3017 = vmatpush2.msra.mxu0 0.0
    %3018 = vmatprep.subr.mxu0 0.0
    %3019 = vmatpush2.msra.mxu0 0.0
    %3020 = vmatprep.subr.mxu0 0.0
    %3021 = vmatpush2.msra.mxu0 0.0
    %3022 = vmatprep.subr.mxu0 0.0
    %3023 = vmatpush2.msra.mxu0 0.0
    %3024 = vmatprep.subr.mxu0 0.0
    %3025 = vmatpush2.msra.mxu0 0.0
    %3026 = vmatprep.subr.mxu0 0.0
    %3027 = vmatpush2.msra.mxu0 0.0
    %3028 = vmatprep.subr.mxu0 0.0
    %3029 = vmatpush2.msra.mxu0 0.0
    %3030 = vmatprep.subr.mxu0 0.0
    %3031 = vmatpush2.msra.mxu0 0.0
    %3032 = vmatprep.subr.mxu0 0.0
    %3033 = vmatpush2.msra.mxu0 0.0
    %3034 = vmatprep.subr.mxu0 0.0
    %3035 = vmatpush2.msra.mxu0 0.0
    %3036 = vmatprep.subr.mxu0 0.0
    %3037 = vmatpush2.msra.mxu0 0.0
    %3038 = vmatprep.subr.mxu0 0.0
    %3039 = vmatpush2.msra.mxu0 0.0
    %3040 = vmatprep.subr.mxu0 0.0
    %3041 = vmatpush2.msra.mxu0 0.0
    %3042 = vmatprep.subr.mxu0 0.0
    %3043 = vmatpush2.msra.mxu0 0.0
    %3044 = vmatprep.subr.mxu0 0.0
    %3045 = vmatpush2.msra.mxu0 0.0
    %3046 = vmatprep.mubr.f32.mxu0 0.0
    %3047 = vmatmul.mubr.f32.gmra.mxu0 %v2910
    %v3048 = vpop.f32.mrf.mxu0
    %v3049 = vadd.f32 0.0, %v3048
    %v3050 = vpop.f32.mrf.mxu0
    %3051 = vdwg.mxu0
    %v3053 = vrot.slane %v2979, 6
    %v3055 = vadd.f32 %v2473, %v3053
    %v3056 = vxor.u32 %v3055, 2147483648
    %v3057 = vmul.f32 %v3056, 1.442695
    %v3058 = vpow.pop %v3057
    %v3059 = vadd.f32 %v3058, 1.0
    %v3060 = vrcp.pop %v3059
    %v3061 = vmul.f32 1.0, %v3060
    %v3063 = vrot.slane %v3049, 6
    %v3065 = vadd.f32 %v2561, %v3063
    %v3066 = vxor.u32 %v3065, 2147483648
    %v3067 = vmul.f32 %v3066, 1.442695
    %v3068 = vpow.pop %v3067
    %v3069 = vadd.f32 %v3068, 1.0
    %v3070 = vrcp.pop %v3069
    %v3071 = vmul.f32 1.0, %v3070
    %3072 = vmatprep.subr.mxu0 0.0
    %3073 = vmatpush1.msra.mxu0 0.0
    %3074 = vmatprep.subr.mxu0 0.0
    %3075 = vmatpush1.msra.mxu0 0.0
    %3076 = vmatprep.subr.mxu0 0.0
    %3077 = vmatpush1.msra.mxu0 0.0
    %3078 = vmatprep.subr.mxu0 0.0
    %3079 = vmatpush1.msra.mxu0 0.0
    %3080 = vmatprep.subr.mxu0 0.0
    %3081 = vmatpush1.msra.mxu0 0.0
    %3082 = vmatprep.subr.mxu0 0.0
    %3083 = vmatpush1.msra.mxu0 0.0
    %3084 = vmatprep.subr.mxu0 0.0
    %3085 = vmatpush1.msra.mxu0 0.0
    %3086 = vmatprep.subr.mxu0 0.0
    %3087 = vmatpush1.msra.mxu0 0.0
    %3088 = vmatprep.subr.mxu0 0.0
    %3089 = vmatpush1.msra.mxu0 0.0
    %3090 = vmatprep.subr.mxu0 0.0
    %3091 = vmatpush1.msra.mxu0 0.0
    %3092 = vmatprep.subr.mxu0 0.0
    %3093 = vmatpush1.msra.mxu0 0.0
    %3094 = vmatprep.subr.mxu0 0.0
    %3095 = vmatpush1.msra.mxu0 0.0
    %3096 = vmatprep.subr.mxu0 0.0
    %3097 = vmatpush1.msra.mxu0 %v2670
    %3098 = vmatprep.subr.mxu0 0.0
    %3099 = vmatpush1.msra.mxu0 %v2669
    %3100 = vmatprep.subr.mxu0 0.0
    %3101 = vmatpush1.msra.mxu0 %v2668
    %3102 = vmatprep.subr.mxu0 0.0
    %3103 = vmatpush1.msra.mxu0 %v2667
    %3104 = vmatprep.subr.mxu0 0.0
    %3105 = vmatpush2.msra.mxu0 0.0
    %3106 = vmatprep.subr.mxu0 0.0
    %3107 = vmatpush2.msra.mxu0 0.0
    %3108 = vmatprep.subr.mxu0 0.0
    %3109 = vmatpush2.msra.mxu0 0.0
    %3110 = vmatprep.subr.mxu0 0.0
    %3111 = vmatpush2.msra.mxu0 0.0
    %3112 = vmatprep.subr.mxu0 0.0
    %3113 = vmatpush2.msra.mxu0 0.0
    %3114 = vmatprep.subr.mxu0 0.0
    %3115 = vmatpush2.msra.mxu0 0.0
    %3116 = vmatprep.subr.mxu0 0.0
    %3117 = vmatpush2.msra.mxu0 0.0
    %3118 = vmatprep.subr.mxu0 0.0
    %3119 = vmatpush2.msra.mxu0 0.0
    %3120 = vmatprep.subr.mxu0 0.0
    %3121 = vmatpush2.msra.mxu0 0.0
    %3122 = vmatprep.subr.mxu0 0.0
    %3123 = vmatpush2.msra.mxu0 0.0
    %3124 = vmatprep.subr.mxu0 0.0
    %3125 = vmatpush2.msra.mxu0 0.0
    %3126 = vmatprep.subr.mxu0 0.0
    %3127 = vmatpush2.msra.mxu0 0.0
    %3128 = vmatprep.subr.mxu0 0.0
    %3129 = vmatpush2.msra.mxu0 0.0
    %3130 = vmatprep.subr.mxu0 0.0
    %3131 = vmatpush2.msra.mxu0 0.0
    %3132 = vmatprep.subr.mxu0 0.0
    %3133 = vmatpush2.msra.mxu0 0.0
    %3134 = vmatprep.subr.mxu0 0.0
    %3135 = vmatpush2.msra.mxu0 0.0
    %3136 = vmatprep.mubr.f32.mxu0 0.0
    %3137 = vmatmul.mubr.f32.gmra.mxu0 %v2910
    %v3138 = vpop.f32.mrf.mxu0
    %v3139 = vadd.f32 %v2830, %v3138
    %v3140 = vpop.f32.mrf.mxu0
    %3141 = vdwg.mxu0
    %v3143 = vrot.slane %v3139, 6
    %v3145 = vmul.f32 %v3061, %v3143
    %v3146 = vadd.f32 %v2649, %v3145
    %v3147 = vtanh.pop %v3146
    %v3148 = vsub.f32 1.0, %v3071
    %v3149 = vmul.f32 %v3148, %v3147
    %v3150 = vrot.slane %v2908, 6
    %v3152 = vmul.f32 %v3071, %v3150
    %v3153 = vadd.f32 %v3149, %v3152
    %v3155 = vrot.slane %v3153, 2
    %v3156 = vsel %vm430, %v3155, 0
    %3158 = vmatprep.subr.mxu0 0.0
    %3159 = vmatpush1.msra.mxu0 0.0
    %3160 = vmatprep.subr.mxu0 0.0
    %3161 = vmatpush1.msra.mxu0 0.0
    %3162 = vmatprep.subr.mxu0 0.0
    %3163 = vmatpush1.msra.mxu0 0.0
    %3164 = vmatprep.subr.mxu0 0.0
    %3165 = vmatpush1.msra.mxu0 0.0
    %3166 = vmatprep.subr.mxu0 0.0
    %3167 = vmatpush1.msra.mxu0 0.0
    %3168 = vmatprep.subr.mxu0 0.0
    %3169 = vmatpush1.msra.mxu0 0.0
    %3170 = vmatprep.subr.mxu0 0.0
    %3171 = vmatpush1.msra.mxu0 0.0
    %3172 = vmatprep.subr.mxu0 0.0
    %3173 = vmatpush1.msra.mxu0 0.0
    %3174 = vmatprep.subr.mxu0 0.0
    %3175 = vmatpush1.msra.mxu0 0.0
    %3176 = vmatprep.subr.mxu0 0.0
    %3177 = vmatpush1.msra.mxu0 0.0
    %3178 = vmatprep.subr.mxu0 0.0
    %3179 = vmatpush1.msra.mxu0 0.0
    %3180 = vmatprep.subr.mxu0 0.0
    %3181 = vmatpush1.msra.mxu0 0.0
    %3182 = vmatprep.subr.mxu0 0.0
    %3183 = vmatpush1.msra.mxu0 %v2660
    %3184 = vmatprep.subr.mxu0 0.0
    %3185 = vmatpush1.msra.mxu0 %v2659
    %3186 = vmatprep.subr.mxu0 0.0
    %3187 = vmatpush1.msra.mxu0 %v2658
    %3188 = vmatprep.subr.mxu0 0.0
    %3189 = vmatpush1.msra.mxu0 %v2657
    %3190 = vmatprep.subr.mxu0 0.0
    %3191 = vmatpush2.msra.mxu0 0.0
    %3192 = vmatprep.subr.mxu0 0.0
    %3193 = vmatpush2.msra.mxu0 0.0
    %3194 = vmatprep.subr.mxu0 0.0
    %3195 = vmatpush2.msra.mxu0 0.0
    %3196 = vmatprep.subr.mxu0 0.0
    %3197 = vmatpush2.msra.mxu0 0.0
    %3198 = vmatprep.subr.mxu0 0.0
    %3199 = vmatpush2.msra.mxu0 0.0
    %3200 = vmatprep.subr.mxu0 0.0
    %3201 = vmatpush2.msra.mxu0 0.0
    %3202 = vmatprep.subr.mxu0 0.0
    %3203 = vmatpush2.msra.mxu0 0.0
    %3204 = vmatprep.subr.mxu0 0.0
    %3205 = vmatpush2.msra.mxu0 0.0
    %3206 = vmatprep.subr.mxu0 0.0
    %3207 = vmatpush2.msra.mxu0 0.0
    %3208 = vmatprep.subr.mxu0 0.0
    %3209 = vmatpush2.msra.mxu0 0.0
    %3210 = vmatprep.subr.mxu0 0.0
    %3211 = vmatpush2.msra.mxu0 0.0
    %3212 = vmatprep.subr.mxu0 0.0
    %3213 = vmatpush2.msra.mxu0 0.0
    %3214 = vmatprep.subr.mxu0 0.0
    %3215 = vmatpush2.msra.mxu0 0.0
    %3216 = vmatprep.subr.mxu0 0.0
    %3217 = vmatpush2.msra.mxu0 0.0
    %3218 = vmatprep.subr.mxu0 0.0
    %3219 = vmatpush2.msra.mxu0 0.0
    %3220 = vmatprep.subr.mxu0 0.0
    %3221 = vmatpush2.msra.mxu0 0.0
    %3222 = vmatprep.mubr.f32.mxu0 0.0
    %3223 = vmatmul.mubr.f32.gmra.mxu0 %v3156
    %v3224 = vpop.f32.mrf.mxu0
    %v3225 = vadd.f32 0.0, %v3224
    %v3226 = vpop.f32.mrf.mxu0
    %3227 = vdwg.mxu0
    %3228 = vmatprep.subr.mxu0 0.0
    %3229 = vmatpush1.msra.mxu0 0.0
    %3230 = vmatprep.subr.mxu0 0.0
    %3231 = vmatpush1.msra.mxu0 0.0
    %3232 = vmatprep.subr.mxu0 0.0
    %3233 = vmatpush1.msra.mxu0 0.0
    %3234 = vmatprep.subr.mxu0 0.0
    %3235 = vmatpush1.msra.mxu0 0.0
    %3236 = vmatprep.subr.mxu0 0.0
    %3237 = vmatpush1.msra.mxu0 0.0
    %3238 = vmatprep.subr.mxu0 0.0
    %3239 = vmatpush1.msra.mxu0 0.0
    %3240 = vmatprep.subr.mxu0 0.0
    %3241 = vmatpush1.msra.mxu0 0.0
    %3242 = vmatprep.subr.mxu0 0.0
    %3243 = vmatpush1.msra.mxu0 0.0
    %3244 = vmatprep.subr.mxu0 0.0
    %3245 = vmatpush1.msra.mxu0 0.0
    %3246 = vmatprep.subr.mxu0 0.0
    %3247 = vmatpush1.msra.mxu0 0.0
    %3248 = vmatprep.subr.mxu0 0.0
    %3249 = vmatpush1.msra.mxu0 0.0
    %3250 = vmatprep.subr.mxu0 0.0
    %3251 = vmatpush1.msra.mxu0 0.0
    %3252 = vmatprep.subr.mxu0 0.0
    %3253 = vmatpush1.msra.mxu0 %v2665
    %3254 = vmatprep.subr.mxu0 0.0
    %3255 = vmatpush1.msra.mxu0 %v2664
    %3256 = vmatprep.subr.mxu0 0.0
    %3257 = vmatpush1.msra.mxu0 %v2663
    %3258 = vmatprep.subr.mxu0 0.0
    %3259 = vmatpush1.msra.mxu0 %v2662
    %3260 = vmatprep.subr.mxu0 0.0
    %3261 = vmatpush2.msra.mxu0 0.0
    %3262 = vmatprep.subr.mxu0 0.0
    %3263 = vmatpush2.msra.mxu0 0.0
    %3264 = vmatprep.subr.mxu0 0.0
    %3265 = vmatpush2.msra.mxu0 0.0
    %3266 = vmatprep.subr.mxu0 0.0
    %3267 = vmatpush2.msra.mxu0 0.0
    %3268 = vmatprep.subr.mxu0 0.0
    %3269 = vmatpush2.msra.mxu0 0.0
    %3270 = vmatprep.subr.mxu0 0.0
    %3271 = vmatpush2.msra.mxu0 0.0
    %3272 = vmatprep.subr.mxu0 0.0
    %3273 = vmatpush2.msra.mxu0 0.0
    %3274 = vmatprep.subr.mxu0 0.0
    %3275 = vmatpush2.msra.mxu0 0.0
    %3276 = vmatprep.subr.mxu0 0.0
    %3277 = vmatpush2.msra.mxu0 0.0
    %3278 = vmatprep.subr.mxu0 0.0
    %3279 = vmatpush2.msra.mxu0 0.0
    %3280 = vmatprep.subr.mxu0 0.0
    %3281 = vmatpush2.msra.mxu0 0.0
    %3282 = vmatprep.subr.mxu0 0.0
    %3283 = vmatpush2.msra.mxu0 0.0
    %3284 = vmatprep.subr.mxu0 0.0
    %3285 = vmatpush2.msra.mxu0 0.0
    %3286 = vmatprep.subr.mxu0 0.0
    %3287 = vmatpush2.msra.mxu0 0.0
    %3288 = vmatprep.subr.mxu0 0.0
    %3289 = vmatpush2.msra.mxu0 0.0
    %3290 = vmatprep.subr.mxu0 0.0
    %3291 = vmatpush2.msra.mxu0 0.0
    %3292 = vmatprep.mubr.f32.mxu0 0.0
    %3293 = vmatmul.mubr.f32.gmra.mxu0 %v3156
    %v3294 = vpop.f32.mrf.mxu0
    %v3295 = vadd.f32 0.0, %v3294
    %v3296 = vpop.f32.mrf.mxu0
    %3297 = vdwg.mxu0
    %v3299 = vrot.slane %v3225, 4
    %v3301 = vadd.f32 %v2473, %v3299
    %v3302 = vxor.u32 %v3301, 2147483648
    %v3303 = vmul.f32 %v3302, 1.442695
    %v3304 = vpow.pop %v3303
    %v3305 = vadd.f32 %v3304, 1.0
    %v3306 = vrcp.pop %v3305
    %v3307 = vmul.f32 1.0, %v3306
    %v3309 = vrot.slane %v3295, 4
    %v3311 = vadd.f32 %v2561, %v3309
    %v3312 = vxor.u32 %v3311, 2147483648
    %v3313 = vmul.f32 %v3312, 1.442695
    %v3314 = vpow.pop %v3313
    %v3315 = vadd.f32 %v3314, 1.0
    %v3316 = vrcp.pop %v3315
    %v3317 = vmul.f32 1.0, %v3316
    %3318 = vmatprep.subr.mxu0 0.0
    %3319 = vmatpush1.msra.mxu0 0.0
    %3320 = vmatprep.subr.mxu0 0.0
    %3321 = vmatpush1.msra.mxu0 0.0
    %3322 = vmatprep.subr.mxu0 0.0
    %3323 = vmatpush1.msra.mxu0 0.0
    %3324 = vmatprep.subr.mxu0 0.0
    %3325 = vmatpush1.msra.mxu0 0.0
    %3326 = vmatprep.subr.mxu0 0.0
    %3327 = vmatpush1.msra.mxu0 0.0
    %3328 = vmatprep.subr.mxu0 0.0
    %3329 = vmatpush1.msra.mxu0 0.0
    %3330 = vmatprep.subr.mxu0 0.0
    %3331 = vmatpush1.msra.mxu0 0.0
    %3332 = vmatprep.subr.mxu0 0.0
    %3333 = vmatpush1.msra.mxu0 0.0
    %3334 = vmatprep.subr.mxu0 0.0
    %3335 = vmatpush1.msra.mxu0 0.0
    %3336 = vmatprep.subr.mxu0 0.0
    %3337 = vmatpush1.msra.mxu0 0.0
    %3338 = vmatprep.subr.mxu0 0.0
    %3339 = vmatpush1.msra.mxu0 0.0
    %3340 = vmatprep.subr.mxu0 0.0
    %3341 = vmatpush1.msra.mxu0 0.0
    %3342 = vmatprep.subr.mxu0 0.0
    %3343 = vmatpush1.msra.mxu0 %v2670
    %3344 = vmatprep.subr.mxu0 0.0
    %3345 = vmatpush1.msra.mxu0 %v2669
    %3346 = vmatprep.subr.mxu0 0.0
    %3347 = vmatpush1.msra.mxu0 %v2668
    %3348 = vmatprep.subr.mxu0 0.0
    %3349 = vmatpush1.msra.mxu0 %v2667
    %3350 = vmatprep.subr.mxu0 0.0
    %3351 = vmatpush2.msra.mxu0 0.0
    %3352 = vmatprep.subr.mxu0 0.0
    %3353 = vmatpush2.msra.mxu0 0.0
    %3354 = vmatprep.subr.mxu0 0.0
    %3355 = vmatpush2.msra.mxu0 0.0
    %3356 = vmatprep.subr.mxu0 0.0
    %3357 = vmatpush2.msra.mxu0 0.0
    %3358 = vmatprep.subr.mxu0 0.0
    %3359 = vmatpush2.msra.mxu0 0.0
    %3360 = vmatprep.subr.mxu0 0.0
    %3361 = vmatpush2.msra.mxu0 0.0
    %3362 = vmatprep.subr.mxu0 0.0
    %3363 = vmatpush2.msra.mxu0 0.0
    %3364 = vmatprep.subr.mxu0 0.0
    %3365 = vmatpush2.msra.mxu0 0.0
    %3366 = vmatprep.subr.mxu0 0.0
    %3367 = vmatpush2.msra.mxu0 0.0
    %3368 = vmatprep.subr.mxu0 0.0
    %3369 = vmatpush2.msra.mxu0 0.0
    %3370 = vmatprep.subr.mxu0 0.0
    %3371 = vmatpush2.msra.mxu0 0.0
    %3372 = vmatprep.subr.mxu0 0.0
    %3373 = vmatpush2.msra.mxu0 0.0
    %3374 = vmatprep.subr.mxu0 0.0
    %3375 = vmatpush2.msra.mxu0 0.0
    %3376 = vmatprep.subr.mxu0 0.0
    %3377 = vmatpush2.msra.mxu0 0.0
    %3378 = vmatprep.subr.mxu0 0.0
    %3379 = vmatpush2.msra.mxu0 0.0
    %3380 = vmatprep.subr.mxu0 0.0
    %3381 = vmatpush2.msra.mxu0 0.0
    %3382 = vmatprep.mubr.f32.mxu0 0.0
    %3383 = vmatmul.mubr.f32.gmra.mxu0 %v3156
    %v3384 = vpop.f32.mrf.mxu0
    %v3385 = vadd.f32 %v2830, %v3384
    %v3386 = vpop.f32.mrf.mxu0
    %3387 = vdwg.mxu0
    %v3389 = vrot.slane %v3385, 4
    %v3391 = vmul.f32 %v3307, %v3389
    %v3392 = vadd.f32 %v2649, %v3391
    %v3393 = vtanh.pop %v3392
    %v3394 = vsub.f32 1.0, %v3317
    %v3395 = vmul.f32 %v3394, %v3393
    %v3396 = vrot.slane %v3153, 6
    %v3398 = vmul.f32 %v3317, %v3396
    %v3399 = vadd.f32 %v3395, %v3398
    %v3401 = vrot.slane %v3399, 4
    %v3402 = vsel %vm430, %v3401, 0
    %3404 = vmatprep.subr.mxu0 0.0
    %3405 = vmatpush1.msra.mxu0 0.0
    %3406 = vmatprep.subr.mxu0 0.0
    %3407 = vmatpush1.msra.mxu0 0.0
    %3408 = vmatprep.subr.mxu0 0.0
    %3409 = vmatpush1.msra.mxu0 0.0
    %3410 = vmatprep.subr.mxu0 0.0
    %3411 = vmatpush1.msra.mxu0 0.0
    %3412 = vmatprep.subr.mxu0 0.0
    %3413 = vmatpush1.msra.mxu0 0.0
    %3414 = vmatprep.subr.mxu0 0.0
    %3415 = vmatpush1.msra.mxu0 0.0
    %3416 = vmatprep.subr.mxu0 0.0
    %3417 = vmatpush1.msra.mxu0 0.0
    %3418 = vmatprep.subr.mxu0 0.0
    %3419 = vmatpush1.msra.mxu0 0.0
    %3420 = vmatprep.subr.mxu0 0.0
    %3421 = vmatpush1.msra.mxu0 0.0
    %3422 = vmatprep.subr.mxu0 0.0
    %3423 = vmatpush1.msra.mxu0 0.0
    %3424 = vmatprep.subr.mxu0 0.0
    %3425 = vmatpush1.msra.mxu0 0.0
    %3426 = vmatprep.subr.mxu0 0.0
    %3427 = vmatpush1.msra.mxu0 0.0
    %3428 = vmatprep.subr.mxu0 0.0
    %3429 = vmatpush1.msra.mxu0 %v2660
    %3430 = vmatprep.subr.mxu0 0.0
    %3431 = vmatpush1.msra.mxu0 %v2659
    %3432 = vmatprep.subr.mxu0 0.0
    %3433 = vmatpush1.msra.mxu0 %v2658
    %3434 = vmatprep.subr.mxu0 0.0
    %3435 = vmatpush1.msra.mxu0 %v2657
    %3436 = vmatprep.subr.mxu0 0.0
    %3437 = vmatpush2.msra.mxu0 0.0
    %3438 = vmatprep.subr.mxu0 0.0
    %3439 = vmatpush2.msra.mxu0 0.0
    %3440 = vmatprep.subr.mxu0 0.0
    %3441 = vmatpush2.msra.mxu0 0.0
    %3442 = vmatprep.subr.mxu0 0.0
    %3443 = vmatpush2.msra.mxu0 0.0
    %3444 = vmatprep.subr.mxu0 0.0
    %3445 = vmatpush2.msra.mxu0 0.0
    %3446 = vmatprep.subr.mxu0 0.0
    %3447 = vmatpush2.msra.mxu0 0.0
    %3448 = vmatprep.subr.mxu0 0.0
    %3449 = vmatpush2.msra.mxu0 0.0
    %3450 = vmatprep.subr.mxu0 0.0
    %3451 = vmatpush2.msra.mxu0 0.0
    %3452 = vmatprep.subr.mxu0 0.0
    %3453 = vmatpush2.msra.mxu0 0.0
    %3454 = vmatprep.subr.mxu0 0.0
    %3455 = vmatpush2.msra.mxu0 0.0
    %3456 = vmatprep.subr.mxu0 0.0
    %3457 = vmatpush2.msra.mxu0 0.0
    %3458 = vmatprep.subr.mxu0 0.0
    %3459 = vmatpush2.msra.mxu0 0.0
    %3460 = vmatprep.subr.mxu0 0.0
    %3461 = vmatpush2.msra.mxu0 0.0
    %3462 = vmatprep.subr.mxu0 0.0
    %3463 = vmatpush2.msra.mxu0 0.0
    %3464 = vmatprep.subr.mxu0 0.0
    %3465 = vmatpush2.msra.mxu0 0.0
    %3466 = vmatprep.subr.mxu0 0.0
    %3467 = vmatpush2.msra.mxu0 0.0
    %3468 = vmatprep.mubr.f32.mxu0 0.0
    %3469 = vmatmul.mubr.f32.gmra.mxu0 %v3402
    %v3470 = vpop.f32.mrf.mxu0
    %v3471 = vadd.f32 0.0, %v3470
    %v3472 = vpop.f32.mrf.mxu0
    %3473 = vdwg.mxu0
    %3474 = vmatprep.subr.mxu0 0.0
    %3475 = vmatpush1.msra.mxu0 0.0
    %3476 = vmatprep.subr.mxu0 0.0
    %3477 = vmatpush1.msra.mxu0 0.0
    %3478 = vmatprep.subr.mxu0 0.0
    %3479 = vmatpush1.msra.mxu0 0.0
    %3480 = vmatprep.subr.mxu0 0.0
    %3481 = vmatpush1.msra.mxu0 0.0
    %3482 = vmatprep.subr.mxu0 0.0
    %3483 = vmatpush1.msra.mxu0 0.0
    %3484 = vmatprep.subr.mxu0 0.0
    %3485 = vmatpush1.msra.mxu0 0.0
    %3486 = vmatprep.subr.mxu0 0.0
    %3487 = vmatpush1.msra.mxu0 0.0
    %3488 = vmatprep.subr.mxu0 0.0
    %3489 = vmatpush1.msra.mxu0 0.0
    %3490 = vmatprep.subr.mxu0 0.0
    %3491 = vmatpush1.msra.mxu0 0.0
    %3492 = vmatprep.subr.mxu0 0.0
    %3493 = vmatpush1.msra.mxu0 0.0
    %3494 = vmatprep.subr.mxu0 0.0
    %3495 = vmatpush1.msra.mxu0 0.0
    %3496 = vmatprep.subr.mxu0 0.0
    %3497 = vmatpush1.msra.mxu0 0.0
    %3498 = vmatprep.subr.mxu0 0.0
    %3499 = vmatpush1.msra.mxu0 %v2665
    %3500 = vmatprep.subr.mxu0 0.0
    %3501 = vmatpush1.msra.mxu0 %v2664
    %3502 = vmatprep.subr.mxu0 0.0
    %3503 = vmatpush1.msra.mxu0 %v2663
    %3504 = vmatprep.subr.mxu0 0.0
    %3505 = vmatpush1.msra.mxu0 %v2662
    %3506 = vmatprep.subr.mxu0 0.0
    %3507 = vmatpush2.msra.mxu0 0.0
    %3508 = vmatprep.subr.mxu0 0.0
    %3509 = vmatpush2.msra.mxu0 0.0
    %3510 = vmatprep.subr.mxu0 0.0
    %3511 = vmatpush2.msra.mxu0 0.0
    %3512 = vmatprep.subr.mxu0 0.0
    %3513 = vmatpush2.msra.mxu0 0.0
    %3514 = vmatprep.subr.mxu0 0.0
    %3515 = vmatpush2.msra.mxu0 0.0
    %3516 = vmatprep.subr.mxu0 0.0
    %3517 = vmatpush2.msra.mxu0 0.0
    %3518 = vmatprep.subr.mxu0 0.0
    %3519 = vmatpush2.msra.mxu0 0.0
    %3520 = vmatprep.subr.mxu0 0.0
    %3521 = vmatpush2.msra.mxu0 0.0
    %3522 = vmatprep.subr.mxu0 0.0
    %3523 = vmatpush2.msra.mxu0 0.0
    %3524 = vmatprep.subr.mxu0 0.0
    %3525 = vmatpush2.msra.mxu0 0.0
    %3526 = vmatprep.subr.mxu0 0.0
    %3527 = vmatpush2.msra.mxu0 0.0
    %3528 = vmatprep.subr.mxu0 0.0
    %3529 = vmatpush2.msra.mxu0 0.0
    %3530 = vmatprep.subr.mxu0 0.0
    %3531 = vmatpush2.msra.mxu0 0.0
    %3532 = vmatprep.subr.mxu0 0.0
    %3533 = vmatpush2.msra.mxu0 0.0
    %3534 = vmatprep.subr.mxu0 0.0
    %3535 = vmatpush2.msra.mxu0 0.0
    %3536 = vmatprep.subr.mxu0 0.0
    %3537 = vmatpush2.msra.mxu0 0.0
    %3538 = vmatprep.mubr.f32.mxu0 0.0
    %3539 = vmatmul.mubr.f32.gmra.mxu0 %v3402
    %v3540 = vpop.f32.mrf.mxu0
    %v3541 = vadd.f32 0.0, %v3540
    %v3542 = vpop.f32.mrf.mxu0
    %3543 = vdwg.mxu0
    %v3545 = vrot.slane %v3471, 2
    %v3547 = vadd.f32 %v2473, %v3545
    %v3548 = vxor.u32 %v3547, 2147483648
    %v3549 = vmul.f32 %v3548, 1.442695
    %v3550 = vpow.pop %v3549
    %v3551 = vadd.f32 %v3550, 1.0
    %v3552 = vrcp.pop %v3551
    %v3553 = vmul.f32 1.0, %v3552
    %v3555 = vrot.slane %v3541, 2
    %v3557 = vadd.f32 %v2561, %v3555
    %v3558 = vxor.u32 %v3557, 2147483648
    %v3559 = vmul.f32 %v3558, 1.442695
    %v3560 = vpow.pop %v3559
    %v3561 = vadd.f32 %v3560, 1.0
    %v3562 = vrcp.pop %v3561
    %v3563 = vmul.f32 1.0, %v3562
    %3564 = vmatprep.subr.mxu0 0.0
    %3565 = vmatpush1.msra.mxu0 0.0
    %3566 = vmatprep.subr.mxu0 0.0
    %3567 = vmatpush1.msra.mxu0 0.0
    %3568 = vmatprep.subr.mxu0 0.0
    %3569 = vmatpush1.msra.mxu0 0.0
    %3570 = vmatprep.subr.mxu0 0.0
    %3571 = vmatpush1.msra.mxu0 0.0
    %3572 = vmatprep.subr.mxu0 0.0
    %3573 = vmatpush1.msra.mxu0 0.0
    %3574 = vmatprep.subr.mxu0 0.0
    %3575 = vmatpush1.msra.mxu0 0.0
    %3576 = vmatprep.subr.mxu0 0.0
    %3577 = vmatpush1.msra.mxu0 0.0
    %3578 = vmatprep.subr.mxu0 0.0
    %3579 = vmatpush1.msra.mxu0 0.0
    %3580 = vmatprep.subr.mxu0 0.0
    %3581 = vmatpush1.msra.mxu0 0.0
    %3582 = vmatprep.subr.mxu0 0.0
    %3583 = vmatpush1.msra.mxu0 0.0
    %3584 = vmatprep.subr.mxu0 0.0
    %3585 = vmatpush1.msra.mxu0 0.0
    %3586 = vmatprep.subr.mxu0 0.0
    %3587 = vmatpush1.msra.mxu0 0.0
    %3588 = vmatprep.subr.mxu0 0.0
    %3589 = vmatpush1.msra.mxu0 %v2670
    %3590 = vmatprep.subr.mxu0 0.0
    %3591 = vmatpush1.msra.mxu0 %v2669
    %3592 = vmatprep.subr.mxu0 0.0
    %3593 = vmatpush1.msra.mxu0 %v2668
    %3594 = vmatprep.subr.mxu0 0.0
    %3595 = vmatpush1.msra.mxu0 %v2667
    %3596 = vmatprep.subr.mxu0 0.0
    %3597 = vmatpush2.msra.mxu0 0.0
    %3598 = vmatprep.subr.mxu0 0.0
    %3599 = vmatpush2.msra.mxu0 0.0
    %3600 = vmatprep.subr.mxu0 0.0
    %3601 = vmatpush2.msra.mxu0 0.0
    %3602 = vmatprep.subr.mxu0 0.0
    %3603 = vmatpush2.msra.mxu0 0.0
    %3604 = vmatprep.subr.mxu0 0.0
    %3605 = vmatpush2.msra.mxu0 0.0
    %3606 = vmatprep.subr.mxu0 0.0
    %3607 = vmatpush2.msra.mxu0 0.0
    %3608 = vmatprep.subr.mxu0 0.0
    %3609 = vmatpush2.msra.mxu0 0.0
    %3610 = vmatprep.subr.mxu0 0.0
    %3611 = vmatpush2.msra.mxu0 0.0
    %3612 = vmatprep.subr.mxu0 0.0
    %3613 = vmatpush2.msra.mxu0 0.0
    %3614 = vmatprep.subr.mxu0 0.0
    %3615 = vmatpush2.msra.mxu0 0.0
    %3616 = vmatprep.subr.mxu0 0.0
    %3617 = vmatpush2.msra.mxu0 0.0
    %3618 = vmatprep.subr.mxu0 0.0
    %3619 = vmatpush2.msra.mxu0 0.0
    %3620 = vmatprep.subr.mxu0 0.0
    %3621 = vmatpush2.msra.mxu0 0.0
    %3622 = vmatprep.subr.mxu0 0.0
    %3623 = vmatpush2.msra.mxu0 0.0
    %3624 = vmatprep.subr.mxu0 0.0
    %3625 = vmatpush2.msra.mxu0 0.0
    %3626 = vmatprep.subr.mxu0 0.0
    %3627 = vmatpush2.msra.mxu0 0.0
    %3628 = vmatprep.mubr.f32.mxu0 0.0
    %3629 = vmatmul.mubr.f32.gmra.mxu0 %v3402
    %v3630 = vpop.f32.mrf.mxu0
    %v3631 = vadd.f32 %v2830, %v3630
    %v3632 = vpop.f32.mrf.mxu0
    %3633 = vdwg.mxu0
    %v3635 = vrot.slane %v3631, 2
    %v3637 = vmul.f32 %v3553, %v3635
    %v3638 = vadd.f32 %v2649, %v3637
    %v3639 = vtanh.pop %v3638
    %v3640 = vsub.f32 1.0, %v3563
    %v3641 = vmul.f32 %v3640, %v3639
    %v3642 = vrot.slane %v3399, 6
    %v3644 = vmul.f32 %v3563, %v3642
    %v3645 = vadd.f32 %v3641, %v3644
    %v3647 = vrot.slane %v3645, 6
    %v3648 = vsel %vm430, %v3647, 0
    %3650 = vmatprep.subr.mxu0 0.0
    %3651 = vmatpush1.msra.mxu0 0.0
    %3652 = vmatprep.subr.mxu0 0.0
    %3653 = vmatpush1.msra.mxu0 0.0
    %3654 = vmatprep.subr.mxu0 0.0
    %3655 = vmatpush1.msra.mxu0 0.0
    %3656 = vmatprep.subr.mxu0 0.0
    %3657 = vmatpush1.msra.mxu0 0.0
    %3658 = vmatprep.subr.mxu0 0.0
    %3659 = vmatpush1.msra.mxu0 0.0
    %3660 = vmatprep.subr.mxu0 0.0
    %3661 = vmatpush1.msra.mxu0 0.0
    %3662 = vmatprep.subr.mxu0 0.0
    %3663 = vmatpush1.msra.mxu0 0.0
    %3664 = vmatprep.subr.mxu0 0.0
    %3665 = vmatpush1.msra.mxu0 0.0
    %3666 = vmatprep.subr.mxu0 0.0
    %3667 = vmatpush1.msra.mxu0 0.0
    %3668 = vmatprep.subr.mxu0 0.0
    %3669 = vmatpush1.msra.mxu0 0.0
    %3670 = vmatprep.subr.mxu0 0.0
    %3671 = vmatpush1.msra.mxu0 0.0
    %3672 = vmatprep.subr.mxu0 0.0
    %3673 = vmatpush1.msra.mxu0 0.0
    %3674 = vmatprep.subr.mxu0 0.0
    %3675 = vmatpush1.msra.mxu0 %v2660
    %3676 = vmatprep.subr.mxu0 0.0
    %3677 = vmatpush1.msra.mxu0 %v2659
    %3678 = vmatprep.subr.mxu0 0.0
    %3679 = vmatpush1.msra.mxu0 %v2658
    %3680 = vmatprep.subr.mxu0 0.0
    %3681 = vmatpush1.msra.mxu0 %v2657
    %3682 = vmatprep.subr.mxu0 0.0
    %3683 = vmatpush2.msra.mxu0 0.0
    %3684 = vmatprep.subr.mxu0 0.0
    %3685 = vmatpush2.msra.mxu0 0.0
    %3686 = vmatprep.subr.mxu0 0.0
    %3687 = vmatpush2.msra.mxu0 0.0
    %3688 = vmatprep.subr.mxu0 0.0
    %3689 = vmatpush2.msra.mxu0 0.0
    %3690 = vmatprep.subr.mxu0 0.0
    %3691 = vmatpush2.msra.mxu0 0.0
    %3692 = vmatprep.subr.mxu0 0.0
    %3693 = vmatpush2.msra.mxu0 0.0
    %3694 = vmatprep.subr.mxu0 0.0
    %3695 = vmatpush2.msra.mxu0 0.0
    %3696 = vmatprep.subr.mxu0 0.0
    %3697 = vmatpush2.msra.mxu0 0.0
    %3698 = vmatprep.subr.mxu0 0.0
    %3699 = vmatpush2.msra.mxu0 0.0
    %3700 = vmatprep.subr.mxu0 0.0
    %3701 = vmatpush2.msra.mxu0 0.0
    %3702 = vmatprep.subr.mxu0 0.0
    %3703 = vmatpush2.msra.mxu0 0.0
    %3704 = vmatprep.subr.mxu0 0.0
    %3705 = vmatpush2.msra.mxu0 0.0
    %3706 = vmatprep.subr.mxu0 0.0
    %3707 = vmatpush2.msra.mxu0 0.0
    %3708 = vmatprep.subr.mxu0 0.0
    %3709 = vmatpush2.msra.mxu0 0.0
    %3710 = vmatprep.subr.mxu0 0.0
    %3711 = vmatpush2.msra.mxu0 0.0
    %3712 = vmatprep.subr.mxu0 0.0
    %3713 = vmatpush2.msra.mxu0 0.0
    %3714 = vmatprep.mubr.f32.mxu0 0.0
    %3715 = vmatmul.mubr.f32.gmra.mxu0 %v3648
    %v3716 = vpop.f32.mrf.mxu0
    %v3717 = vadd.f32 0.0, %v3716
    %v3718 = vpop.f32.mrf.mxu0
    %3719 = vdwg.mxu0
    %3720 = vmatprep.subr.mxu0 0.0
    %3721 = vmatpush1.msra.mxu0 0.0
    %3722 = vmatprep.subr.mxu0 0.0
    %3723 = vmatpush1.msra.mxu0 0.0
    %3724 = vmatprep.subr.mxu0 0.0
    %3725 = vmatpush1.msra.mxu0 0.0
    %3726 = vmatprep.subr.mxu0 0.0
    %3727 = vmatpush1.msra.mxu0 0.0
    %3728 = vmatprep.subr.mxu0 0.0
    %3729 = vmatpush1.msra.mxu0 0.0
    %3730 = vmatprep.subr.mxu0 0.0
    %3731 = vmatpush1.msra.mxu0 0.0
    %3732 = vmatprep.subr.mxu0 0.0
    %3733 = vmatpush1.msra.mxu0 0.0
    %3734 = vmatprep.subr.mxu0 0.0
    %3735 = vmatpush1.msra.mxu0 0.0
    %3736 = vmatprep.subr.mxu0 0.0
    %3737 = vmatpush1.msra.mxu0 0.0
    %3738 = vmatprep.subr.mxu0 0.0
    %3739 = vmatpush1.msra.mxu0 0.0
    %3740 = vmatprep.subr.mxu0 0.0
    %3741 = vmatpush1.msra.mxu0 0.0
    %3742 = vmatprep.subr.mxu0 0.0
    %3743 = vmatpush1.msra.mxu0 0.0
    %3744 = vmatprep.subr.mxu0 0.0
    %3745 = vmatpush1.msra.mxu0 %v2665
    %3746 = vmatprep.subr.mxu0 0.0
    %3747 = vmatpush1.msra.mxu0 %v2664
    %3748 = vmatprep.subr.mxu0 0.0
    %3749 = vmatpush1.msra.mxu0 %v2663
    %3750 = vmatprep.subr.mxu0 0.0
    %3751 = vmatpush1.msra.mxu0 %v2662
    %3752 = vmatprep.subr.mxu0 0.0
    %3753 = vmatpush2.msra.mxu0 0.0
    %3754 = vmatprep.subr.mxu0 0.0
    %3755 = vmatpush2.msra.mxu0 0.0
    %3756 = vmatprep.subr.mxu0 0.0
    %3757 = vmatpush2.msra.mxu0 0.0
    %3758 = vmatprep.subr.mxu0 0.0
    %3759 = vmatpush2.msra.mxu0 0.0
    %3760 = vmatprep.subr.mxu0 0.0
    %3761 = vmatpush2.msra.mxu0 0.0
    %3762 = vmatprep.subr.mxu0 0.0
    %3763 = vmatpush2.msra.mxu0 0.0
    %3764 = vmatprep.subr.mxu0 0.0
    %3765 = vmatpush2.msra.mxu0 0.0
    %3766 = vmatprep.subr.mxu0 0.0
    %3767 = vmatpush2.msra.mxu0 0.0
    %3768 = vmatprep.subr.mxu0 0.0
    %3769 = vmatpush2.msra.mxu0 0.0
    %3770 = vmatprep.subr.mxu0 0.0
    %3771 = vmatpush2.msra.mxu0 0.0
    %3772 = vmatprep.subr.mxu0 0.0
    %3773 = vmatpush2.msra.mxu0 0.0
    %3774 = vmatprep.subr.mxu0 0.0
    %3775 = vmatpush2.msra.mxu0 0.0
    %3776 = vmatprep.subr.mxu0 0.0
    %3777 = vmatpush2.msra.mxu0 0.0
    %3778 = vmatprep.subr.mxu0 0.0
    %3779 = vmatpush2.msra.mxu0 0.0
    %3780 = vmatprep.subr.mxu0 0.0
    %3781 = vmatpush2.msra.mxu0 0.0
    %3782 = vmatprep.subr.mxu0 0.0
    %3783 = vmatpush2.msra.mxu0 0.0
    %3784 = vmatprep.mubr.f32.mxu0 0.0
    %3785 = vmatmul.mubr.f32.gmra.mxu0 %v3648
    %v3786 = vpop.f32.mrf.mxu0
    %v3787 = vadd.f32 0.0, %v3786
    %v3788 = vpop.f32.mrf.mxu0
    %3789 = vdwg.mxu0
    %v3790 = vadd.f32 %v2478, %v3717
    %v3791 = vxor.u32 %v3790, 2147483648
    %v3792 = vmul.f32 %v3791, 1.442695
    %v3793 = vpow.pop %v3792
    %v3794 = vadd.f32 %v3793, 1.0
    %v3795 = vrcp.pop %v3794
    %v3796 = vmul.f32 1.0, %v3795
    %v3797 = vadd.f32 %v2566, %v3787
    %v3798 = vxor.u32 %v3797, 2147483648
    %v3799 = vmul.f32 %v3798, 1.442695
    %v3800 = vpow.pop %v3799
    %v3801 = vadd.f32 %v3800, 1.0
    %v3802 = vrcp.pop %v3801
    %v3803 = vmul.f32 1.0, %v3802
    %3804 = vmatprep.subr.mxu0 0.0
    %3805 = vmatpush1.msra.mxu0 0.0
    %3806 = vmatprep.subr.mxu0 0.0
    %3807 = vmatpush1.msra.mxu0 0.0
    %3808 = vmatprep.subr.mxu0 0.0
    %3809 = vmatpush1.msra.mxu0 0.0
    %3810 = vmatprep.subr.mxu0 0.0
    %3811 = vmatpush1.msra.mxu0 0.0
    %3812 = vmatprep.subr.mxu0 0.0
    %3813 = vmatpush1.msra.mxu0 0.0
    %3814 = vmatprep.subr.mxu0 0.0
    %3815 = vmatpush1.msra.mxu0 0.0
    %3816 = vmatprep.subr.mxu0 0.0
    %3817 = vmatpush1.msra.mxu0 0.0
    %3818 = vmatprep.subr.mxu0 0.0
    %3819 = vmatpush1.msra.mxu0 0.0
    %3820 = vmatprep.subr.mxu0 0.0
    %3821 = vmatpush1.msra.mxu0 0.0
    %3822 = vmatprep.subr.mxu0 0.0
    %3823 = vmatpush1.msra.mxu0 0.0
    %3824 = vmatprep.subr.mxu0 0.0
    %3825 = vmatpush1.msra.mxu0 0.0
    %3826 = vmatprep.subr.mxu0 0.0
    %3827 = vmatpush1.msra.mxu0 0.0
    %3828 = vmatprep.subr.mxu0 0.0
    %3829 = vmatpush1.msra.mxu0 %v2670
    %3830 = vmatprep.subr.mxu0 0.0
    %3831 = vmatpush1.msra.mxu0 %v2669
    %3832 = vmatprep.subr.mxu0 0.0
    %3833 = vmatpush1.msra.mxu0 %v2668
    %3834 = vmatprep.subr.mxu0 0.0
    %3835 = vmatpush1.msra.mxu0 %v2667
    %3836 = vmatprep.subr.mxu0 0.0
    %3837 = vmatpush2.msra.mxu0 0.0
    %3838 = vmatprep.subr.mxu0 0.0
    %3839 = vmatpush2.msra.mxu0 0.0
    %3840 = vmatprep.subr.mxu0 0.0
    %3841 = vmatpush2.msra.mxu0 0.0
    %3842 = vmatprep.subr.mxu0 0.0
    %3843 = vmatpush2.msra.mxu0 0.0
    %3844 = vmatprep.subr.mxu0 0.0
    %3845 = vmatpush2.msra.mxu0 0.0
    %3846 = vmatprep.subr.mxu0 0.0
    %3847 = vmatpush2.msra.mxu0 0.0
    %3848 = vmatprep.subr.mxu0 0.0
    %3849 = vmatpush2.msra.mxu0 0.0
    %3850 = vmatprep.subr.mxu0 0.0
    %3851 = vmatpush2.msra.mxu0 0.0
    %3852 = vmatprep.subr.mxu0 0.0
    %3853 = vmatpush2.msra.mxu0 0.0
    %3854 = vmatprep.subr.mxu0 0.0
    %3855 = vmatpush2.msra.mxu0 0.0
    %3856 = vmatprep.subr.mxu0 0.0
    %3857 = vmatpush2.msra.mxu0 0.0
    %3858 = vmatprep.subr.mxu0 0.0
    %3859 = vmatpush2.msra.mxu0 0.0
    %3860 = vmatprep.subr.mxu0 0.0
    %3861 = vmatpush2.msra.mxu0 0.0
    %3862 = vmatprep.subr.mxu0 0.0
    %3863 = vmatpush2.msra.mxu0 0.0
    %3864 = vmatprep.subr.mxu0 0.0
    %3865 = vmatpush2.msra.mxu0 0.0
    %3866 = vmatprep.subr.mxu0 0.0
    %3867 = vmatpush2.msra.mxu0 0.0
    %3868 = vmatprep.mubr.f32.mxu0 0.0
    %3869 = vmatmul.mubr.f32.gmra.mxu0 %v3648
    %v3870 = vpop.f32.mrf.mxu0
    %v3871 = vadd.f32 %v2830, %v3870
    %v3872 = vpop.f32.mrf.mxu0
    %3873 = vdwg.mxu0
    %v3874 = vmul.f32 %v3796, %v3871
    %v3875 = vadd.f32 %v2654, %v3874
    %v3876 = vtanh.pop %v3875
    %v3877 = vsub.f32 1.0, %v3803
    %v3878 = vmul.f32 %v3877, %v3876
    %v3880 = vmul.f32 %v3803, %v3647
    %v3881 = vadd.f32 %v3878, %v3880
    %v3883 = vsel %vm430, %v3881, 0
    %3885 = vmatprep.subr.mxu0 0.0
    %3886 = vmatpush1.msra.mxu0 0.0
    %3887 = vmatprep.subr.mxu0 0.0
    %3888 = vmatpush1.msra.mxu0 0.0
    %3889 = vmatprep.subr.mxu0 0.0
    %3890 = vmatpush1.msra.mxu0 0.0
    %3891 = vmatprep.subr.mxu0 0.0
    %3892 = vmatpush1.msra.mxu0 0.0
    %3893 = vmatprep.subr.mxu0 0.0
    %3894 = vmatpush1.msra.mxu0 0.0
    %3895 = vmatprep.subr.mxu0 0.0
    %3896 = vmatpush1.msra.mxu0 0.0
    %3897 = vmatprep.subr.mxu0 0.0
    %3898 = vmatpush1.msra.mxu0 0.0
    %3899 = vmatprep.subr.mxu0 0.0
    %3900 = vmatpush1.msra.mxu0 0.0
    %3901 = vmatprep.subr.mxu0 0.0
    %3902 = vmatpush1.msra.mxu0 0.0
    %3903 = vmatprep.subr.mxu0 0.0
    %3904 = vmatpush1.msra.mxu0 0.0
    %3905 = vmatprep.subr.mxu0 0.0
    %3906 = vmatpush1.msra.mxu0 0.0
    %3907 = vmatprep.subr.mxu0 0.0
    %3908 = vmatpush1.msra.mxu0 0.0
    %3909 = vmatprep.subr.mxu0 0.0
    %3910 = vmatpush1.msra.mxu0 %v2660
    %3911 = vmatprep.subr.mxu0 0.0
    %3912 = vmatpush1.msra.mxu0 %v2659
    %3913 = vmatprep.subr.mxu0 0.0
    %3914 = vmatpush1.msra.mxu0 %v2658
    %3915 = vmatprep.subr.mxu0 0.0
    %3916 = vmatpush1.msra.mxu0 %v2657
    %3917 = vmatprep.subr.mxu0 0.0
    %3918 = vmatpush2.msra.mxu0 0.0
    %3919 = vmatprep.subr.mxu0 0.0
    %3920 = vmatpush2.msra.mxu0 0.0
    %3921 = vmatprep.subr.mxu0 0.0
    %3922 = vmatpush2.msra.mxu0 0.0
    %3923 = vmatprep.subr.mxu0 0.0
    %3924 = vmatpush2.msra.mxu0 0.0
    %3925 = vmatprep.subr.mxu0 0.0
    %3926 = vmatpush2.msra.mxu0 0.0
    %3927 = vmatprep.subr.mxu0 0.0
    %3928 = vmatpush2.msra.mxu0 0.0
    %3929 = vmatprep.subr.mxu0 0.0
    %3930 = vmatpush2.msra.mxu0 0.0
    %3931 = vmatprep.subr.mxu0 0.0
    %3932 = vmatpush2.msra.mxu0 0.0
    %3933 = vmatprep.subr.mxu0 0.0
    %3934 = vmatpush2.msra.mxu0 0.0
    %3935 = vmatprep.subr.mxu0 0.0
    %3936 = vmatpush2.msra.mxu0 0.0
    %3937 = vmatprep.subr.mxu0 0.0
    %3938 = vmatpush2.msra.mxu0 0.0
    %3939 = vmatprep.subr.mxu0 0.0
    %3940 = vmatpush2.msra.mxu0 0.0
    %3941 = vmatprep.subr.mxu0 0.0
    %3942 = vmatpush2.msra.mxu0 0.0
    %3943 = vmatprep.subr.mxu0 0.0
    %3944 = vmatpush2.msra.mxu0 0.0
    %3945 = vmatprep.subr.mxu0 0.0
    %3946 = vmatpush2.msra.mxu0 0.0
    %3947 = vmatprep.subr.mxu0 0.0
    %3948 = vmatpush2.msra.mxu0 0.0
    %3949 = vmatprep.mubr.f32.mxu0 0.0
    %3950 = vmatmul.mubr.f32.gmra.mxu0 %v3883
    %v3951 = vpop.f32.mrf.mxu0
    %v3952 = vadd.f32 0.0, %v3951
    %v3953 = vpop.f32.mrf.mxu0
    %3954 = vdwg.mxu0
    %3955 = vmatprep.subr.mxu0 0.0
    %3956 = vmatpush1.msra.mxu0 0.0
    %3957 = vmatprep.subr.mxu0 0.0
    %3958 = vmatpush1.msra.mxu0 0.0
    %3959 = vmatprep.subr.mxu0 0.0
    %3960 = vmatpush1.msra.mxu0 0.0
    %3961 = vmatprep.subr.mxu0 0.0
    %3962 = vmatpush1.msra.mxu0 0.0
    %3963 = vmatprep.subr.mxu0 0.0
    %3964 = vmatpush1.msra.mxu0 0.0
    %3965 = vmatprep.subr.mxu0 0.0
    %3966 = vmatpush1.msra.mxu0 0.0
    %3967 = vmatprep.subr.mxu0 0.0
    %3968 = vmatpush1.msra.mxu0 0.0
    %3969 = vmatprep.subr.mxu0 0.0
    %3970 = vmatpush1.msra.mxu0 0.0
    %3971 = vmatprep.subr.mxu0 0.0
    %3972 = vmatpush1.msra.mxu0 0.0
    %3973 = vmatprep.subr.mxu0 0.0
    %3974 = vmatpush1.msra.mxu0 0.0
    %3975 = vmatprep.subr.mxu0 0.0
    %3976 = vmatpush1.msra.mxu0 0.0
    %3977 = vmatprep.subr.mxu0 0.0
    %3978 = vmatpush1.msra.mxu0 0.0
    %3979 = vmatprep.subr.mxu0 0.0
    %3980 = vmatpush1.msra.mxu0 %v2665
    %3981 = vmatprep.subr.mxu0 0.0
    %3982 = vmatpush1.msra.mxu0 %v2664
    %3983 = vmatprep.subr.mxu0 0.0
    %3984 = vmatpush1.msra.mxu0 %v2663
    %3985 = vmatprep.subr.mxu0 0.0
    %3986 = vmatpush1.msra.mxu0 %v2662
    %3987 = vmatprep.subr.mxu0 0.0
    %3988 = vmatpush2.msra.mxu0 0.0
    %3989 = vmatprep.subr.mxu0 0.0
    %3990 = vmatpush2.msra.mxu0 0.0
    %3991 = vmatprep.subr.mxu0 0.0
    %3992 = vmatpush2.msra.mxu0 0.0
    %3993 = vmatprep.subr.mxu0 0.0
    %3994 = vmatpush2.msra.mxu0 0.0
    %3995 = vmatprep.subr.mxu0 0.0
    %3996 = vmatpush2.msra.mxu0 0.0
    %3997 = vmatprep.subr.mxu0 0.0
    %3998 = vmatpush2.msra.mxu0 0.0
    %3999 = vmatprep.subr.mxu0 0.0
    %4000 = vmatpush2.msra.mxu0 0.0
    %4001 = vmatprep.subr.mxu0 0.0
    %4002 = vmatpush2.msra.mxu0 0.0
    %4003 = vmatprep.subr.mxu0 0.0
    %4004 = vmatpush2.msra.mxu0 0.0
    %4005 = vmatprep.subr.mxu0 0.0
    %4006 = vmatpush2.msra.mxu0 0.0
    %4007 = vmatprep.subr.mxu0 0.0
    %4008 = vmatpush2.msra.mxu0 0.0
    %4009 = vmatprep.subr.mxu0 0.0
    %4010 = vmatpush2.msra.mxu0 0.0
    %4011 = vmatprep.subr.mxu0 0.0
    %4012 = vmatpush2.msra.mxu0 0.0
    %4013 = vmatprep.subr.mxu0 0.0
    %4014 = vmatpush2.msra.mxu0 0.0
    %4015 = vmatprep.subr.mxu0 0.0
    %4016 = vmatpush2.msra.mxu0 0.0
    %4017 = vmatprep.subr.mxu0 0.0
    %4018 = vmatpush2.msra.mxu0 0.0
    %4019 = vmatprep.mubr.f32.mxu0 0.0
    %4020 = vmatmul.mubr.f32.gmra.mxu0 %v3883
    %v4021 = vpop.f32.mrf.mxu0
    %v4022 = vadd.f32 0.0, %v4021
    %v4023 = vpop.f32.mrf.mxu0
    %4024 = vdwg.mxu0
    %v4026 = vrot.slane %v3952, 6
    %v4028 = vadd.f32 %v2478, %v4026
    %v4029 = vxor.u32 %v4028, 2147483648
    %v4030 = vmul.f32 %v4029, 1.442695
    %v4031 = vpow.pop %v4030
    %v4032 = vadd.f32 %v4031, 1.0
    %v4033 = vrcp.pop %v4032
    %v4034 = vmul.f32 1.0, %v4033
    %v4036 = vrot.slane %v4022, 6
    %v4038 = vadd.f32 %v2566, %v4036
    %v4039 = vxor.u32 %v4038, 2147483648
    %v4040 = vmul.f32 %v4039, 1.442695
    %v4041 = vpow.pop %v4040
    %v4042 = vadd.f32 %v4041, 1.0
    %v4043 = vrcp.pop %v4042
    %v4044 = vmul.f32 1.0, %v4043
    %4045 = vmatprep.subr.mxu0 0.0
    %4046 = vmatpush1.msra.mxu0 0.0
    %4047 = vmatprep.subr.mxu0 0.0
    %4048 = vmatpush1.msra.mxu0 0.0
    %4049 = vmatprep.subr.mxu0 0.0
    %4050 = vmatpush1.msra.mxu0 0.0
    %4051 = vmatprep.subr.mxu0 0.0
    %4052 = vmatpush1.msra.mxu0 0.0
    %4053 = vmatprep.subr.mxu0 0.0
    %4054 = vmatpush1.msra.mxu0 0.0
    %4055 = vmatprep.subr.mxu0 0.0
    %4056 = vmatpush1.msra.mxu0 0.0
    %4057 = vmatprep.subr.mxu0 0.0
    %4058 = vmatpush1.msra.mxu0 0.0
    %4059 = vmatprep.subr.mxu0 0.0
    %4060 = vmatpush1.msra.mxu0 0.0
    %4061 = vmatprep.subr.mxu0 0.0
    %4062 = vmatpush1.msra.mxu0 0.0
    %4063 = vmatprep.subr.mxu0 0.0
    %4064 = vmatpush1.msra.mxu0 0.0
    %4065 = vmatprep.subr.mxu0 0.0
    %4066 = vmatpush1.msra.mxu0 0.0
    %4067 = vmatprep.subr.mxu0 0.0
    %4068 = vmatpush1.msra.mxu0 0.0
    %4069 = vmatprep.subr.mxu0 0.0
    %4070 = vmatpush1.msra.mxu0 %v2670
    %4071 = vmatprep.subr.mxu0 0.0
    %4072 = vmatpush1.msra.mxu0 %v2669
    %4073 = vmatprep.subr.mxu0 0.0
    %4074 = vmatpush1.msra.mxu0 %v2668
    %4075 = vmatprep.subr.mxu0 0.0
    %4076 = vmatpush1.msra.mxu0 %v2667
    %4077 = vmatprep.subr.mxu0 0.0
    %4078 = vmatpush2.msra.mxu0 0.0
    %4079 = vmatprep.subr.mxu0 0.0
    %4080 = vmatpush2.msra.mxu0 0.0
    %4081 = vmatprep.subr.mxu0 0.0
    %4082 = vmatpush2.msra.mxu0 0.0
    %4083 = vmatprep.subr.mxu0 0.0
    %4084 = vmatpush2.msra.mxu0 0.0
    %4085 = vmatprep.subr.mxu0 0.0
    %4086 = vmatpush2.msra.mxu0 0.0
    %4087 = vmatprep.subr.mxu0 0.0
    %4088 = vmatpush2.msra.mxu0 0.0
    %4089 = vmatprep.subr.mxu0 0.0
    %4090 = vmatpush2.msra.mxu0 0.0
    %4091 = vmatprep.subr.mxu0 0.0
    %4092 = vmatpush2.msra.mxu0 0.0
    %4093 = vmatprep.subr.mxu0 0.0
    %4094 = vmatpush2.msra.mxu0 0.0
    %4095 = vmatprep.subr.mxu0 0.0
    %4096 = vmatpush2.msra.mxu0 0.0
    %4097 = vmatprep.subr.mxu0 0.0
    %4098 = vmatpush2.msra.mxu0 0.0
    %4099 = vmatprep.subr.mxu0 0.0
    %4100 = vmatpush2.msra.mxu0 0.0
    %4101 = vmatprep.subr.mxu0 0.0
    %4102 = vmatpush2.msra.mxu0 0.0
    %4103 = vmatprep.subr.mxu0 0.0
    %4104 = vmatpush2.msra.mxu0 0.0
    %4105 = vmatprep.subr.mxu0 0.0
    %4106 = vmatpush2.msra.mxu0 0.0
    %4107 = vmatprep.subr.mxu0 0.0
    %4108 = vmatpush2.msra.mxu0 0.0
    %4109 = vmatprep.mubr.f32.mxu0 0.0
    %4110 = vmatmul.mubr.f32.gmra.mxu0 %v3883
    %v4111 = vpop.f32.mrf.mxu0
    %v4112 = vadd.f32 %v2830, %v4111
    %v4113 = vpop.f32.mrf.mxu0
    %4114 = vdwg.mxu0
    %v4116 = vrot.slane %v4112, 6
    %v4118 = vmul.f32 %v4034, %v4116
    %v4119 = vadd.f32 %v2654, %v4118
    %v4120 = vtanh.pop %v4119
    %v4121 = vsub.f32 1.0, %v4044
    %v4122 = vmul.f32 %v4121, %v4120
    %v4123 = vrot.slane %v3881, 6
    %v4125 = vmul.f32 %v4044, %v4123
    %v4126 = vadd.f32 %v4122, %v4125
    %v4128 = vrot.slane %v4126, 2
    %v4129 = vsel %vm430, %v4128, 0
    %4131 = vmatprep.subr.mxu0 0.0
    %4132 = vmatpush1.msra.mxu0 0.0
    %4133 = vmatprep.subr.mxu0 0.0
    %4134 = vmatpush1.msra.mxu0 0.0
    %4135 = vmatprep.subr.mxu0 0.0
    %4136 = vmatpush1.msra.mxu0 0.0
    %4137 = vmatprep.subr.mxu0 0.0
    %4138 = vmatpush1.msra.mxu0 0.0
    %4139 = vmatprep.subr.mxu0 0.0
    %4140 = vmatpush1.msra.mxu0 0.0
    %4141 = vmatprep.subr.mxu0 0.0
    %4142 = vmatpush1.msra.mxu0 0.0
    %4143 = vmatprep.subr.mxu0 0.0
    %4144 = vmatpush1.msra.mxu0 0.0
    %4145 = vmatprep.subr.mxu0 0.0
    %4146 = vmatpush1.msra.mxu0 0.0
    %4147 = vmatprep.subr.mxu0 0.0
    %4148 = vmatpush1.msra.mxu0 0.0
    %4149 = vmatprep.subr.mxu0 0.0
    %4150 = vmatpush1.msra.mxu0 0.0
    %4151 = vmatprep.subr.mxu0 0.0
    %4152 = vmatpush1.msra.mxu0 0.0
    %4153 = vmatprep.subr.mxu0 0.0
    %4154 = vmatpush1.msra.mxu0 0.0
    %4155 = vmatprep.subr.mxu0 0.0
    %4156 = vmatpush1.msra.mxu0 %v2660
    %4157 = vmatprep.subr.mxu0 0.0
    %4158 = vmatpush1.msra.mxu0 %v2659
    %4159 = vmatprep.subr.mxu0 0.0
    %4160 = vmatpush1.msra.mxu0 %v2658
    %4161 = vmatprep.subr.mxu0 0.0
    %4162 = vmatpush1.msra.mxu0 %v2657
    %4163 = vmatprep.subr.mxu0 0.0
    %4164 = vmatpush2.msra.mxu0 0.0
    %4165 = vmatprep.subr.mxu0 0.0
    %4166 = vmatpush2.msra.mxu0 0.0
    %4167 = vmatprep.subr.mxu0 0.0
    %4168 = vmatpush2.msra.mxu0 0.0
    %4169 = vmatprep.subr.mxu0 0.0
    %4170 = vmatpush2.msra.mxu0 0.0
    %4171 = vmatprep.subr.mxu0 0.0
    %4172 = vmatpush2.msra.mxu0 0.0
    %4173 = vmatprep.subr.mxu0 0.0
    %4174 = vmatpush2.msra.mxu0 0.0
    %4175 = vmatprep.subr.mxu0 0.0
    %4176 = vmatpush2.msra.mxu0 0.0
    %4177 = vmatprep.subr.mxu0 0.0
    %4178 = vmatpush2.msra.mxu0 0.0
    %4179 = vmatprep.subr.mxu0 0.0
    %4180 = vmatpush2.msra.mxu0 0.0
    %4181 = vmatprep.subr.mxu0 0.0
    %4182 = vmatpush2.msra.mxu0 0.0
    %4183 = vmatprep.subr.mxu0 0.0
    %4184 = vmatpush2.msra.mxu0 0.0
    %4185 = vmatprep.subr.mxu0 0.0
    %4186 = vmatpush2.msra.mxu0 0.0
    %4187 = vmatprep.subr.mxu0 0.0
    %4188 = vmatpush2.msra.mxu0 0.0
    %4189 = vmatprep.subr.mxu0 0.0
    %4190 = vmatpush2.msra.mxu0 0.0
    %4191 = vmatprep.subr.mxu0 0.0
    %4192 = vmatpush2.msra.mxu0 0.0
    %4193 = vmatprep.subr.mxu0 0.0
    %4194 = vmatpush2.msra.mxu0 0.0
    %4195 = vmatprep.mubr.f32.mxu0 0.0
    %4196 = vmatmul.mubr.f32.gmra.mxu0 %v4129
    %v4197 = vpop.f32.mrf.mxu0
    %v4198 = vadd.f32 0.0, %v4197
    %v4199 = vpop.f32.mrf.mxu0
    %4200 = vdwg.mxu0
    %4201 = vmatprep.subr.mxu0 0.0
    %4202 = vmatpush1.msra.mxu0 0.0
    %4203 = vmatprep.subr.mxu0 0.0
    %4204 = vmatpush1.msra.mxu0 0.0
    %4205 = vmatprep.subr.mxu0 0.0
    %4206 = vmatpush1.msra.mxu0 0.0
    %4207 = vmatprep.subr.mxu0 0.0
    %4208 = vmatpush1.msra.mxu0 0.0
    %4209 = vmatprep.subr.mxu0 0.0
    %4210 = vmatpush1.msra.mxu0 0.0
    %4211 = vmatprep.subr.mxu0 0.0
    %4212 = vmatpush1.msra.mxu0 0.0
    %4213 = vmatprep.subr.mxu0 0.0
    %4214 = vmatpush1.msra.mxu0 0.0
    %4215 = vmatprep.subr.mxu0 0.0
    %4216 = vmatpush1.msra.mxu0 0.0
    %4217 = vmatprep.subr.mxu0 0.0
    %4218 = vmatpush1.msra.mxu0 0.0
    %4219 = vmatprep.subr.mxu0 0.0
    %4220 = vmatpush1.msra.mxu0 0.0
    %4221 = vmatprep.subr.mxu0 0.0
    %4222 = vmatpush1.msra.mxu0 0.0
    %4223 = vmatprep.subr.mxu0 0.0
    %4224 = vmatpush1.msra.mxu0 0.0
    %4225 = vmatprep.subr.mxu0 0.0
    %4226 = vmatpush1.msra.mxu0 %v2665
    %4227 = vmatprep.subr.mxu0 0.0
    %4228 = vmatpush1.msra.mxu0 %v2664
    %4229 = vmatprep.subr.mxu0 0.0
    %4230 = vmatpush1.msra.mxu0 %v2663
    %4231 = vmatprep.subr.mxu0 0.0
    %4232 = vmatpush1.msra.mxu0 %v2662
    %4233 = vmatprep.subr.mxu0 0.0
    %4234 = vmatpush2.msra.mxu0 0.0
    %4235 = vmatprep.subr.mxu0 0.0
    %4236 = vmatpush2.msra.mxu0 0.0
    %4237 = vmatprep.subr.mxu0 0.0
    %4238 = vmatpush2.msra.mxu0 0.0
    %4239 = vmatprep.subr.mxu0 0.0
    %4240 = vmatpush2.msra.mxu0 0.0
    %4241 = vmatprep.subr.mxu0 0.0
    %4242 = vmatpush2.msra.mxu0 0.0
    %4243 = vmatprep.subr.mxu0 0.0
    %4244 = vmatpush2.msra.mxu0 0.0
    %4245 = vmatprep.subr.mxu0 0.0
    %4246 = vmatpush2.msra.mxu0 0.0
    %4247 = vmatprep.subr.mxu0 0.0
    %4248 = vmatpush2.msra.mxu0 0.0
    %4249 = vmatprep.subr.mxu0 0.0
    %4250 = vmatpush2.msra.mxu0 0.0
    %4251 = vmatprep.subr.mxu0 0.0
    %4252 = vmatpush2.msra.mxu0 0.0
    %4253 = vmatprep.subr.mxu0 0.0
    %4254 = vmatpush2.msra.mxu0 0.0
    %4255 = vmatprep.subr.mxu0 0.0
    %4256 = vmatpush2.msra.mxu0 0.0
    %4257 = vmatprep.subr.mxu0 0.0
    %4258 = vmatpush2.msra.mxu0 0.0
    %4259 = vmatprep.subr.mxu0 0.0
    %4260 = vmatpush2.msra.mxu0 0.0
    %4261 = vmatprep.subr.mxu0 0.0
    %4262 = vmatpush2.msra.mxu0 0.0
    %4263 = vmatprep.subr.mxu0 0.0
    %4264 = vmatpush2.msra.mxu0 0.0
    %4265 = vmatprep.mubr.f32.mxu0 0.0
    %4266 = vmatmul.mubr.f32.gmra.mxu0 %v4129
    %v4267 = vpop.f32.mrf.mxu0
    %v4268 = vadd.f32 0.0, %v4267
    %v4269 = vpop.f32.mrf.mxu0
    %4270 = vdwg.mxu0
    %v4272 = vrot.slane %v4198, 4
    %v4274 = vadd.f32 %v2478, %v4272
    %v4275 = vxor.u32 %v4274, 2147483648
    %v4276 = vmul.f32 %v4275, 1.442695
    %v4277 = vpow.pop %v4276
    %v4278 = vadd.f32 %v4277, 1.0
    %v4279 = vrcp.pop %v4278
    %v4280 = vmul.f32 1.0, %v4279
    %v4282 = vrot.slane %v4268, 4
    %v4284 = vadd.f32 %v2566, %v4282
    %v4285 = vxor.u32 %v4284, 2147483648
    %v4286 = vmul.f32 %v4285, 1.442695
    %v4287 = vpow.pop %v4286
    %v4288 = vadd.f32 %v4287, 1.0
    %v4289 = vrcp.pop %v4288
    %v4290 = vmul.f32 1.0, %v4289
    %4291 = vmatprep.subr.mxu0 0.0
    %4292 = vmatpush1.msra.mxu0 0.0
    %4293 = vmatprep.subr.mxu0 0.0
    %4294 = vmatpush1.msra.mxu0 0.0
    %4295 = vmatprep.subr.mxu0 0.0
    %4296 = vmatpush1.msra.mxu0 0.0
    %4297 = vmatprep.subr.mxu0 0.0
    %4298 = vmatpush1.msra.mxu0 0.0
    %4299 = vmatprep.subr.mxu0 0.0
    %4300 = vmatpush1.msra.mxu0 0.0
    %4301 = vmatprep.subr.mxu0 0.0
    %4302 = vmatpush1.msra.mxu0 0.0
    %4303 = vmatprep.subr.mxu0 0.0
    %4304 = vmatpush1.msra.mxu0 0.0
    %4305 = vmatprep.subr.mxu0 0.0
    %4306 = vmatpush1.msra.mxu0 0.0
    %4307 = vmatprep.subr.mxu0 0.0
    %4308 = vmatpush1.msra.mxu0 0.0
    %4309 = vmatprep.subr.mxu0 0.0
    %4310 = vmatpush1.msra.mxu0 0.0
    %4311 = vmatprep.subr.mxu0 0.0
    %4312 = vmatpush1.msra.mxu0 0.0
    %4313 = vmatprep.subr.mxu0 0.0
    %4314 = vmatpush1.msra.mxu0 0.0
    %4315 = vmatprep.subr.mxu0 0.0
    %4316 = vmatpush1.msra.mxu0 %v2670
    %4317 = vmatprep.subr.mxu0 0.0
    %4318 = vmatpush1.msra.mxu0 %v2669
    %4319 = vmatprep.subr.mxu0 0.0
    %4320 = vmatpush1.msra.mxu0 %v2668
    %4321 = vmatprep.subr.mxu0 0.0
    %4322 = vmatpush1.msra.mxu0 %v2667
    %4323 = vmatprep.subr.mxu0 0.0
    %4324 = vmatpush2.msra.mxu0 0.0
    %4325 = vmatprep.subr.mxu0 0.0
    %4326 = vmatpush2.msra.mxu0 0.0
    %4327 = vmatprep.subr.mxu0 0.0
    %4328 = vmatpush2.msra.mxu0 0.0
    %4329 = vmatprep.subr.mxu0 0.0
    %4330 = vmatpush2.msra.mxu0 0.0
    %4331 = vmatprep.subr.mxu0 0.0
    %4332 = vmatpush2.msra.mxu0 0.0
    %4333 = vmatprep.subr.mxu0 0.0
    %4334 = vmatpush2.msra.mxu0 0.0
    %4335 = vmatprep.subr.mxu0 0.0
    %4336 = vmatpush2.msra.mxu0 0.0
    %4337 = vmatprep.subr.mxu0 0.0
    %4338 = vmatpush2.msra.mxu0 0.0
    %4339 = vmatprep.subr.mxu0 0.0
    %4340 = vmatpush2.msra.mxu0 0.0
    %4341 = vmatprep.subr.mxu0 0.0
    %4342 = vmatpush2.msra.mxu0 0.0
    %4343 = vmatprep.subr.mxu0 0.0
    %4344 = vmatpush2.msra.mxu0 0.0
    %4345 = vmatprep.subr.mxu0 0.0
    %4346 = vmatpush2.msra.mxu0 0.0
    %4347 = vmatprep.subr.mxu0 0.0
    %4348 = vmatpush2.msra.mxu0 0.0
    %4349 = vmatprep.subr.mxu0 0.0
    %4350 = vmatpush2.msra.mxu0 0.0
    %4351 = vmatprep.subr.mxu0 0.0
    %4352 = vmatpush2.msra.mxu0 0.0
    %4353 = vmatprep.subr.mxu0 0.0
    %4354 = vmatpush2.msra.mxu0 0.0
    %4355 = vmatprep.mubr.f32.mxu0 0.0
    %4356 = vmatmul.mubr.f32.gmra.mxu0 %v4129
    %v4357 = vpop.f32.mrf.mxu0
    %v4358 = vadd.f32 %v2830, %v4357
    %v4359 = vpop.f32.mrf.mxu0
    %4360 = vdwg.mxu0
    %v4362 = vrot.slane %v4358, 4
    %v4364 = vmul.f32 %v4280, %v4362
    %v4365 = vadd.f32 %v2654, %v4364
    %v4366 = vtanh.pop %v4365
    %v4367 = vsub.f32 1.0, %v4290
    %v4368 = vmul.f32 %v4367, %v4366
    %v4369 = vrot.slane %v4126, 6
    %v4371 = vmul.f32 %v4290, %v4369
    %v4372 = vadd.f32 %v4368, %v4371
    %v4374 = vrot.slane %v4372, 4
    %v4375 = vsel %vm430, %v4374, 0
    %4377 = vmatprep.subr.mxu0 0.0
    %4378 = vmatpush1.msra.mxu0 0.0
    %4379 = vmatprep.subr.mxu0 0.0
    %4380 = vmatpush1.msra.mxu0 0.0
    %4381 = vmatprep.subr.mxu0 0.0
    %4382 = vmatpush1.msra.mxu0 0.0
    %4383 = vmatprep.subr.mxu0 0.0
    %4384 = vmatpush1.msra.mxu0 0.0
    %4385 = vmatprep.subr.mxu0 0.0
    %4386 = vmatpush1.msra.mxu0 0.0
    %4387 = vmatprep.subr.mxu0 0.0
    %4388 = vmatpush1.msra.mxu0 0.0
    %4389 = vmatprep.subr.mxu0 0.0
    %4390 = vmatpush1.msra.mxu0 0.0
    %4391 = vmatprep.subr.mxu0 0.0
    %4392 = vmatpush1.msra.mxu0 0.0
    %4393 = vmatprep.subr.mxu0 0.0
    %4394 = vmatpush1.msra.mxu0 0.0
    %4395 = vmatprep.subr.mxu0 0.0
    %4396 = vmatpush1.msra.mxu0 0.0
    %4397 = vmatprep.subr.mxu0 0.0
    %4398 = vmatpush1.msra.mxu0 0.0
    %4399 = vmatprep.subr.mxu0 0.0
    %4400 = vmatpush1.msra.mxu0 0.0
    %4401 = vmatprep.subr.mxu0 0.0
    %4402 = vmatpush1.msra.mxu0 %v2660
    %4403 = vmatprep.subr.mxu0 0.0
    %4404 = vmatpush1.msra.mxu0 %v2659
    %4405 = vmatprep.subr.mxu0 0.0
    %4406 = vmatpush1.msra.mxu0 %v2658
    %4407 = vmatprep.subr.mxu0 0.0
    %4408 = vmatpush1.msra.mxu0 %v2657
    %4409 = vmatprep.subr.mxu0 0.0
    %4410 = vmatpush2.msra.mxu0 0.0
    %4411 = vmatprep.subr.mxu0 0.0
    %4412 = vmatpush2.msra.mxu0 0.0
    %4413 = vmatprep.subr.mxu0 0.0
    %4414 = vmatpush2.msra.mxu0 0.0
    %4415 = vmatprep.subr.mxu0 0.0
    %4416 = vmatpush2.msra.mxu0 0.0
    %4417 = vmatprep.subr.mxu0 0.0
    %4418 = vmatpush2.msra.mxu0 0.0
    %4419 = vmatprep.subr.mxu0 0.0
    %4420 = vmatpush2.msra.mxu0 0.0
    %4421 = vmatprep.subr.mxu0 0.0
    %4422 = vmatpush2.msra.mxu0 0.0
    %4423 = vmatprep.subr.mxu0 0.0
    %4424 = vmatpush2.msra.mxu0 0.0
    %4425 = vmatprep.subr.mxu0 0.0
    %4426 = vmatpush2.msra.mxu0 0.0
    %4427 = vmatprep.subr.mxu0 0.0
    %4428 = vmatpush2.msra.mxu0 0.0
    %4429 = vmatprep.subr.mxu0 0.0
    %4430 = vmatpush2.msra.mxu0 0.0
    %4431 = vmatprep.subr.mxu0 0.0
    %4432 = vmatpush2.msra.mxu0 0.0
    %4433 = vmatprep.subr.mxu0 0.0
    %4434 = vmatpush2.msra.mxu0 0.0
    %4435 = vmatprep.subr.mxu0 0.0
    %4436 = vmatpush2.msra.mxu0 0.0
    %4437 = vmatprep.subr.mxu0 0.0
    %4438 = vmatpush2.msra.mxu0 0.0
    %4439 = vmatprep.subr.mxu0 0.0
    %4440 = vmatpush2.msra.mxu0 0.0
    %4441 = vmatprep.mubr.f32.mxu0 0.0
    %4442 = vmatmul.mubr.f32.gmra.mxu0 %v4375
    %v4443 = vpop.f32.mrf.mxu0
    %v4444 = vadd.f32 0.0, %v4443
    %v4445 = vpop.f32.mrf.mxu0
    %4446 = vdwg.mxu0
    %4447 = vmatprep.subr.mxu0 0.0
    %4448 = vmatpush1.msra.mxu0 0.0
    %4449 = vmatprep.subr.mxu0 0.0
    %4450 = vmatpush1.msra.mxu0 0.0
    %4451 = vmatprep.subr.mxu0 0.0
    %4452 = vmatpush1.msra.mxu0 0.0
    %4453 = vmatprep.subr.mxu0 0.0
    %4454 = vmatpush1.msra.mxu0 0.0
    %4455 = vmatprep.subr.mxu0 0.0
    %4456 = vmatpush1.msra.mxu0 0.0
    %4457 = vmatprep.subr.mxu0 0.0
    %4458 = vmatpush1.msra.mxu0 0.0
    %4459 = vmatprep.subr.mxu0 0.0
    %4460 = vmatpush1.msra.mxu0 0.0
    %4461 = vmatprep.subr.mxu0 0.0
    %4462 = vmatpush1.msra.mxu0 0.0
    %4463 = vmatprep.subr.mxu0 0.0
    %4464 = vmatpush1.msra.mxu0 0.0
    %4465 = vmatprep.subr.mxu0 0.0
    %4466 = vmatpush1.msra.mxu0 0.0
    %4467 = vmatprep.subr.mxu0 0.0
    %4468 = vmatpush1.msra.mxu0 0.0
    %4469 = vmatprep.subr.mxu0 0.0
    %4470 = vmatpush1.msra.mxu0 0.0
    %4471 = vmatprep.subr.mxu0 0.0
    %4472 = vmatpush1.msra.mxu0 %v2665
    %4473 = vmatprep.subr.mxu0 0.0
    %4474 = vmatpush1.msra.mxu0 %v2664
    %4475 = vmatprep.subr.mxu0 0.0
    %4476 = vmatpush1.msra.mxu0 %v2663
    %4477 = vmatprep.subr.mxu0 0.0
    %4478 = vmatpush1.msra.mxu0 %v2662
    %4479 = vmatprep.subr.mxu0 0.0
    %4480 = vmatpush2.msra.mxu0 0.0
    %4481 = vmatprep.subr.mxu0 0.0
    %4482 = vmatpush2.msra.mxu0 0.0
    %4483 = vmatprep.subr.mxu0 0.0
    %4484 = vmatpush2.msra.mxu0 0.0
    %4485 = vmatprep.subr.mxu0 0.0
    %4486 = vmatpush2.msra.mxu0 0.0
    %4487 = vmatprep.subr.mxu0 0.0
    %4488 = vmatpush2.msra.mxu0 0.0
    %4489 = vmatprep.subr.mxu0 0.0
    %4490 = vmatpush2.msra.mxu0 0.0
    %4491 = vmatprep.subr.mxu0 0.0
    %4492 = vmatpush2.msra.mxu0 0.0
    %4493 = vmatprep.subr.mxu0 0.0
    %4494 = vmatpush2.msra.mxu0 0.0
    %4495 = vmatprep.subr.mxu0 0.0
    %4496 = vmatpush2.msra.mxu0 0.0
    %4497 = vmatprep.subr.mxu0 0.0
    %4498 = vmatpush2.msra.mxu0 0.0
    %4499 = vmatprep.subr.mxu0 0.0
    %4500 = vmatpush2.msra.mxu0 0.0
    %4501 = vmatprep.subr.mxu0 0.0
    %4502 = vmatpush2.msra.mxu0 0.0
    %4503 = vmatprep.subr.mxu0 0.0
    %4504 = vmatpush2.msra.mxu0 0.0
    %4505 = vmatprep.subr.mxu0 0.0
    %4506 = vmatpush2.msra.mxu0 0.0
    %4507 = vmatprep.subr.mxu0 0.0
    %4508 = vmatpush2.msra.mxu0 0.0
    %4509 = vmatprep.subr.mxu0 0.0
    %4510 = vmatpush2.msra.mxu0 0.0
    %4511 = vmatprep.mubr.f32.mxu0 0.0
    %4512 = vmatmul.mubr.f32.gmra.mxu0 %v4375
    %v4513 = vpop.f32.mrf.mxu0
    %v4514 = vadd.f32 0.0, %v4513
    %v4515 = vpop.f32.mrf.mxu0
    %4516 = vdwg.mxu0
    %v4518 = vrot.slane %v4444, 2
    %v4520 = vadd.f32 %v2478, %v4518
    %v4521 = vxor.u32 %v4520, 2147483648
    %v4522 = vmul.f32 %v4521, 1.442695
    %v4523 = vpow.pop %v4522
    %v4524 = vadd.f32 %v4523, 1.0
    %v4525 = vrcp.pop %v4524
    %v4526 = vmul.f32 1.0, %v4525
    %v4528 = vrot.slane %v4514, 2
    %v4530 = vadd.f32 %v2566, %v4528
    %v4531 = vxor.u32 %v4530, 2147483648
    %v4532 = vmul.f32 %v4531, 1.442695
    %v4533 = vpow.pop %v4532
    %v4534 = vadd.f32 %v4533, 1.0
    %v4535 = vrcp.pop %v4534
    %v4536 = vmul.f32 1.0, %v4535
    %4537 = vmatprep.subr.mxu0 0.0
    %4538 = vmatpush1.msra.mxu0 0.0
    %4539 = vmatprep.subr.mxu0 0.0
    %4540 = vmatpush1.msra.mxu0 0.0
    %4541 = vmatprep.subr.mxu0 0.0
    %4542 = vmatpush1.msra.mxu0 0.0
    %4543 = vmatprep.subr.mxu0 0.0
    %4544 = vmatpush1.msra.mxu0 0.0
    %4545 = vmatprep.subr.mxu0 0.0
    %4546 = vmatpush1.msra.mxu0 0.0
    %4547 = vmatprep.subr.mxu0 0.0
    %4548 = vmatpush1.msra.mxu0 0.0
    %4549 = vmatprep.subr.mxu0 0.0
    %4550 = vmatpush1.msra.mxu0 0.0
    %4551 = vmatprep.subr.mxu0 0.0
    %4552 = vmatpush1.msra.mxu0 0.0
    %4553 = vmatprep.subr.mxu0 0.0
    %4554 = vmatpush1.msra.mxu0 0.0
    %4555 = vmatprep.subr.mxu0 0.0
    %4556 = vmatpush1.msra.mxu0 0.0
    %4557 = vmatprep.subr.mxu0 0.0
    %4558 = vmatpush1.msra.mxu0 0.0
    %4559 = vmatprep.subr.mxu0 0.0
    %4560 = vmatpush1.msra.mxu0 0.0
    %4561 = vmatprep.subr.mxu0 0.0
    %4562 = vmatpush1.msra.mxu0 %v2670
    %4563 = vmatprep.subr.mxu0 0.0
    %4564 = vmatpush1.msra.mxu0 %v2669
    %4565 = vmatprep.subr.mxu0 0.0
    %4566 = vmatpush1.msra.mxu0 %v2668
    %4567 = vmatprep.subr.mxu0 0.0
    %4568 = vmatpush1.msra.mxu0 %v2667
    %4569 = vmatprep.subr.mxu0 0.0
    %4570 = vmatpush2.msra.mxu0 0.0
    %4571 = vmatprep.subr.mxu0 0.0
    %4572 = vmatpush2.msra.mxu0 0.0
    %4573 = vmatprep.subr.mxu0 0.0
    %4574 = vmatpush2.msra.mxu0 0.0
    %4575 = vmatprep.subr.mxu0 0.0
    %4576 = vmatpush2.msra.mxu0 0.0
    %4577 = vmatprep.subr.mxu0 0.0
    %4578 = vmatpush2.msra.mxu0 0.0
    %4579 = vmatprep.subr.mxu0 0.0
    %4580 = vmatpush2.msra.mxu0 0.0
    %4581 = vmatprep.subr.mxu0 0.0
    %4582 = vmatpush2.msra.mxu0 0.0
    %4583 = vmatprep.subr.mxu0 0.0
    %4584 = vmatpush2.msra.mxu0 0.0
    %4585 = vmatprep.subr.mxu0 0.0
    %4586 = vmatpush2.msra.mxu0 0.0
    %4587 = vmatprep.subr.mxu0 0.0
    %4588 = vmatpush2.msra.mxu0 0.0
    %4589 = vmatprep.subr.mxu0 0.0
    %4590 = vmatpush2.msra.mxu0 0.0
    %4591 = vmatprep.subr.mxu0 0.0
    %4592 = vmatpush2.msra.mxu0 0.0
    %4593 = vmatprep.subr.mxu0 0.0
    %4594 = vmatpush2.msra.mxu0 0.0
    %4595 = vmatprep.subr.mxu0 0.0
    %4596 = vmatpush2.msra.mxu0 0.0
    %4597 = vmatprep.subr.mxu0 0.0
    %4598 = vmatpush2.msra.mxu0 0.0
    %4599 = vmatprep.subr.mxu0 0.0
    %4600 = vmatpush2.msra.mxu0 0.0
    %4601 = vmatprep.mubr.f32.mxu0 0.0
    %4602 = vmatmul.mubr.f32.gmra.mxu0 %v4375
    %v4603 = vpop.f32.mrf.mxu0
    %v4604 = vadd.f32 %v2830, %v4603
    %v4605 = vpop.f32.mrf.mxu0
    %4606 = vdwg.mxu0
    %v4608 = vrot.slane %v4604, 2
    %v4610 = vmul.f32 %v4526, %v4608
    %v4611 = vadd.f32 %v2654, %v4610
    %v4612 = vtanh.pop %v4611
    %v4613 = vsub.f32 1.0, %v4536
    %v4614 = vmul.f32 %v4613, %v4612
    %v4615 = vrot.slane %v4372, 6
    %v4617 = vmul.f32 %v4536, %v4615
    %v4618 = vadd.f32 %v4614, %v4617
    %v4619 = vadd.f32 %v2380, %v4618
    %v4620 = vmul.f32 %v4619, 0.5
    %v4621 = vld [vmem:[%s10] sm:$0xff]
    %v4622 = vld [vmem:[%s10 + $0x8] sm:$0xff]
    %v4623 = vld [vmem:[%s10 + $0x10] sm:$0xff]
    %v4624 = vld [vmem:[%s10 + $0x18] sm:$0xff]
    %v4625 = vld [vmem:[#allocation3] sm:$0x3]
    %v4626 = vld [vmem:[%s11] sm:$0x1f]
    %vm4627 = vcmask 39936
    %v4629 = vsel %vm4627, %v4625, 0
    %vm4631 = vcmask 1044480
    %v4633 = vsel %vm4631, %v4626, 0
    %4635 = vmatprep.subr.mxu0 0.0
    %4636 = vmatpush1.msra.mxu0 0.0
    %4637 = vmatprep.subr.mxu0 0.0
    %4638 = vmatpush1.msra.mxu0 0.0
    %4639 = vmatprep.subr.mxu0 0.0
    %4640 = vmatpush1.msra.mxu0 0.0
    %4641 = vmatprep.subr.mxu0 0.0
    %4642 = vmatpush1.msra.mxu0 0.0
    %4643 = vmatprep.subr.mxu0 0.0
    %4644 = vmatpush1.msra.mxu0 0.0
    %4645 = vmatprep.subr.mxu0 0.0
    %4646 = vmatpush1.msra.mxu0 0.0
    %4647 = vmatprep.subr.mxu0 0.0
    %4648 = vmatpush1.msra.mxu0 0.0
    %4649 = vmatprep.subr.mxu0 0.0
    %4650 = vmatpush1.msra.mxu0 0.0
    %4651 = vmatprep.subr.mxu0 0.0
    %4652 = vmatpush1.msra.mxu0 0.0
    %4653 = vmatprep.subr.mxu0 0.0
    %4654 = vmatpush1.msra.mxu0 0.0
    %4655 = vmatprep.subr.mxu0 0.0
    %4656 = vmatpush1.msra.mxu0 0.0
    %4657 = vmatprep.subr.mxu0 0.0
    %4658 = vmatpush1.msra.mxu0 0.0
    %4659 = vmatprep.subr.mxu0 0.0
    %4660 = vmatpush1.msra.mxu0 0.0
    %4661 = vmatprep.subr.mxu0 0.0
    %4662 = vmatpush1.msra.mxu0 0.0
    %4663 = vmatprep.subr.mxu0 0.0
    %4664 = vmatpush1.msra.mxu0 0.0
    %4665 = vmatprep.subr.mxu0 0.0
    %4666 = vmatpush1.msra.mxu0 %v4633
    %4667 = vmatprep.subr.mxu0 0.0
    %4668 = vmatpush2.msra.mxu0 0.0
    %4669 = vmatprep.subr.mxu0 0.0
    %4670 = vmatpush2.msra.mxu0 0.0
    %4671 = vmatprep.subr.mxu0 0.0
    %4672 = vmatpush2.msra.mxu0 0.0
    %4673 = vmatprep.subr.mxu0 0.0
    %4674 = vmatpush2.msra.mxu0 0.0
    %4675 = vmatprep.subr.mxu0 0.0
    %4676 = vmatpush2.msra.mxu0 0.0
    %4677 = vmatprep.subr.mxu0 0.0
    %4678 = vmatpush2.msra.mxu0 0.0
    %4679 = vmatprep.subr.mxu0 0.0
    %4680 = vmatpush2.msra.mxu0 0.0
    %4681 = vmatprep.subr.mxu0 0.0
    %4682 = vmatpush2.msra.mxu0 0.0
    %4683 = vmatprep.subr.mxu0 0.0
    %4684 = vmatpush2.msra.mxu0 0.0
    %4685 = vmatprep.subr.mxu0 0.0
    %4686 = vmatpush2.msra.mxu0 0.0
    %4687 = vmatprep.subr.mxu0 0.0
    %4688 = vmatpush2.msra.mxu0 0.0
    %4689 = vmatprep.subr.mxu0 0.0
    %4690 = vmatpush2.msra.mxu0 0.0
    %4691 = vmatprep.subr.mxu0 0.0
    %4692 = vmatpush2.msra.mxu0 0.0
    %4693 = vmatprep.subr.mxu0 0.0
    %4694 = vmatpush2.msra.mxu0 0.0
    %4695 = vmatprep.subr.mxu0 0.0
    %4696 = vmatpush2.msra.mxu0 0.0
    %4697 = vmatprep.subr.mxu0 0.0
    %4698 = vmatpush2.msra.mxu0 0.0
    %4699 = vmatprep.mubr.f32.mxu0 0.0
    %4700 = vmatmul.mubr.f32.gmra.mxu0 %v4629
    %v4701 = vpop.f32.mrf.mxu0
    %v4702 = vadd.f32 0.0, %v4701
    %v4703 = vpop.f32.mrf.mxu0
    %4704 = vdwg.mxu0
    %v4706 = vrot.slane %v4620, 6
    %v4707 = vsel %vm430, %v4706, 0
    %4709 = vmatprep.subr.mxu0 0.0
    %4710 = vmatpush1.msra.mxu0 0.0
    %4711 = vmatprep.subr.mxu0 0.0
    %4712 = vmatpush1.msra.mxu0 0.0
    %4713 = vmatprep.subr.mxu0 0.0
    %4714 = vmatpush1.msra.mxu0 0.0
    %4715 = vmatprep.subr.mxu0 0.0
    %4716 = vmatpush1.msra.mxu0 0.0
    %4717 = vmatprep.subr.mxu0 0.0
    %4718 = vmatpush1.msra.mxu0 0.0
    %4719 = vmatprep.subr.mxu0 0.0
    %4720 = vmatpush1.msra.mxu0 0.0
    %4721 = vmatprep.subr.mxu0 0.0
    %4722 = vmatpush1.msra.mxu0 0.0
    %4723 = vmatprep.subr.mxu0 0.0
    %4724 = vmatpush1.msra.mxu0 0.0
    %4725 = vmatprep.subr.mxu0 0.0
    %4726 = vmatpush1.msra.mxu0 0.0
    %4727 = vmatprep.subr.mxu0 0.0
    %4728 = vmatpush1.msra.mxu0 0.0
    %4729 = vmatprep.subr.mxu0 0.0
    %4730 = vmatpush1.msra.mxu0 0.0
    %4731 = vmatprep.subr.mxu0 0.0
    %4732 = vmatpush1.msra.mxu0 0.0
    %4733 = vmatprep.subr.mxu0 0.0
    %4734 = vmatpush1.msra.mxu0 %v4624
    %4735 = vmatprep.subr.mxu0 0.0
    %4736 = vmatpush1.msra.mxu0 %v4623
    %4737 = vmatprep.subr.mxu0 0.0
    %4738 = vmatpush1.msra.mxu0 %v4622
    %4739 = vmatprep.subr.mxu0 0.0
    %4740 = vmatpush1.msra.mxu0 %v4621
    %4741 = vmatprep.subr.mxu0 0.0
    %4742 = vmatpush2.msra.mxu0 0.0
    %4743 = vmatprep.subr.mxu0 0.0
    %4744 = vmatpush2.msra.mxu0 0.0
    %4745 = vmatprep.subr.mxu0 0.0
    %4746 = vmatpush2.msra.mxu0 0.0
    %4747 = vmatprep.subr.mxu0 0.0
    %4748 = vmatpush2.msra.mxu0 0.0
    %4749 = vmatprep.subr.mxu0 0.0
    %4750 = vmatpush2.msra.mxu0 0.0
    %4751 = vmatprep.subr.mxu0 0.0
    %4752 = vmatpush2.msra.mxu0 0.0
    %4753 = vmatprep.subr.mxu0 0.0
    %4754 = vmatpush2.msra.mxu0 0.0
    %4755 = vmatprep.subr.mxu0 0.0
    %4756 = vmatpush2.msra.mxu0 0.0
    %4757 = vmatprep.subr.mxu0 0.0
    %4758 = vmatpush2.msra.mxu0 0.0
    %4759 = vmatprep.subr.mxu0 0.0
    %4760 = vmatpush2.msra.mxu0 0.0
    %4761 = vmatprep.subr.mxu0 0.0
    %4762 = vmatpush2.msra.mxu0 0.0
    %4763 = vmatprep.subr.mxu0 0.0
    %4764 = vmatpush2.msra.mxu0 0.0
    %4765 = vmatprep.subr.mxu0 0.0
    %4766 = vmatpush2.msra.mxu0 0.0
    %4767 = vmatprep.subr.mxu0 0.0
    %4768 = vmatpush2.msra.mxu0 0.0
    %4769 = vmatprep.subr.mxu0 0.0
    %4770 = vmatpush2.msra.mxu0 0.0
    %4771 = vmatprep.subr.mxu0 0.0
    %4772 = vmatpush2.msra.mxu0 0.0
    %4773 = vmatprep.mubr.f32.mxu0 0.0
    %4774 = vmatmul.mubr.f32.gmra.mxu0 %v4707
    %v4775 = vpop.f32.mrf.mxu0
    %v4776 = vadd.f32 %v4702, %v4775
    %v4777 = vpop.f32.mrf.mxu0
    %4778 = vdwg.mxu0
    %v4779 = vld [vmem:[%s12] sm:$0x1]
    %v4781 = vlaneseq
    %v4782 = vshrl.u32 %v4781, 7
    %v4783 = vsub.s32 0, %v4782
    %v4784 = vrot.slane %v4779, %v4783
    %v4786 = vadd.f32 %v4776, %v4784
    %v4787 = vmax.f32 %v4786, 0.0
    %v4788 = vld [vmem:[%s13] sm:$0xff]
    %v4789 = vld [vmem:[%s13 + $0x8] sm:$0xff]
    %v4790 = vld [vmem:[#allocation2] sm:$0x1]
    %v4792 = vlaneseq
    %v4793 = vshrl.u32 %v4792, 7
    %v4794 = vsub.s32 0, %v4793
    %v4795 = vrot.slane %v4790, %v4794
    %vm4797 = vcmask 130048
    %v4799 = vsel %vm4797, %v4787, 0
    %4801 = vmatprep.subr.mxu0 0.0
    %4802 = vmatpush1.msra.mxu0 0.0
    %4803 = vmatprep.subr.mxu0 0.0
    %4804 = vmatpush1.msra.mxu0 0.0
    %4805 = vmatprep.subr.mxu0 0.0
    %4806 = vmatpush1.msra.mxu0 0.0
    %4807 = vmatprep.subr.mxu0 0.0
    %4808 = vmatpush1.msra.mxu0 0.0
    %4809 = vmatprep.subr.mxu0 0.0
    %4810 = vmatpush1.msra.mxu0 0.0
    %4811 = vmatprep.subr.mxu0 0.0
    %4812 = vmatpush1.msra.mxu0 0.0
    %4813 = vmatprep.subr.mxu0 0.0
    %4814 = vmatpush1.msra.mxu0 0.0
    %4815 = vmatprep.subr.mxu0 0.0
    %4816 = vmatpush1.msra.mxu0 0.0
    %4817 = vmatprep.subr.mxu0 0.0
    %4818 = vmatpush1.msra.mxu0 0.0
    %4819 = vmatprep.subr.mxu0 0.0
    %4820 = vmatpush1.msra.mxu0 0.0
    %4821 = vmatprep.subr.mxu0 0.0
    %4822 = vmatpush1.msra.mxu0 0.0
    %4823 = vmatprep.subr.mxu0 0.0
    %4824 = vmatpush1.msra.mxu0 0.0
    %4825 = vmatprep.subr.mxu0 0.0
    %4826 = vmatpush1.msra.mxu0 0.0
    %4827 = vmatprep.subr.mxu0 0.0
    %4828 = vmatpush1.msra.mxu0 0.0
    %4829 = vmatprep.subr.mxu0 0.0
    %4830 = vmatpush1.msra.mxu0 %v4789
    %4831 = vmatprep.subr.mxu0 0.0
    %4832 = vmatpush1.msra.mxu0 %v4788
    %4833 = vmatprep.subr.mxu0 0.0
    %4834 = vmatpush2.msra.mxu0 0.0
    %4835 = vmatprep.subr.mxu0 0.0
    %4836 = vmatpush2.msra.mxu0 0.0
    %4837 = vmatprep.subr.mxu0 0.0
    %4838 = vmatpush2.msra.mxu0 0.0
    %4839 = vmatprep.subr.mxu0 0.0
    %4840 = vmatpush2.msra.mxu0 0.0
    %4841 = vmatprep.subr.mxu0 0.0
    %4842 = vmatpush2.msra.mxu0 0.0
    %4843 = vmatprep.subr.mxu0 0.0
    %4844 = vmatpush2.msra.mxu0 0.0
    %4845 = vmatprep.subr.mxu0 0.0
    %4846 = vmatpush2.msra.mxu0 0.0
    %4847 = vmatprep.subr.mxu0 0.0
    %4848 = vmatpush2.msra.mxu0 0.0
    %4849 = vmatprep.subr.mxu0 0.0
    %4850 = vmatpush2.msra.mxu0 0.0
    %4851 = vmatprep.subr.mxu0 0.0
    %4852 = vmatpush2.msra.mxu0 0.0
    %4853 = vmatprep.subr.mxu0 0.0
    %4854 = vmatpush2.msra.mxu0 0.0
    %4855 = vmatprep.subr.mxu0 0.0
    %4856 = vmatpush2.msra.mxu0 0.0
    %4857 = vmatprep.subr.mxu0 0.0
    %4858 = vmatpush2.msra.mxu0 0.0
    %4859 = vmatprep.subr.mxu0 0.0
    %4860 = vmatpush2.msra.mxu0 0.0
    %4861 = vmatprep.subr.mxu0 0.0
    %4862 = vmatpush2.msra.mxu0 0.0
    %4863 = vmatprep.subr.mxu0 0.0
    %4864 = vmatpush2.msra.mxu0 0.0
    %4865 = vmatprep.mubr.f32.mxu0 0.0
    %4866 = vmatmul.mubr.f32.gmra.mxu0 %v4799
    %v4867 = vpop.f32.mrf.mxu0
    %v4868 = vadd.f32 %v4795, %v4867
    %v4869 = vpop.f32.mrf.mxu0
    %4870 = vdwg.mxu0
    %vm4871 = vcmask 1024
    %4872 = vst.msk [vmem:[%s15] sm:$0x3] %vm4871, %v4868
    // Predicated region
    $region90: #{tpu_custom_call.1} parent=1 // pred_check
      _
    $region91: #{tpu_custom_call.1} parent=1 // pred_check_branch
      %4874 = sbr.rel (0) target = $region93
    $region92: #{tpu_custom_call.1} parent=1 // pred_region
      _
    $region93: #{tpu_custom_call.1} parent=1 // pred_fallthru
      _
    // Predicated region
    $region94: #{tpu_custom_call.1} parent=1 // pred_check
      _
    $region95: #{tpu_custom_call.1} parent=1 // pred_check_branch
      %4876 = sbr.rel (0) target = $region97
    $region96: #{tpu_custom_call.1} parent=1 // pred_region
      _
    $region97: #{tpu_custom_call.1} parent=1 // pred_fallthru
      _
    %4877 = vsyncpa [#allocation4], 1
    %4878 = vsyncpa [#allocation6], 1
    %4879 = vsyncpa [#allocation9], 1
    %4880 = vsyncpa [#allocation12], 1

</llo_original>
